<compile_context>
chip_gen: v5e
topology: v5e:2x2
jax: 0.10.0
libtpu: 0.0.40
codegen_flags: <defaults>
</compile_context>

<pallas_src>
import functools

import jax
import jax.numpy as jnp
from jax.experimental import pallas as pl
from jax.experimental.pallas import tpu as pltpu


# ----------------------------------------------------------------------------
# Helpers: padding / packing of PyTorch-layout LSTM weights
# ----------------------------------------------------------------------------
def _round_up(x, m):
    return ((x + m - 1) // m) * m


def _pad_gate_weight(w, in_pad, H, Hp):
    """PyTorch (4H, in) weight -> (in_pad, 4*Hp), transposed, each gate block
    (PyTorch order i,f,g,o) padded to Hp columns so gate slices in the kernel
    are lane-tile aligned.  Padded rows/columns are zero."""
    in_dim = w.shape[1]
    w4 = w.reshape(4, H, in_dim)              # gate-major
    w4 = jnp.transpose(w4, (2, 0, 1))          # (in, 4, H)
    w4 = jnp.pad(w4, ((0, in_pad - in_dim), (0, 0), (0, Hp - H)))
    return w4.reshape(in_pad, 4 * Hp)


def _pad_gate_bias(b, H, Hp):
    """(4H,) combined bias -> (1, 4*Hp) with per-gate zero padding."""
    b4 = jnp.pad(b.reshape(4, H), ((0, 0), (0, Hp - H)))
    return b4.reshape(1, 4 * Hp)


# ----------------------------------------------------------------------------
# Fused Pallas kernel: stacked LSTM + final Linear, all in VMEM
# ----------------------------------------------------------------------------
def _make_fused_kernel(num_layers, seq_len, batch_pad, hidden_pad):
    T, Bp, Hp = seq_len, batch_pad, hidden_pad

    def kernel(*args):
        x_ref = args[0]                               # (T*Bp, E)
        nw = 3 * num_layers
        layer_refs = args[1:1 + nw]                   # [w_ih_t, w_hh_t, b] * L
        fcw_ref = args[1 + nw]                        # (Hp, Cp)
        fcb_ref = args[2 + nw]                        # (1, Cp)
        out_ref = args[3 + nw]                        # (Bp, Cp)
        gx_sc, hseq_a, hseq_b, h_sc, c_sc = args[4 + nw:]
        hseq = (hseq_a, hseq_b)                       # ping-pong layer outputs

        def run_layer(layer_idx, x_in):
            """x_in: (T*Bp, in_dim) value — this layer's full input sequence."""
            wih_ref = layer_refs[3 * layer_idx + 0]
            whh_ref = layer_refs[3 * layer_idx + 1]
            b_ref = layer_refs[3 * layer_idx + 2]
            is_last = layer_idx == num_layers - 1
            out_seq = hseq[layer_idx % 2]

            # (1) Hoisted input projection: one MXU matmul for ALL timesteps
            #     (no recurrent dependency); bias added once, outside the loop.
            gx_sc[...] = (
                jnp.dot(x_in, wih_ref[...], preferred_element_type=jnp.float32)
                + b_ref[...]
            )                                          # (T*Bp, 4*Hp)

            # (2) Sequential recurrence: only h_prev @ W_hh per step.
            h_sc[...] = jnp.zeros_like(h_sc)           # h0 = c0 = 0
            c_sc[...] = jnp.zeros_like(c_sc)
            whh = whh_ref[...]                         # (Hp, 4*Hp)

            # T is small here: fully unroll with static, sublane-aligned row
            # offsets.  For long sequences switch to lax.fori_loop.
            for t in range(T):
                row = t * Bp
                gates = gx_sc[pl.ds(row, Bp), :] + jnp.dot(
                    h_sc[...], whh, preferred_element_type=jnp.float32)
                # Lane-tile-aligned gate slices (Hp is a multiple of 128).
                i = jax.nn.sigmoid(gates[:, 0 * Hp:1 * Hp])
                f = jax.nn.sigmoid(gates[:, 1 * Hp:2 * Hp])
                g = jnp.tanh(gates[:, 2 * Hp:3 * Hp])
                o = jax.nn.sigmoid(gates[:, 3 * Hp:4 * Hp])
                c_new = f * c_sc[...] + i * g
                h_new = o * jnp.tanh(c_new)
                c_sc[...] = c_new
                h_sc[...] = h_new
                if not is_last:
                    out_seq[pl.ds(row, Bp), :] = h_new  # stays in VMEM

        # Layer 0 consumes the embedded tokens; deeper layers consume the
        # previous layer's hidden sequence kept entirely in VMEM scratch.
        run_layer(0, x_ref[...])
        for l in range(1, num_layers):
            run_layer(l, hseq[(l - 1) % 2][...])

        # (3) Final Linear fused in-kernel on the last-timestep hidden state.
        #     Cp is a multiple of 128 -> lane-dense, unmasked store.
        out_ref[...] = (
            jnp.dot(h_sc[...], fcw_ref[...], preferred_element_type=jnp.float32)
            + fcb_ref[...]
        ).astype(out_ref.dtype)

    return kernel


def _fused_lstm_fc(x2d, lstm_layers, fc_w_t, fc_b, *, seq_len, batch_pad):
    """x2d: (T*Bp, E) time-major, batch-padded input. Returns (Bp, Cp) logits."""
    TB, E = x2d.shape
    Hp, Cp = fc_w_t.shape
    num_layers = len(lstm_layers)

    kernel = _make_fused_kernel(num_layers, seq_len, batch_pad, Hp)

    operands = [x2d]
    in_specs = [pl.BlockSpec((TB, E), lambda i: (0, 0))]
    for lp in lstm_layers:
        for name in ("w_ih_t", "w_hh_t", "b"):
            arr = lp[name]
            operands.append(arr)
            in_specs.append(pl.BlockSpec(arr.shape, lambda i: (0, 0)))
    operands += [fc_w_t, fc_b]
    in_specs += [pl.BlockSpec(fc_w_t.shape, lambda i: (0, 0)),
                 pl.BlockSpec(fc_b.shape, lambda i: (0, 0))]

    return pl.pallas_call(
        kernel,
        out_shape=jax.ShapeDtypeStruct((batch_pad, Cp), jnp.float32),
        grid_spec=pltpu.PrefetchScalarGridSpec(
            num_scalar_prefetch=0,
            grid=(1,),
            in_specs=in_specs,
            out_specs=pl.BlockSpec((batch_pad, Cp), lambda i: (0, 0)),
            scratch_shapes=[
                pltpu.VMEM((TB, 4 * Hp), jnp.float32),   # gate pre-activations
                pltpu.VMEM((TB, Hp), jnp.float32),       # hidden-seq ping
                pltpu.VMEM((TB, Hp), jnp.float32),       # hidden-seq pong
                pltpu.VMEM((batch_pad, Hp), jnp.float32),  # h carry
                pltpu.VMEM((batch_pad, Hp), jnp.float32),  # c carry
            ],
        ),
        compiler_params=pltpu.CompilerParams(
            dimension_semantics=("arbitrary",),
        ),
    )(*operands)


# ----------------------------------------------------------------------------
# Model forward (eval mode)
# ----------------------------------------------------------------------------
@functools.partial(jax.jit, static_argnames=("class_num",))
def lstm_model_forward(tokens, params, *, class_num):
    """Forward pass of the PyTorch `LSTM` module (eval mode)."""
    B, T = tokens.shape
    E = params["embed"].shape[1]
    Hp, Cp = params["fc_w_t"].shape
    Bp = max(8, _round_up(B, 8))          # sublane-aligned batch, MXU M >= 8

    # Embedding lookup (plain-JAX gather glue).
    x = jnp.take(params["embed"], tokens, axis=0)      # (B, T, E)
    x = jnp.transpose(x, (1, 0, 2))                    # (T, B, E) time-major
    x = jnp.pad(x, ((0, 0), (0, Bp - B), (0, 0)))      # pad batch
    x2d = x.reshape(T * Bp, E)                         # rows [t*Bp:(t+1)*Bp) = step t

    logits_pad = _fused_lstm_fc(
        x2d, params["lstm"], params["fc_w_t"], params["fc_b"],
        seq_len=T, batch_pad=Bp)

    # Dropout: nn.Dropout is identity in eval mode (no-op).
    return logits_pad[:B, :class_num]


# ----------------------------------------------------------------------------
# Deterministic parameter construction + pure-JAX reference check
# ----------------------------------------------------------------------------
def init_params(key, embed_num, embed_dim, hidden_size, num_layers, class_num):
    H = hidden_size
    Hp = _round_up(H, 128)
    Cp = _round_up(class_num, 128)
    bound = 1.0 / float(H) ** 0.5

    keys = jax.random.split(key, 3 + 4 * num_layers)
    kit = iter(keys)

    embed = jax.random.normal(next(kit), (embed_num, embed_dim), jnp.float32)

    raw_layers, pad_layers = [], []
    for l in range(num_layers):
        in_dim = embed_dim if l == 0 else H
        w_ih = jax.random.uniform(next(kit), (4 * H, in_dim), jnp.float32, -bound, bound)
        w_hh = jax.random.uniform(next(kit), (4 * H, H), jnp.float32, -bound, bound)
        b_ih = jax.random.uniform(next(kit), (4 * H,), jnp.float32, -bound, bound)
        b_hh = jax.random.uniform(next(kit), (4 * H,), jnp.float32, -bound, bound)
        raw_layers.append({"w_ih": w_ih, "w_hh": w_hh, "b_ih": b_ih, "b_hh": b_hh})

        in_pad = in_dim if l == 0 else Hp
        pad_layers.append({
            "w_ih_t": _pad_gate_weight(w_ih, in_pad, H, Hp),   # (in_pad, 4*Hp)
            "w_hh_t": _pad_gate_weight(w_hh, Hp, H, Hp),       # (Hp, 4*Hp)
            "b": _pad_gate_bias(b_ih + b_hh, H, Hp),           # (1, 4*Hp)
        })

    fc_w = jax.random.uniform(next(kit), (class_num, H), jnp.float32, -bound, bound)
    fc_b = jax.random.uniform(next(kit), (class_num,), jnp.float32, -bound, bound)

    fc_w_t = jnp.zeros((Hp, Cp), jnp.float32).at[:H, :class_num].set(fc_w.T)
    fc_b_p = jnp.zeros((1, Cp), jnp.float32).at[0, :class_num].set(fc_b)

    params = {"embed": embed, "lstm": pad_layers, "fc_w_t": fc_w_t, "fc_b": fc_b_p}
    raw = {"embed": embed, "lstm": raw_layers, "fc_w": fc_w, "fc_b": fc_b}
    return params, raw


def reference_forward(tokens, raw):
    """Pure-JAX reference (lax.scan, unpadded weights) for verification."""
    x = jnp.take(raw["embed"], tokens, axis=0)          # (B, T, E)
    B = x.shape[0]
    h_seq = jnp.transpose(x, (1, 0, 2))                  # (T, B, E)
    for layer in raw["lstm"]:
        w_ih_t = layer["w_ih"].T
        w_hh_t = layer["w_hh"].T
        b = (layer["b_ih"] + layer["b_hh"])[None, :]
        H = layer["w_hh"].shape[1]

        def step(carry, x_t, w_ih_t=w_ih_t, w_hh_t=w_hh_t, b=b, H=H):
            h, c = carry
            gates = x_t @ w_ih_t + h @ w_hh_t + b
            i = jax.nn.sigmoid(gates[:, 0 * H:1 * H])
            f = jax.nn.sigmoid(gates[:, 1 * H:2 * H])
            g = jnp.tanh(gates[:, 2 * H:3 * H])
            o = jax.nn.sigmoid(gates[:, 3 * H:4 * H])
            c = f * c + i * g
            h = o * jnp.tanh(c)
            return (h, c), h

        init = (jnp.zeros((B, H), jnp.float32), jnp.zeros((B, H), jnp.float32))
        _, h_seq = jax.lax.scan(step, init, h_seq)
    return h_seq[-1] @ raw["fc_w"].T + raw["fc_b"][None, :]


if __name__ == "__main__":
    # Small, forward-consistent config (args of the PyTorch module).
    EMBED_NUM, EMBED_DIM = 50, 16
    HIDDEN, NUM_LAYERS, CLASS_NUM = 32, 2, 4
    B, T = 2, 8

    key = jax.random.PRNGKey(0)
    pkey, tkey = jax.random.split(key)
    params, raw = init_params(pkey, EMBED_NUM, EMBED_DIM, HIDDEN, NUM_LAYERS, CLASS_NUM)
    tokens = jax.random.randint(tkey, (B, T), 0, EMBED_NUM, dtype=jnp.int32)

    out = lstm_model_forward(tokens, params, class_num=CLASS_NUM)
    out = jax.block_until_ready(out)

    ref = reference_forward(tokens, raw)
    assert out.shape == (B, CLASS_NUM)
    assert jnp.allclose(out, ref, atol=1e-4, rtol=1e-4), "mismatch vs reference"

    print("KERNEL_OK")
</pallas_src>

<mosaic_0001>
module attributes {stable_mosaic.version = 11 : i64} {
  func.func @kernel(%arg0: i32, %arg1: memref<64x16xf32, #tpu.memory_space<vmem>>, %arg2: memref<16x512xf32, #tpu.memory_space<vmem>>, %arg3: memref<128x512xf32, #tpu.memory_space<vmem>>, %arg4: memref<1x512xf32, #tpu.memory_space<vmem>>, %arg5: memref<128x512xf32, #tpu.memory_space<vmem>>, %arg6: memref<128x512xf32, #tpu.memory_space<vmem>>, %arg7: memref<1x512xf32, #tpu.memory_space<vmem>>, %arg8: memref<128x128xf32, #tpu.memory_space<vmem>>, %arg9: memref<1x128xf32, #tpu.memory_space<vmem>>, %arg10: memref<8x128xf32, #tpu.memory_space<vmem>>, %arg11: memref<64x512xf32, #tpu.memory_space<vmem>>, %arg12: memref<64x128xf32, #tpu.memory_space<vmem>>, %arg13: memref<64x128xf32, #tpu.memory_space<vmem>>, %arg14: memref<8x128xf32, #tpu.memory_space<vmem>>, %arg15: memref<8x128xf32, #tpu.memory_space<vmem>>) attributes {dimension_semantics = [#tpu.dimension_semantics<arbitrary>], iteration_bounds = array<i64: 1>, scalar_prefetch = 0 : i64, scratch_operands = 5 : i64, tpu.core_type = #tpu.core_type<tc>, window_params = [{pipeline_mode = #tpu.pipeline_mode<synchronous>, transform_indices = @transform_0, window_bounds = array<i64: 64, 16>}, {pipeline_mode = #tpu.pipeline_mode<synchronous>, transform_indices = @transform_1, window_bounds = array<i64: 16, 512>}, {pipeline_mode = #tpu.pipeline_mode<synchronous>, transform_indices = @transform_2, window_bounds = array<i64: 128, 512>}, {pipeline_mode = #tpu.pipeline_mode<synchronous>, transform_indices = @transform_3, window_bounds = array<i64: 1, 512>}, {pipeline_mode = #tpu.pipeline_mode<synchronous>, transform_indices = @transform_4, window_bounds = array<i64: 128, 512>}, {pipeline_mode = #tpu.pipeline_mode<synchronous>, transform_indices = @transform_5, window_bounds = array<i64: 128, 512>}, {pipeline_mode = #tpu.pipeline_mode<synchronous>, transform_indices = @transform_6, window_bounds = array<i64: 1, 512>}, {pipeline_mode = #tpu.pipeline_mode<synchronous>, transform_indices = @transform_7, window_bounds = array<i64: 128, 128>}, {pipeline_mode = #tpu.pipeline_mode<synchronous>, transform_indices = @transform_8, window_bounds = array<i64: 1, 128>}, {pipeline_mode = #tpu.pipeline_mode<synchronous>, transform_indices = @transform_9, window_bounds = array<i64: 8, 128>}]} {
    %c0 = arith.constant 0 : index
    %c0_0 = arith.constant 0 : index
    %0 = vector.load %arg1[%c0, %c0_0] : memref<64x16xf32, #tpu.memory_space<vmem>>, vector<64x16xf32>
    %c0_1 = arith.constant 0 : index
    %c0_2 = arith.constant 0 : index
    %1 = vector.load %arg2[%c0_1, %c0_2] : memref<16x512xf32, #tpu.memory_space<vmem>>, vector<16x512xf32>
    %cst = arith.constant dense<0.000000e+00> : vector<64x512xf32>
    %2 = tpu.matmul %0, %1, %cst {dimension_numbers = #tpu.dot_dimension_numbers<[1], [0], [0], [1], [0, 0, 1, 1], [], []>} : vector<64x16xf32>, vector<16x512xf32>, vector<64x512xf32> -> vector<64x512xf32>
    %c0_3 = arith.constant 0 : index
    %c0_4 = arith.constant 0 : index
    %3 = vector.load %arg4[%c0_3, %c0_4] : memref<1x512xf32, #tpu.memory_space<vmem>>, vector<1x512xf32>
    %4 = vector.broadcast %3 : vector<1x512xf32> to vector<64x512xf32>
    %5 = arith.addf %2, %4 : vector<64x512xf32>
    %c0_5 = arith.constant 0 : index
    %c0_6 = arith.constant 0 : index
    %6 = vector.load %arg11[%c0_5, %c0_6] : memref<64x512xf32, #tpu.memory_space<vmem>>, vector<64x512xf32>
    tpu.vector_store %arg11[%c0_5, %c0_6], %5 {strides = array<i32>} : memref<64x512xf32, #tpu.memory_space<vmem>>, vector<64x512xf32>,
    %cst_7 = arith.constant 0.000000e+00 : f32
    %7 = vector.broadcast %cst_7 : f32 to vector<8x128xf32>
    %c0_8 = arith.constant 0 : index
    %c0_9 = arith.constant 0 : index
    %8 = vector.load %arg14[%c0_8, %c0_9] : memref<8x128xf32, #tpu.memory_space<vmem>>, vector<8x128xf32>
    tpu.vector_store %arg14[%c0_8, %c0_9], %7 {strides = array<i32>} : memref<8x128xf32, #tpu.memory_space<vmem>>, vector<8x128xf32>,
    %cst_10 = arith.constant 0.000000e+00 : f32
    %9 = vector.broadcast %cst_10 : f32 to vector<8x128xf32>
    %c0_11 = arith.constant 0 : index
    %c0_12 = arith.constant 0 : index
    %10 = vector.load %arg15[%c0_11, %c0_12] : memref<8x128xf32, #tpu.memory_space<vmem>>, vector<8x128xf32>
    tpu.vector_store %arg15[%c0_11, %c0_12], %9 {strides = array<i32>} : memref<8x128xf32, #tpu.memory_space<vmem>>, vector<8x128xf32>,
    %c0_13 = arith.constant 0 : index
    %c0_14 = arith.constant 0 : index
    %11 = vector.load %arg3[%c0_13, %c0_14] : memref<128x512xf32, #tpu.memory_space<vmem>>, vector<128x512xf32>
    %c0_15 = arith.constant 0 : index
    %c0_16 = arith.constant 0 : index
    %12 = vector.load %arg11[%c0_15, %c0_16] : memref<64x512xf32, #tpu.memory_space<vmem>>, vector<8x512xf32>
    %c0_17 = arith.constant 0 : index
    %c0_18 = arith.constant 0 : index
    %13 = vector.load %arg14[%c0_17, %c0_18] : memref<8x128xf32, #tpu.memory_space<vmem>>, vector<8x128xf32>
    %cst_19 = arith.constant dense<0.000000e+00> : vector<8x512xf32>
    %14 = tpu.matmul %13, %11, %cst_19 {dimension_numbers = #tpu.dot_dimension_numbers<[1], [0], [0], [1], [0, 0, 1, 1], [], []>} : vector<8x128xf32>, vector<128x512xf32>, vector<8x512xf32> -> vector<8x512xf32>
    %15 = arith.addf %12, %14 : vector<8x512xf32>
    %16 = vector.extract_strided_slice %15 {offsets = [0, 0], sizes = [8, 128], strides = [1, 1]} : vector<8x512xf32> to vector<8x128xf32>
    %17 = arith.negf %16 : vector<8x128xf32>
    %18 = math.exp %17 : vector<8x128xf32>
    %cst_20 = arith.constant 1.000000e+00 : f32
    %19 = vector.broadcast %cst_20 : f32 to vector<8x128xf32>
    %20 = arith.addf %19, %18 : vector<8x128xf32>
    %21 = arith.divf %19, %20 : vector<8x128xf32>
    %22 = vector.extract_strided_slice %15 {offsets = [0, 128], sizes = [8, 128], strides = [1, 1]} : vector<8x512xf32> to vector<8x128xf32>
    %23 = arith.negf %22 : vector<8x128xf32>
    %24 = math.exp %23 : vector<8x128xf32>
    %cst_21 = arith.constant 1.000000e+00 : f32
    %25 = vector.broadcast %cst_21 : f32 to vector<8x128xf32>
    %26 = arith.addf %25, %24 : vector<8x128xf32>
    %27 = arith.divf %25, %26 : vector<8x128xf32>
    %28 = vector.extract_strided_slice %15 {offsets = [0, 256], sizes = [8, 128], strides = [1, 1]} : vector<8x512xf32> to vector<8x128xf32>
    %29 = math.tanh %28 : vector<8x128xf32>
    %30 = vector.extract_strided_slice %15 {offsets = [0, 384], sizes = [8, 128], strides = [1, 1]} : vector<8x512xf32> to vector<8x128xf32>
    %31 = arith.negf %30 : vector<8x128xf32>
    %32 = math.exp %31 : vector<8x128xf32>
    %cst_22 = arith.constant 1.000000e+00 : f32
    %33 = vector.broadcast %cst_22 : f32 to vector<8x128xf32>
    %34 = arith.addf %33, %32 : vector<8x128xf32>
    %35 = arith.divf %33, %34 : vector<8x128xf32>
    %c0_23 = arith.constant 0 : index
    %c0_24 = arith.constant 0 : index
    %36 = vector.load %arg15[%c0_23, %c0_24] : memref<8x128xf32, #tpu.memory_space<vmem>>, vector<8x128xf32>
    %37 = arith.mulf %27, %36 : vector<8x128xf32>
    %38 = arith.mulf %21, %29 : vector<8x128xf32>
    %39 = arith.addf %37, %38 : vector<8x128xf32>
    %40 = math.tanh %39 : vector<8x128xf32>
    %41 = arith.mulf %35, %40 : vector<8x128xf32>
    %c0_25 = arith.constant 0 : index
    %c0_26 = arith.constant 0 : index
    %42 = vector.load %arg15[%c0_25, %c0_26] : memref<8x128xf32, #tpu.memory_space<vmem>>, vector<8x128xf32>
    tpu.vector_store %arg15[%c0_25, %c0_26], %39 {strides = array<i32>} : memref<8x128xf32, #tpu.memory_space<vmem>>, vector<8x128xf32>,
    %c0_27 = arith.constant 0 : index
    %c0_28 = arith.constant 0 : index
    %43 = vector.load %arg14[%c0_27, %c0_28] : memref<8x128xf32, #tpu.memory_space<vmem>>, vector<8x128xf32>
    tpu.vector_store %arg14[%c0_27, %c0_28], %41 {strides = array<i32>} : memref<8x128xf32, #tpu.memory_space<vmem>>, vector<8x128xf32>,
    %c0_29 = arith.constant 0 : index
    %c0_30 = arith.constant 0 : index
    %44 = vector.load %arg12[%c0_29, %c0_30] : memref<64x128xf32, #tpu.memory_space<vmem>>, vector<8x128xf32>
    tpu.vector_store %arg12[%c0_29, %c0_30], %41 {strides = array<i32>} : memref<64x128xf32, #tpu.memory_space<vmem>>, vector<8x128xf32>,
    %c8 = arith.constant 8 : index
    %c0_31 = arith.constant 0 : index
    %45 = vector.load %arg11[%c8, %c0_31] : memref<64x512xf32, #tpu.memory_space<vmem>>, vector<8x512xf32>
    %c0_32 = arith.constant 0 : index
    %c0_33 = arith.constant 0 : index
    %46 = vector.load %arg14[%c0_32, %c0_33] : memref<8x128xf32, #tpu.memory_space<vmem>>, vector<8x128xf32>
    %cst_34 = arith.constant dense<0.000000e+00> : vector<8x512xf32>
    %47 = tpu.matmul %46, %11, %cst_34 {dimension_numbers = #tpu.dot_dimension_numbers<[1], [0], [0], [1], [0, 0, 1, 1], [], []>} : vector<8x128xf32>, vector<128x512xf32>, vector<8x512xf32> -> vector<8x512xf32>
    %48 = arith.addf %45, %47 : vector<8x512xf32>
    %49 = vector.extract_strided_slice %48 {offsets = [0, 0], sizes = [8, 128], strides = [1, 1]} : vector<8x512xf32> to vector<8x128xf32>
    %50 = arith.negf %49 : vector<8x128xf32>
    %51 = math.exp %50 : vector<8x128xf32>
    %cst_35 = arith.constant 1.000000e+00 : f32
    %52 = vector.broadcast %cst_35 : f32 to vector<8x128xf32>
    %53 = arith.addf %52, %51 : vector<8x128xf32>
    %54 = arith.divf %52, %53 : vector<8x128xf32>
    %55 = vector.extract_strided_slice %48 {offsets = [0, 128], sizes = [8, 128], strides = [1, 1]} : vector<8x512xf32> to vector<8x128xf32>
    %56 = arith.negf %55 : vector<8x128xf32>
    %57 = math.exp %56 : vector<8x128xf32>
    %cst_36 = arith.constant 1.000000e+00 : f32
    %58 = vector.broadcast %cst_36 : f32 to vector<8x128xf32>
    %59 = arith.addf %58, %57 : vector<8x128xf32>
    %60 = arith.divf %58, %59 : vector<8x128xf32>
    %61 = vector.extract_strided_slice %48 {offsets = [0, 256], sizes = [8, 128], strides = [1, 1]} : vector<8x512xf32> to vector<8x128xf32>
    %62 = math.tanh %61 : vector<8x128xf32>
    %63 = vector.extract_strided_slice %48 {offsets = [0, 384], sizes = [8, 128], strides = [1, 1]} : vector<8x512xf32> to vector<8x128xf32>
    %64 = arith.negf %63 : vector<8x128xf32>
    %65 = math.exp %64 : vector<8x128xf32>
    %cst_37 = arith.constant 1.000000e+00 : f32
    %66 = vector.broadcast %cst_37 : f32 to vector<8x128xf32>
    %67 = arith.addf %66, %65 : vector<8x128xf32>
    %68 = arith.divf %66, %67 : vector<8x128xf32>
    %c0_38 = arith.constant 0 : index
    %c0_39 = arith.constant 0 : index
    %69 = vector.load %arg15[%c0_38, %c0_39] : memref<8x128xf32, #tpu.memory_space<vmem>>, vector<8x128xf32>
    %70 = arith.mulf %60, %69 : vector<8x128xf32>
    %71 = arith.mulf %54, %62 : vector<8x128xf32>
    %72 = arith.addf %70, %71 : vector<8x128xf32>
    %73 = math.tanh %72 : vector<8x128xf32>
    %74 = arith.mulf %68, %73 : vector<8x128xf32>
    %c0_40 = arith.constant 0 : index
    %c0_41 = arith.constant 0 : index
    %75 = vector.load %arg15[%c0_40, %c0_41] : memref<8x128xf32, #tpu.memory_space<vmem>>, vector<8x128xf32>
    tpu.vector_store %arg15[%c0_40, %c0_41], %72 {strides = array<i32>} : memref<8x128xf32, #tpu.memory_space<vmem>>, vector<8x128xf32>,
    %c0_42 = arith.constant 0 : index
    %c0_43 = arith.constant 0 : index
    %76 = vector.load %arg14[%c0_42, %c0_43] : memref<8x128xf32, #tpu.memory_space<vmem>>, vector<8x128xf32>
    tpu.vector_store %arg14[%c0_42, %c0_43], %74 {strides = array<i32>} : memref<8x128xf32, #tpu.memory_space<vmem>>, vector<8x128xf32>,
    %c8_44 = arith.constant 8 : index
    %c0_45 = arith.constant 0 : index
    %77 = vector.load %arg12[%c8_44, %c0_45] : memref<64x128xf32, #tpu.memory_space<vmem>>, vector<8x128xf32>
    tpu.vector_store %arg12[%c8_44, %c0_45], %74 {strides = array<i32>} : memref<64x128xf32, #tpu.memory_space<vmem>>, vector<8x128xf32>,
    %c16 = arith.constant 16 : index
    %c0_46 = arith.constant 0 : index
    %78 = vector.load %arg11[%c16, %c0_46] : memref<64x512xf32, #tpu.memory_space<vmem>>, vector<8x512xf32>
    %c0_47 = arith.constant 0 : index
    %c0_48 = arith.constant 0 : index
    %79 = vector.load %arg14[%c0_47, %c0_48] : memref<8x128xf32, #tpu.memory_space<vmem>>, vector<8x128xf32>
    %cst_49 = arith.constant dense<0.000000e+00> : vector<8x512xf32>
    %80 = tpu.matmul %79, %11, %cst_49 {dimension_numbers = #tpu.dot_dimension_numbers<[1], [0], [0], [1], [0, 0, 1, 1], [], []>} : vector<8x128xf32>, vector<128x512xf32>, vector<8x512xf32> -> vector<8x512xf32>
    %81 = arith.addf %78, %80 : vector<8x512xf32>
    %82 = vector.extract_strided_slice %81 {offsets = [0, 0], sizes = [8, 128], strides = [1, 1]} : vector<8x512xf32> to vector<8x128xf32>
    %83 = arith.negf %82 : vector<8x128xf32>
    %84 = math.exp %83 : vector<8x128xf32>
    %cst_50 = arith.constant 1.000000e+00 : f32
    %85 = vector.broadcast %cst_50 : f32 to vector<8x128xf32>
    %86 = arith.addf %85, %84 : vector<8x128xf32>
    %87 = arith.divf %85, %86 : vector<8x128xf32>
    %88 = vector.extract_strided_slice %81 {offsets = [0, 128], sizes = [8, 128], strides = [1, 1]} : vector<8x512xf32> to vector<8x128xf32>
    %89 = arith.negf %88 : vector<8x128xf32>
    %90 = math.exp %89 : vector<8x128xf32>
    %cst_51 = arith.constant 1.000000e+00 : f32
    %91 = vector.broadcast %cst_51 : f32 to vector<8x128xf32>
    %92 = arith.addf %91, %90 : vector<8x128xf32>
    %93 = arith.divf %91, %92 : vector<8x128xf32>
    %94 = vector.extract_strided_slice %81 {offsets = [0, 256], sizes = [8, 128], strides = [1, 1]} : vector<8x512xf32> to vector<8x128xf32>
    %95 = math.tanh %94 : vector<8x128xf32>
    %96 = vector.extract_strided_slice %81 {offsets = [0, 384], sizes = [8, 128], strides = [1, 1]} : vector<8x512xf32> to vector<8x128xf32>
    %97 = arith.negf %96 : vector<8x128xf32>
    %98 = math.exp %97 : vector<8x128xf32>
    %cst_52 = arith.constant 1.000000e+00 : f32
    %99 = vector.broadcast %cst_52 : f32 to vector<8x128xf32>
    %100 = arith.addf %99, %98 : vector<8x128xf32>
    %101 = arith.divf %99, %100 : vector<8x128xf32>
    %c0_53 = arith.constant 0 : index
    %c0_54 = arith.constant 0 : index
    %102 = vector.load %arg15[%c0_53, %c0_54] : memref<8x128xf32, #tpu.memory_space<vmem>>, vector<8x128xf32>
    %103 = arith.mulf %93, %102 : vector<8x128xf32>
    %104 = arith.mulf %87, %95 : vector<8x128xf32>
    %105 = arith.addf %103, %104 : vector<8x128xf32>
    %106 = math.tanh %105 : vector<8x128xf32>
    %107 = arith.mulf %101, %106 : vector<8x128xf32>
    %c0_55 = arith.constant 0 : index
    %c0_56 = arith.constant 0 : index
    %108 = vector.load %arg15[%c0_55, %c0_56] : memref<8x128xf32, #tpu.memory_space<vmem>>, vector<8x128xf32>
    tpu.vector_store %arg15[%c0_55, %c0_56], %105 {strides = array<i32>} : memref<8x128xf32, #tpu.memory_space<vmem>>, vector<8x128xf32>,
    %c0_57 = arith.constant 0 : index
    %c0_58 = arith.constant 0 : index
    %109 = vector.load %arg14[%c0_57, %c0_58] : memref<8x128xf32, #tpu.memory_space<vmem>>, vector<8x128xf32>
    tpu.vector_store %arg14[%c0_57, %c0_58], %107 {strides = array<i32>} : memref<8x128xf32, #tpu.memory_space<vmem>>, vector<8x128xf32>,
    %c16_59 = arith.constant 16 : index
    %c0_60 = arith.constant 0 : index
    %110 = vector.load %arg12[%c16_59, %c0_60] : memref<64x128xf32, #tpu.memory_space<vmem>>, vector<8x128xf32>
    tpu.vector_store %arg12[%c16_59, %c0_60], %107 {strides = array<i32>} : memref<64x128xf32, #tpu.memory_space<vmem>>, vector<8x128xf32>,
    %c24 = arith.constant 24 : index
    %c0_61 = arith.constant 0 : index
    %111 = vector.load %arg11[%c24, %c0_61] : memref<64x512xf32, #tpu.memory_space<vmem>>, vector<8x512xf32>
    %c0_62 = arith.constant 0 : index
    %c0_63 = arith.constant 0 : index
    %112 = vector.load %arg14[%c0_62, %c0_63] : memref<8x128xf32, #tpu.memory_space<vmem>>, vector<8x128xf32>
    %cst_64 = arith.constant dense<0.000000e+00> : vector<8x512xf32>
    %113 = tpu.matmul %112, %11, %cst_64 {dimension_numbers = #tpu.dot_dimension_numbers<[1], [0], [0], [1], [0, 0, 1, 1], [], []>} : vector<8x128xf32>, vector<128x512xf32>, vector<8x512xf32> -> vector<8x512xf32>
    %114 = arith.addf %111, %113 : vector<8x512xf32>
    %115 = vector.extract_strided_slice %114 {offsets = [0, 0], sizes = [8, 128], strides = [1, 1]} : vector<8x512xf32> to vector<8x128xf32>
    %116 = arith.negf %115 : vector<8x128xf32>
    %117 = math.exp %116 : vector<8x128xf32>
    %cst_65 = arith.constant 1.000000e+00 : f32
    %118 = vector.broadcast %cst_65 : f32 to vector<8x128xf32>
    %119 = arith.addf %118, %117 : vector<8x128xf32>
    %120 = arith.divf %118, %119 : vector<8x128xf32>
    %121 = vector.extract_strided_slice %114 {offsets = [0, 128], sizes = [8, 128], strides = [1, 1]} : vector<8x512xf32> to vector<8x128xf32>
    %122 = arith.negf %121 : vector<8x128xf32>
    %123 = math.exp %122 : vector<8x128xf32>
    %cst_66 = arith.constant 1.000000e+00 : f32
    %124 = vector.broadcast %cst_66 : f32 to vector<8x128xf32>
    %125 = arith.addf %124, %123 : vector<8x128xf32>
    %126 = arith.divf %124, %125 : vector<8x128xf32>
    %127 = vector.extract_strided_slice %114 {offsets = [0, 256], sizes = [8, 128], strides = [1, 1]} : vector<8x512xf32> to vector<8x128xf32>
    %128 = math.tanh %127 : vector<8x128xf32>
    %129 = vector.extract_strided_slice %114 {offsets = [0, 384], sizes = [8, 128], strides = [1, 1]} : vector<8x512xf32> to vector<8x128xf32>
    %130 = arith.negf %129 : vector<8x128xf32>
    %131 = math.exp %130 : vector<8x128xf32>
    %cst_67 = arith.constant 1.000000e+00 : f32
    %132 = vector.broadcast %cst_67 : f32 to vector<8x128xf32>
    %133 = arith.addf %132, %131 : vector<8x128xf32>
    %134 = arith.divf %132, %133 : vector<8x128xf32>
    %c0_68 = arith.constant 0 : index
    %c0_69 = arith.constant 0 : index
    %135 = vector.load %arg15[%c0_68, %c0_69] : memref<8x128xf32, #tpu.memory_space<vmem>>, vector<8x128xf32>
    %136 = arith.mulf %126, %135 : vector<8x128xf32>
    %137 = arith.mulf %120, %128 : vector<8x128xf32>
    %138 = arith.addf %136, %137 : vector<8x128xf32>
    %139 = math.tanh %138 : vector<8x128xf32>
    %140 = arith.mulf %134, %139 : vector<8x128xf32>
    %c0_70 = arith.constant 0 : index
    %c0_71 = arith.constant 0 : index
    %141 = vector.load %arg15[%c0_70, %c0_71] : memref<8x128xf32, #tpu.memory_space<vmem>>, vector<8x128xf32>
    tpu.vector_store %arg15[%c0_70, %c0_71], %138 {strides = array<i32>} : memref<8x128xf32, #tpu.memory_space<vmem>>, vector<8x128xf32>,
    %c0_72 = arith.constant 0 : index
    %c0_73 = arith.constant 0 : index
    %142 = vector.load %arg14[%c0_72, %c0_73] : memref<8x128xf32, #tpu.memory_space<vmem>>, vector<8x128xf32>
    tpu.vector_store %arg14[%c0_72, %c0_73], %140 {strides = array<i32>} : memref<8x128xf32, #tpu.memory_space<vmem>>, vector<8x128xf32>,
    %c24_74 = arith.constant 24 : index
    %c0_75 = arith.constant 0 : index
    %143 = vector.load %arg12[%c24_74, %c0_75] : memref<64x128xf32, #tpu.memory_space<vmem>>, vector<8x128xf32>
    tpu.vector_store %arg12[%c24_74, %c0_75], %140 {strides = array<i32>} : memref<64x128xf32, #tpu.memory_space<vmem>>, vector<8x128xf32>,
    %c32 = arith.constant 32 : index
    %c0_76 = arith.constant 0 : index
    %144 = vector.load %arg11[%c32, %c0_76] : memref<64x512xf32, #tpu.memory_space<vmem>>, vector<8x512xf32>
    %c0_77 = arith.constant 0 : index
    %c0_78 = arith.constant 0 : index
    %145 = vector.load %arg14[%c0_77, %c0_78] : memref<8x128xf32, #tpu.memory_space<vmem>>, vector<8x128xf32>
    %cst_79 = arith.constant dense<0.000000e+00> : vector<8x512xf32>
    %146 = tpu.matmul %145, %11, %cst_79 {dimension_numbers = #tpu.dot_dimension_numbers<[1], [0], [0], [1], [0, 0, 1, 1], [], []>} : vector<8x128xf32>, vector<128x512xf32>, vector<8x512xf32> -> vector<8x512xf32>
    %147 = arith.addf %144, %146 : vector<8x512xf32>
    %148 = vector.extract_strided_slice %147 {offsets = [0, 0], sizes = [8, 128], strides = [1, 1]} : vector<8x512xf32> to vector<8x128xf32>
    %149 = arith.negf %148 : vector<8x128xf32>
    %150 = math.exp %149 : vector<8x128xf32>
    %cst_80 = arith.constant 1.000000e+00 : f32
    %151 = vector.broadcast %cst_80 : f32 to vector<8x128xf32>
    %152 = arith.addf %151, %150 : vector<8x128xf32>
    %153 = arith.divf %151, %152 : vector<8x128xf32>
    %154 = vector.extract_strided_slice %147 {offsets = [0, 128], sizes = [8, 128], strides = [1, 1]} : vector<8x512xf32> to vector<8x128xf32>
    %155 = arith.negf %154 : vector<8x128xf32>
    %156 = math.exp %155 : vector<8x128xf32>
    %cst_81 = arith.constant 1.000000e+00 : f32
    %157 = vector.broadcast %cst_81 : f32 to vector<8x128xf32>
    %158 = arith.addf %157, %156 : vector<8x128xf32>
    %159 = arith.divf %157, %158 : vector<8x128xf32>
    %160 = vector.extract_strided_slice %147 {offsets = [0, 256], sizes = [8, 128], strides = [1, 1]} : vector<8x512xf32> to vector<8x128xf32>
    %161 = math.tanh %160 : vector<8x128xf32>
    %162 = vector.extract_strided_slice %147 {offsets = [0, 384], sizes = [8, 128], strides = [1, 1]} : vector<8x512xf32> to vector<8x128xf32>
    %163 = arith.negf %162 : vector<8x128xf32>
    %164 = math.exp %163 : vector<8x128xf32>
    %cst_82 = arith.constant 1.000000e+00 : f32
    %165 = vector.broadcast %cst_82 : f32 to vector<8x128xf32>
    %166 = arith.addf %165, %164 : vector<8x128xf32>
    %167 = arith.divf %165, %166 : vector<8x128xf32>
    %c0_83 = arith.constant 0 : index
    %c0_84 = arith.constant 0 : index
    %168 = vector.load %arg15[%c0_83, %c0_84] : memref<8x128xf32, #tpu.memory_space<vmem>>, vector<8x128xf32>
    %169 = arith.mulf %159, %168 : vector<8x128xf32>
    %170 = arith.mulf %153, %161 : vector<8x128xf32>
    %171 = arith.addf %169, %170 : vector<8x128xf32>
    %172 = math.tanh %171 : vector<8x128xf32>
    %173 = arith.mulf %167, %172 : vector<8x128xf32>
    %c0_85 = arith.constant 0 : index
    %c0_86 = arith.constant 0 : index
    %174 = vector.load %arg15[%c0_85, %c0_86] : memref<8x128xf32, #tpu.memory_space<vmem>>, vector<8x128xf32>
    tpu.vector_store %arg15[%c0_85, %c0_86], %171 {strides = array<i32>} : memref<8x128xf32, #tpu.memory_space<vmem>>, vector<8x128xf32>,
    %c0_87 = arith.constant 0 : index
    %c0_88 = arith.constant 0 : index
    %175 = vector.load %arg14[%c0_87, %c0_88] : memref<8x128xf32, #tpu.memory_space<vmem>>, vector<8x128xf32>
    tpu.vector_store %arg14[%c0_87, %c0_88], %173 {strides = array<i32>} : memref<8x128xf32, #tpu.memory_space<vmem>>, vector<8x128xf32>,
    %c32_89 = arith.constant 32 : index
    %c0_90 = arith.constant 0 : index
    %176 = vector.load %arg12[%c32_89, %c0_90] : memref<64x128xf32, #tpu.memory_space<vmem>>, vector<8x128xf32>
    tpu.vector_store %arg12[%c32_89, %c0_90], %173 {strides = array<i32>} : memref<64x128xf32, #tpu.memory_space<vmem>>, vector<8x128xf32>,
    %c40 = arith.constant 40 : index
    %c0_91 = arith.constant 0 : index
    %177 = vector.load %arg11[%c40, %c0_91] : memref<64x512xf32, #tpu.memory_space<vmem>>, vector<8x512xf32>
    %c0_92 = arith.constant 0 : index
    %c0_93 = arith.constant 0 : index
    %178 = vector.load %arg14[%c0_92, %c0_93] : memref<8x128xf32, #tpu.memory_space<vmem>>, vector<8x128xf32>
    %cst_94 = arith.constant dense<0.000000e+00> : vector<8x512xf32>
    %179 = tpu.matmul %178, %11, %cst_94 {dimension_numbers = #tpu.dot_dimension_numbers<[1], [0], [0], [1], [0, 0, 1, 1], [], []>} : vector<8x128xf32>, vector<128x512xf32>, vector<8x512xf32> -> vector<8x512xf32>
    %180 = arith.addf %177, %179 : vector<8x512xf32>
    %181 = vector.extract_strided_slice %180 {offsets = [0, 0], sizes = [8, 128], strides = [1, 1]} : vector<8x512xf32> to vector<8x128xf32>
    %182 = arith.negf %181 : vector<8x128xf32>
    %183 = math.exp %182 : vector<8x128xf32>
    %cst_95 = arith.constant 1.000000e+00 : f32
    %184 = vector.broadcast %cst_95 : f32 to vector<8x128xf32>
    %185 = arith.addf %184, %183 : vector<8x128xf32>
    %186 = arith.divf %184, %185 : vector<8x128xf32>
    %187 = vector.extract_strided_slice %180 {offsets = [0, 128], sizes = [8, 128], strides = [1, 1]} : vector<8x512xf32> to vector<8x128xf32>
    %188 = arith.negf %187 : vector<8x128xf32>
    %189 = math.exp %188 : vector<8x128xf32>
    %cst_96 = arith.constant 1.000000e+00 : f32
    %190 = vector.broadcast %cst_96 : f32 to vector<8x128xf32>
    %191 = arith.addf %190, %189 : vector<8x128xf32>
    %192 = arith.divf %190, %191 : vector<8x128xf32>
    %193 = vector.extract_strided_slice %180 {offsets = [0, 256], sizes = [8, 128], strides = [1, 1]} : vector<8x512xf32> to vector<8x128xf32>
    %194 = math.tanh %193 : vector<8x128xf32>
    %195 = vector.extract_strided_slice %180 {offsets = [0, 384], sizes = [8, 128], strides = [1, 1]} : vector<8x512xf32> to vector<8x128xf32>
    %196 = arith.negf %195 : vector<8x128xf32>
    %197 = math.exp %196 : vector<8x128xf32>
    %cst_97 = arith.constant 1.000000e+00 : f32
    %198 = vector.broadcast %cst_97 : f32 to vector<8x128xf32>
    %199 = arith.addf %198, %197 : vector<8x128xf32>
    %200 = arith.divf %198, %199 : vector<8x128xf32>
    %c0_98 = arith.constant 0 : index
    %c0_99 = arith.constant 0 : index
    %201 = vector.load %arg15[%c0_98, %c0_99] : memref<8x128xf32, #tpu.memory_space<vmem>>, vector<8x128xf32>
    %202 = arith.mulf %192, %201 : vector<8x128xf32>
    %203 = arith.mulf %186, %194 : vector<8x128xf32>
    %204 = arith.addf %202, %203 : vector<8x128xf32>
    %205 = math.tanh %204 : vector<8x128xf32>
    %206 = arith.mulf %200, %205 : vector<8x128xf32>
    %c0_100 = arith.constant 0 : index
    %c0_101 = arith.constant 0 : index
    %207 = vector.load %arg15[%c0_100, %c0_101] : memref<8x128xf32, #tpu.memory_space<vmem>>, vector<8x128xf32>
    tpu.vector_store %arg15[%c0_100, %c0_101], %204 {strides = array<i32>} : memref<8x128xf32, #tpu.memory_space<vmem>>, vector<8x128xf32>,
    %c0_102 = arith.constant 0 : index
    %c0_103 = arith.constant 0 : index
    %208 = vector.load %arg14[%c0_102, %c0_103] : memref<8x128xf32, #tpu.memory_space<vmem>>, vector<8x128xf32>
    tpu.vector_store %arg14[%c0_102, %c0_103], %206 {strides = array<i32>} : memref<8x128xf32, #tpu.memory_space<vmem>>, vector<8x128xf32>,
    %c40_104 = arith.constant 40 : index
    %c0_105 = arith.constant 0 : index
    %209 = vector.load %arg12[%c40_104, %c0_105] : memref<64x128xf32, #tpu.memory_space<vmem>>, vector<8x128xf32>
    tpu.vector_store %arg12[%c40_104, %c0_105], %206 {strides = array<i32>} : memref<64x128xf32, #tpu.memory_space<vmem>>, vector<8x128xf32>,
    %c48 = arith.constant 48 : index
    %c0_106 = arith.constant 0 : index
    %210 = vector.load %arg11[%c48, %c0_106] : memref<64x512xf32, #tpu.memory_space<vmem>>, vector<8x512xf32>
    %c0_107 = arith.constant 0 : index
    %c0_108 = arith.constant 0 : index
    %211 = vector.load %arg14[%c0_107, %c0_108] : memref<8x128xf32, #tpu.memory_space<vmem>>, vector<8x128xf32>
    %cst_109 = arith.constant dense<0.000000e+00> : vector<8x512xf32>
    %212 = tpu.matmul %211, %11, %cst_109 {dimension_numbers = #tpu.dot_dimension_numbers<[1], [0], [0], [1], [0, 0, 1, 1], [], []>} : vector<8x128xf32>, vector<128x512xf32>, vector<8x512xf32> -> vector<8x512xf32>
    %213 = arith.addf %210, %212 : vector<8x512xf32>
    %214 = vector.extract_strided_slice %213 {offsets = [0, 0], sizes = [8, 128], strides = [1, 1]} : vector<8x512xf32> to vector<8x128xf32>
    %215 = arith.negf %214 : vector<8x128xf32>
    %216 = math.exp %215 : vector<8x128xf32>
    %cst_110 = arith.constant 1.000000e+00 : f32
    %217 = vector.broadcast %cst_110 : f32 to vector<8x128xf32>
    %218 = arith.addf %217, %216 : vector<8x128xf32>
    %219 = arith.divf %217, %218 : vector<8x128xf32>
    %220 = vector.extract_strided_slice %213 {offsets = [0, 128], sizes = [8, 128], strides = [1, 1]} : vector<8x512xf32> to vector<8x128xf32>
    %221 = arith.negf %220 : vector<8x128xf32>
    %222 = math.exp %221 : vector<8x128xf32>
    %cst_111 = arith.constant 1.000000e+00 : f32
    %223 = vector.broadcast %cst_111 : f32 to vector<8x128xf32>
    %224 = arith.addf %223, %222 : vector<8x128xf32>
    %225 = arith.divf %223, %224 : vector<8x128xf32>
    %226 = vector.extract_strided_slice %213 {offsets = [0, 256], sizes = [8, 128], strides = [1, 1]} : vector<8x512xf32> to vector<8x128xf32>
    %227 = math.tanh %226 : vector<8x128xf32>
    %228 = vector.extract_strided_slice %213 {offsets = [0, 384], sizes = [8, 128], strides = [1, 1]} : vector<8x512xf32> to vector<8x128xf32>
    %229 = arith.negf %228 : vector<8x128xf32>
    %230 = math.exp %229 : vector<8x128xf32>
    %cst_112 = arith.constant 1.000000e+00 : f32
    %231 = vector.broadcast %cst_112 : f32 to vector<8x128xf32>
    %232 = arith.addf %231, %230 : vector<8x128xf32>
    %233 = arith.divf %231, %232 : vector<8x128xf32>
    %c0_113 = arith.constant 0 : index
    %c0_114 = arith.constant 0 : index
    %234 = vector.load %arg15[%c0_113, %c0_114] : memref<8x128xf32, #tpu.memory_space<vmem>>, vector<8x128xf32>
    %235 = arith.mulf %225, %234 : vector<8x128xf32>
    %236 = arith.mulf %219, %227 : vector<8x128xf32>
    %237 = arith.addf %235, %236 : vector<8x128xf32>
    %238 = math.tanh %237 : vector<8x128xf32>
    %239 = arith.mulf %233, %238 : vector<8x128xf32>
    %c0_115 = arith.constant 0 : index
    %c0_116 = arith.constant 0 : index
    %240 = vector.load %arg15[%c0_115, %c0_116] : memref<8x128xf32, #tpu.memory_space<vmem>>, vector<8x128xf32>
    tpu.vector_store %arg15[%c0_115, %c0_116], %237 {strides = array<i32>} : memref<8x128xf32, #tpu.memory_space<vmem>>, vector<8x128xf32>,
    %c0_117 = arith.constant 0 : index
    %c0_118 = arith.constant 0 : index
    %241 = vector.load %arg14[%c0_117, %c0_118] : memref<8x128xf32, #tpu.memory_space<vmem>>, vector<8x128xf32>
    tpu.vector_store %arg14[%c0_117, %c0_118], %239 {strides = array<i32>} : memref<8x128xf32, #tpu.memory_space<vmem>>, vector<8x128xf32>,
    %c48_119 = arith.constant 48 : index
    %c0_120 = arith.constant 0 : index
    %242 = vector.load %arg12[%c48_119, %c0_120] : memref<64x128xf32, #tpu.memory_space<vmem>>, vector<8x128xf32>
    tpu.vector_store %arg12[%c48_119, %c0_120], %239 {strides = array<i32>} : memref<64x128xf32, #tpu.memory_space<vmem>>, vector<8x128xf32>,
    %c56 = arith.constant 56 : index
    %c0_121 = arith.constant 0 : index
    %243 = vector.load %arg11[%c56, %c0_121] : memref<64x512xf32, #tpu.memory_space<vmem>>, vector<8x512xf32>
    %c0_122 = arith.constant 0 : index
    %c0_123 = arith.constant 0 : index
    %244 = vector.load %arg14[%c0_122, %c0_123] : memref<8x128xf32, #tpu.memory_space<vmem>>, vector<8x128xf32>
    %cst_124 = arith.constant dense<0.000000e+00> : vector<8x512xf32>
    %245 = tpu.matmul %244, %11, %cst_124 {dimension_numbers = #tpu.dot_dimension_numbers<[1], [0], [0], [1], [0, 0, 1, 1], [], []>} : vector<8x128xf32>, vector<128x512xf32>, vector<8x512xf32> -> vector<8x512xf32>
    %246 = arith.addf %243, %245 : vector<8x512xf32>
    %247 = vector.extract_strided_slice %246 {offsets = [0, 0], sizes = [8, 128], strides = [1, 1]} : vector<8x512xf32> to vector<8x128xf32>
    %248 = arith.negf %247 : vector<8x128xf32>
    %249 = math.exp %248 : vector<8x128xf32>
    %cst_125 = arith.constant 1.000000e+00 : f32
    %250 = vector.broadcast %cst_125 : f32 to vector<8x128xf32>
    %251 = arith.addf %250, %249 : vector<8x128xf32>
    %252 = arith.divf %250, %251 : vector<8x128xf32>
    %253 = vector.extract_strided_slice %246 {offsets = [0, 128], sizes = [8, 128], strides = [1, 1]} : vector<8x512xf32> to vector<8x128xf32>
    %254 = arith.negf %253 : vector<8x128xf32>
    %255 = math.exp %254 : vector<8x128xf32>
    %cst_126 = arith.constant 1.000000e+00 : f32
    %256 = vector.broadcast %cst_126 : f32 to vector<8x128xf32>
    %257 = arith.addf %256, %255 : vector<8x128xf32>
    %258 = arith.divf %256, %257 : vector<8x128xf32>
    %259 = vector.extract_strided_slice %246 {offsets = [0, 256], sizes = [8, 128], strides = [1, 1]} : vector<8x512xf32> to vector<8x128xf32>
    %260 = math.tanh %259 : vector<8x128xf32>
    %261 = vector.extract_strided_slice %246 {offsets = [0, 384], sizes = [8, 128], strides = [1, 1]} : vector<8x512xf32> to vector<8x128xf32>
    %262 = arith.negf %261 : vector<8x128xf32>
    %263 = math.exp %262 : vector<8x128xf32>
    %cst_127 = arith.constant 1.000000e+00 : f32
    %264 = vector.broadcast %cst_127 : f32 to vector<8x128xf32>
    %265 = arith.addf %264, %263 : vector<8x128xf32>
    %266 = arith.divf %264, %265 : vector<8x128xf32>
    %c0_128 = arith.constant 0 : index
    %c0_129 = arith.constant 0 : index
    %267 = vector.load %arg15[%c0_128, %c0_129] : memref<8x128xf32, #tpu.memory_space<vmem>>, vector<8x128xf32>
    %268 = arith.mulf %258, %267 : vector<8x128xf32>
    %269 = arith.mulf %252, %260 : vector<8x128xf32>
    %270 = arith.addf %268, %269 : vector<8x128xf32>
    %271 = math.tanh %270 : vector<8x128xf32>
    %272 = arith.mulf %266, %271 : vector<8x128xf32>
    %c0_130 = arith.constant 0 : index
    %c0_131 = arith.constant 0 : index
    %273 = vector.load %arg15[%c0_130, %c0_131] : memref<8x128xf32, #tpu.memory_space<vmem>>, vector<8x128xf32>
    tpu.vector_store %arg15[%c0_130, %c0_131], %270 {strides = array<i32>} : memref<8x128xf32, #tpu.memory_space<vmem>>, vector<8x128xf32>,
    %c0_132 = arith.constant 0 : index
    %c0_133 = arith.constant 0 : index
    %274 = vector.load %arg14[%c0_132, %c0_133] : memref<8x128xf32, #tpu.memory_space<vmem>>, vector<8x128xf32>
    tpu.vector_store %arg14[%c0_132, %c0_133], %272 {strides = array<i32>} : memref<8x128xf32, #tpu.memory_space<vmem>>, vector<8x128xf32>,
    %c56_134 = arith.constant 56 : index
    %c0_135 = arith.constant 0 : index
    %275 = vector.load %arg12[%c56_134, %c0_135] : memref<64x128xf32, #tpu.memory_space<vmem>>, vector<8x128xf32>
    tpu.vector_store %arg12[%c56_134, %c0_135], %272 {strides = array<i32>} : memref<64x128xf32, #tpu.memory_space<vmem>>, vector<8x128xf32>,
    %c0_136 = arith.constant 0 : index
    %c0_137 = arith.constant 0 : index
    %276 = vector.load %arg12[%c0_136, %c0_137] : memref<64x128xf32, #tpu.memory_space<vmem>>, vector<64x128xf32>
    %c0_138 = arith.constant 0 : index
    %c0_139 = arith.constant 0 : index
    %277 = vector.load %arg5[%c0_138, %c0_139] : memref<128x512xf32, #tpu.memory_space<vmem>>, vector<128x512xf32>
    %cst_140 = arith.constant dense<0.000000e+00> : vector<64x512xf32>
    %278 = tpu.matmul %276, %277, %cst_140 {dimension_numbers = #tpu.dot_dimension_numbers<[1], [0], [0], [1], [0, 0, 1, 1], [], []>} : vector<64x128xf32>, vector<128x512xf32>, vector<64x512xf32> -> vector<64x512xf32>
    %c0_141 = arith.constant 0 : index
    %c0_142 = arith.constant 0 : index
    %279 = vector.load %arg7[%c0_141, %c0_142] : memref<1x512xf32, #tpu.memory_space<vmem>>, vector<1x512xf32>
    %280 = vector.broadcast %279 : vector<1x512xf32> to vector<64x512xf32>
    %281 = arith.addf %278, %280 : vector<64x512xf32>
    %c0_143 = arith.constant 0 : index
    %c0_144 = arith.constant 0 : index
    %282 = vector.load %arg11[%c0_143, %c0_144] : memref<64x512xf32, #tpu.memory_space<vmem>>, vector<64x512xf32>
    tpu.vector_store %arg11[%c0_143, %c0_144], %281 {strides = array<i32>} : memref<64x512xf32, #tpu.memory_space<vmem>>, vector<64x512xf32>,
    %cst_145 = arith.constant 0.000000e+00 : f32
    %283 = vector.broadcast %cst_145 : f32 to vector<8x128xf32>
    %c0_146 = arith.constant 0 : index
    %c0_147 = arith.constant 0 : index
    %284 = vector.load %arg14[%c0_146, %c0_147] : memref<8x128xf32, #tpu.memory_space<vmem>>, vector<8x128xf32>
    tpu.vector_store %arg14[%c0_146, %c0_147], %283 {strides = array<i32>} : memref<8x128xf32, #tpu.memory_space<vmem>>, vector<8x128xf32>,
    %cst_148 = arith.constant 0.000000e+00 : f32
    %285 = vector.broadcast %cst_148 : f32 to vector<8x128xf32>
    %c0_149 = arith.constant 0 : index
    %c0_150 = arith.constant 0 : index
    %286 = vector.load %arg15[%c0_149, %c0_150] : memref<8x128xf32, #tpu.memory_space<vmem>>, vector<8x128xf32>
    tpu.vector_store %arg15[%c0_149, %c0_150], %285 {strides = array<i32>} : memref<8x128xf32, #tpu.memory_space<vmem>>, vector<8x128xf32>,
    %c0_151 = arith.constant 0 : index
    %c0_152 = arith.constant 0 : index
    %287 = vector.load %arg6[%c0_151, %c0_152] : memref<128x512xf32, #tpu.memory_space<vmem>>, vector<128x512xf32>
    %c0_153 = arith.constant 0 : index
    %c0_154 = arith.constant 0 : index
    %288 = vector.load %arg11[%c0_153, %c0_154] : memref<64x512xf32, #tpu.memory_space<vmem>>, vector<8x512xf32>
    %c0_155 = arith.constant 0 : index
    %c0_156 = arith.constant 0 : index
    %289 = vector.load %arg14[%c0_155, %c0_156] : memref<8x128xf32, #tpu.memory_space<vmem>>, vector<8x128xf32>
    %cst_157 = arith.constant dense<0.000000e+00> : vector<8x512xf32>
    %290 = tpu.matmul %289, %287, %cst_157 {dimension_numbers = #tpu.dot_dimension_numbers<[1], [0], [0], [1], [0, 0, 1, 1], [], []>} : vector<8x128xf32>, vector<128x512xf32>, vector<8x512xf32> -> vector<8x512xf32>
    %291 = arith.addf %288, %290 : vector<8x512xf32>
    %292 = vector.extract_strided_slice %291 {offsets = [0, 0], sizes = [8, 128], strides = [1, 1]} : vector<8x512xf32> to vector<8x128xf32>
    %293 = arith.negf %292 : vector<8x128xf32>
    %294 = math.exp %293 : vector<8x128xf32>
    %cst_158 = arith.constant 1.000000e+00 : f32
    %295 = vector.broadcast %cst_158 : f32 to vector<8x128xf32>
    %296 = arith.addf %295, %294 : vector<8x128xf32>
    %297 = arith.divf %295, %296 : vector<8x128xf32>
    %298 = vector.extract_strided_slice %291 {offsets = [0, 128], sizes = [8, 128], strides = [1, 1]} : vector<8x512xf32> to vector<8x128xf32>
    %299 = arith.negf %298 : vector<8x128xf32>
    %300 = math.exp %299 : vector<8x128xf32>
    %cst_159 = arith.constant 1.000000e+00 : f32
    %301 = vector.broadcast %cst_159 : f32 to vector<8x128xf32>
    %302 = arith.addf %301, %300 : vector<8x128xf32>
    %303 = arith.divf %301, %302 : vector<8x128xf32>
    %304 = vector.extract_strided_slice %291 {offsets = [0, 256], sizes = [8, 128], strides = [1, 1]} : vector<8x512xf32> to vector<8x128xf32>
    %305 = math.tanh %304 : vector<8x128xf32>
    %306 = vector.extract_strided_slice %291 {offsets = [0, 384], sizes = [8, 128], strides = [1, 1]} : vector<8x512xf32> to vector<8x128xf32>
    %307 = arith.negf %306 : vector<8x128xf32>
    %308 = math.exp %307 : vector<8x128xf32>
    %cst_160 = arith.constant 1.000000e+00 : f32
    %309 = vector.broadcast %cst_160 : f32 to vector<8x128xf32>
    %310 = arith.addf %309, %308 : vector<8x128xf32>
    %311 = arith.divf %309, %310 : vector<8x128xf32>
    %c0_161 = arith.constant 0 : index
    %c0_162 = arith.constant 0 : index
    %312 = vector.load %arg15[%c0_161, %c0_162] : memref<8x128xf32, #tpu.memory_space<vmem>>, vector<8x128xf32>
    %313 = arith.mulf %303, %312 : vector<8x128xf32>
    %314 = arith.mulf %297, %305 : vector<8x128xf32>
    %315 = arith.addf %313, %314 : vector<8x128xf32>
    %316 = math.tanh %315 : vector<8x128xf32>
    %317 = arith.mulf %311, %316 : vector<8x128xf32>
    %c0_163 = arith.constant 0 : index
    %c0_164 = arith.constant 0 : index
    %318 = vector.load %arg15[%c0_163, %c0_164] : memref<8x128xf32, #tpu.memory_space<vmem>>, vector<8x128xf32>
    tpu.vector_store %arg15[%c0_163, %c0_164], %315 {strides = array<i32>} : memref<8x128xf32, #tpu.memory_space<vmem>>, vector<8x128xf32>,
    %c0_165 = arith.constant 0 : index
    %c0_166 = arith.constant 0 : index
    %319 = vector.load %arg14[%c0_165, %c0_166] : memref<8x128xf32, #tpu.memory_space<vmem>>, vector<8x128xf32>
    tpu.vector_store %arg14[%c0_165, %c0_166], %317 {strides = array<i32>} : memref<8x128xf32, #tpu.memory_space<vmem>>, vector<8x128xf32>,
    %c8_167 = arith.constant 8 : index
    %c0_168 = arith.constant 0 : index
    %320 = vector.load %arg11[%c8_167, %c0_168] : memref<64x512xf32, #tpu.memory_space<vmem>>, vector<8x512xf32>
    %c0_169 = arith.constant 0 : index
    %c0_170 = arith.constant 0 : index
    %321 = vector.load %arg14[%c0_169, %c0_170] : memref<8x128xf32, #tpu.memory_space<vmem>>, vector<8x128xf32>
    %cst_171 = arith.constant dense<0.000000e+00> : vector<8x512xf32>
    %322 = tpu.matmul %321, %287, %cst_171 {dimension_numbers = #tpu.dot_dimension_numbers<[1], [0], [0], [1], [0, 0, 1, 1], [], []>} : vector<8x128xf32>, vector<128x512xf32>, vector<8x512xf32> -> vector<8x512xf32>
    %323 = arith.addf %320, %322 : vector<8x512xf32>
    %324 = vector.extract_strided_slice %323 {offsets = [0, 0], sizes = [8, 128], strides = [1, 1]} : vector<8x512xf32> to vector<8x128xf32>
    %325 = arith.negf %324 : vector<8x128xf32>
    %326 = math.exp %325 : vector<8x128xf32>
    %cst_172 = arith.constant 1.000000e+00 : f32
    %327 = vector.broadcast %cst_172 : f32 to vector<8x128xf32>
    %328 = arith.addf %327, %326 : vector<8x128xf32>
    %329 = arith.divf %327, %328 : vector<8x128xf32>
    %330 = vector.extract_strided_slice %323 {offsets = [0, 128], sizes = [8, 128], strides = [1, 1]} : vector<8x512xf32> to vector<8x128xf32>
    %331 = arith.negf %330 : vector<8x128xf32>
    %332 = math.exp %331 : vector<8x128xf32>
    %cst_173 = arith.constant 1.000000e+00 : f32
    %333 = vector.broadcast %cst_173 : f32 to vector<8x128xf32>
    %334 = arith.addf %333, %332 : vector<8x128xf32>
    %335 = arith.divf %333, %334 : vector<8x128xf32>
    %336 = vector.extract_strided_slice %323 {offsets = [0, 256], sizes = [8, 128], strides = [1, 1]} : vector<8x512xf32> to vector<8x128xf32>
    %337 = math.tanh %336 : vector<8x128xf32>
    %338 = vector.extract_strided_slice %323 {offsets = [0, 384], sizes = [8, 128], strides = [1, 1]} : vector<8x512xf32> to vector<8x128xf32>
    %339 = arith.negf %338 : vector<8x128xf32>
    %340 = math.exp %339 : vector<8x128xf32>
    %cst_174 = arith.constant 1.000000e+00 : f32
    %341 = vector.broadcast %cst_174 : f32 to vector<8x128xf32>
    %342 = arith.addf %341, %340 : vector<8x128xf32>
    %343 = arith.divf %341, %342 : vector<8x128xf32>
    %c0_175 = arith.constant 0 : index
    %c0_176 = arith.constant 0 : index
    %344 = vector.load %arg15[%c0_175, %c0_176] : memref<8x128xf32, #tpu.memory_space<vmem>>, vector<8x128xf32>
    %345 = arith.mulf %335, %344 : vector<8x128xf32>
    %346 = arith.mulf %329, %337 : vector<8x128xf32>
    %347 = arith.addf %345, %346 : vector<8x128xf32>
    %348 = math.tanh %347 : vector<8x128xf32>
    %349 = arith.mulf %343, %348 : vector<8x128xf32>
    %c0_177 = arith.constant 0 : index
    %c0_178 = arith.constant 0 : index
    %350 = vector.load %arg15[%c0_177, %c0_178] : memref<8x128xf32, #tpu.memory_space<vmem>>, vector<8x128xf32>
    tpu.vector_store %arg15[%c0_177, %c0_178], %347 {strides = array<i32>} : memref<8x128xf32, #tpu.memory_space<vmem>>, vector<8x128xf32>,
    %c0_179 = arith.constant 0 : index
    %c0_180 = arith.constant 0 : index
    %351 = vector.load %arg14[%c0_179, %c0_180] : memref<8x128xf32, #tpu.memory_space<vmem>>, vector<8x128xf32>
    tpu.vector_store %arg14[%c0_179, %c0_180], %349 {strides = array<i32>} : memref<8x128xf32, #tpu.memory_space<vmem>>, vector<8x128xf32>,
    %c16_181 = arith.constant 16 : index
    %c0_182 = arith.constant 0 : index
    %352 = vector.load %arg11[%c16_181, %c0_182] : memref<64x512xf32, #tpu.memory_space<vmem>>, vector<8x512xf32>
    %c0_183 = arith.constant 0 : index
    %c0_184 = arith.constant 0 : index
    %353 = vector.load %arg14[%c0_183, %c0_184] : memref<8x128xf32, #tpu.memory_space<vmem>>, vector<8x128xf32>
    %cst_185 = arith.constant dense<0.000000e+00> : vector<8x512xf32>
    %354 = tpu.matmul %353, %287, %cst_185 {dimension_numbers = #tpu.dot_dimension_numbers<[1], [0], [0], [1], [0, 0, 1, 1], [], []>} : vector<8x128xf32>, vector<128x512xf32>, vector<8x512xf32> -> vector<8x512xf32>
    %355 = arith.addf %352, %354 : vector<8x512xf32>
    %356 = vector.extract_strided_slice %355 {offsets = [0, 0], sizes = [8, 128], strides = [1, 1]} : vector<8x512xf32> to vector<8x128xf32>
    %357 = arith.negf %356 : vector<8x128xf32>
    %358 = math.exp %357 : vector<8x128xf32>
    %cst_186 = arith.constant 1.000000e+00 : f32
    %359 = vector.broadcast %cst_186 : f32 to vector<8x128xf32>
    %360 = arith.addf %359, %358 : vector<8x128xf32>
    %361 = arith.divf %359, %360 : vector<8x128xf32>
    %362 = vector.extract_strided_slice %355 {offsets = [0, 128], sizes = [8, 128], strides = [1, 1]} : vector<8x512xf32> to vector<8x128xf32>
    %363 = arith.negf %362 : vector<8x128xf32>
    %364 = math.exp %363 : vector<8x128xf32>
    %cst_187 = arith.constant 1.000000e+00 : f32
    %365 = vector.broadcast %cst_187 : f32 to vector<8x128xf32>
    %366 = arith.addf %365, %364 : vector<8x128xf32>
    %367 = arith.divf %365, %366 : vector<8x128xf32>
    %368 = vector.extract_strided_slice %355 {offsets = [0, 256], sizes = [8, 128], strides = [1, 1]} : vector<8x512xf32> to vector<8x128xf32>
    %369 = math.tanh %368 : vector<8x128xf32>
    %370 = vector.extract_strided_slice %355 {offsets = [0, 384], sizes = [8, 128], strides = [1, 1]} : vector<8x512xf32> to vector<8x128xf32>
    %371 = arith.negf %370 : vector<8x128xf32>
    %372 = math.exp %371 : vector<8x128xf32>
    %cst_188 = arith.constant 1.000000e+00 : f32
    %373 = vector.broadcast %cst_188 : f32 to vector<8x128xf32>
    %374 = arith.addf %373, %372 : vector<8x128xf32>
    %375 = arith.divf %373, %374 : vector<8x128xf32>
    %c0_189 = arith.constant 0 : index
    %c0_190 = arith.constant 0 : index
    %376 = vector.load %arg15[%c0_189, %c0_190] : memref<8x128xf32, #tpu.memory_space<vmem>>, vector<8x128xf32>
    %377 = arith.mulf %367, %376 : vector<8x128xf32>
    %378 = arith.mulf %361, %369 : vector<8x128xf32>
    %379 = arith.addf %377, %378 : vector<8x128xf32>
    %380 = math.tanh %379 : vector<8x128xf32>
    %381 = arith.mulf %375, %380 : vector<8x128xf32>
    %c0_191 = arith.constant 0 : index
    %c0_192 = arith.constant 0 : index
    %382 = vector.load %arg15[%c0_191, %c0_192] : memref<8x128xf32, #tpu.memory_space<vmem>>, vector<8x128xf32>
    tpu.vector_store %arg15[%c0_191, %c0_192], %379 {strides = array<i32>} : memref<8x128xf32, #tpu.memory_space<vmem>>, vector<8x128xf32>,
    %c0_193 = arith.constant 0 : index
    %c0_194 = arith.constant 0 : index
    %383 = vector.load %arg14[%c0_193, %c0_194] : memref<8x128xf32, #tpu.memory_space<vmem>>, vector<8x128xf32>
    tpu.vector_store %arg14[%c0_193, %c0_194], %381 {strides = array<i32>} : memref<8x128xf32, #tpu.memory_space<vmem>>, vector<8x128xf32>,
    %c24_195 = arith.constant 24 : index
    %c0_196 = arith.constant 0 : index
    %384 = vector.load %arg11[%c24_195, %c0_196] : memref<64x512xf32, #tpu.memory_space<vmem>>, vector<8x512xf32>
    %c0_197 = arith.constant 0 : index
    %c0_198 = arith.constant 0 : index
    %385 = vector.load %arg14[%c0_197, %c0_198] : memref<8x128xf32, #tpu.memory_space<vmem>>, vector<8x128xf32>
    %cst_199 = arith.constant dense<0.000000e+00> : vector<8x512xf32>
    %386 = tpu.matmul %385, %287, %cst_199 {dimension_numbers = #tpu.dot_dimension_numbers<[1], [0], [0], [1], [0, 0, 1, 1], [], []>} : vector<8x128xf32>, vector<128x512xf32>, vector<8x512xf32> -> vector<8x512xf32>
    %387 = arith.addf %384, %386 : vector<8x512xf32>
    %388 = vector.extract_strided_slice %387 {offsets = [0, 0], sizes = [8, 128], strides = [1, 1]} : vector<8x512xf32> to vector<8x128xf32>
    %389 = arith.negf %388 : vector<8x128xf32>
    %390 = math.exp %389 : vector<8x128xf32>
    %cst_200 = arith.constant 1.000000e+00 : f32
    %391 = vector.broadcast %cst_200 : f32 to vector<8x128xf32>
    %392 = arith.addf %391, %390 : vector<8x128xf32>
    %393 = arith.divf %391, %392 : vector<8x128xf32>
    %394 = vector.extract_strided_slice %387 {offsets = [0, 128], sizes = [8, 128], strides = [1, 1]} : vector<8x512xf32> to vector<8x128xf32>
    %395 = arith.negf %394 : vector<8x128xf32>
    %396 = math.exp %395 : vector<8x128xf32>
    %cst_201 = arith.constant 1.000000e+00 : f32
    %397 = vector.broadcast %cst_201 : f32 to vector<8x128xf32>
    %398 = arith.addf %397, %396 : vector<8x128xf32>
    %399 = arith.divf %397, %398 : vector<8x128xf32>
    %400 = vector.extract_strided_slice %387 {offsets = [0, 256], sizes = [8, 128], strides = [1, 1]} : vector<8x512xf32> to vector<8x128xf32>
    %401 = math.tanh %400 : vector<8x128xf32>
    %402 = vector.extract_strided_slice %387 {offsets = [0, 384], sizes = [8, 128], strides = [1, 1]} : vector<8x512xf32> to vector<8x128xf32>
    %403 = arith.negf %402 : vector<8x128xf32>
    %404 = math.exp %403 : vector<8x128xf32>
    %cst_202 = arith.constant 1.000000e+00 : f32
    %405 = vector.broadcast %cst_202 : f32 to vector<8x128xf32>
    %406 = arith.addf %405, %404 : vector<8x128xf32>
    %407 = arith.divf %405, %406 : vector<8x128xf32>
    %c0_203 = arith.constant 0 : index
    %c0_204 = arith.constant 0 : index
    %408 = vector.load %arg15[%c0_203, %c0_204] : memref<8x128xf32, #tpu.memory_space<vmem>>, vector<8x128xf32>
    %409 = arith.mulf %399, %408 : vector<8x128xf32>
    %410 = arith.mulf %393, %401 : vector<8x128xf32>
    %411 = arith.addf %409, %410 : vector<8x128xf32>
    %412 = math.tanh %411 : vector<8x128xf32>
    %413 = arith.mulf %407, %412 : vector<8x128xf32>
    %c0_205 = arith.constant 0 : index
    %c0_206 = arith.constant 0 : index
    %414 = vector.load %arg15[%c0_205, %c0_206] : memref<8x128xf32, #tpu.memory_space<vmem>>, vector<8x128xf32>
    tpu.vector_store %arg15[%c0_205, %c0_206], %411 {strides = array<i32>} : memref<8x128xf32, #tpu.memory_space<vmem>>, vector<8x128xf32>,
    %c0_207 = arith.constant 0 : index
    %c0_208 = arith.constant 0 : index
    %415 = vector.load %arg14[%c0_207, %c0_208] : memref<8x128xf32, #tpu.memory_space<vmem>>, vector<8x128xf32>
    tpu.vector_store %arg14[%c0_207, %c0_208], %413 {strides = array<i32>} : memref<8x128xf32, #tpu.memory_space<vmem>>, vector<8x128xf32>,
    %c32_209 = arith.constant 32 : index
    %c0_210 = arith.constant 0 : index
    %416 = vector.load %arg11[%c32_209, %c0_210] : memref<64x512xf32, #tpu.memory_space<vmem>>, vector<8x512xf32>
    %c0_211 = arith.constant 0 : index
    %c0_212 = arith.constant 0 : index
    %417 = vector.load %arg14[%c0_211, %c0_212] : memref<8x128xf32, #tpu.memory_space<vmem>>, vector<8x128xf32>
    %cst_213 = arith.constant dense<0.000000e+00> : vector<8x512xf32>
    %418 = tpu.matmul %417, %287, %cst_213 {dimension_numbers = #tpu.dot_dimension_numbers<[1], [0], [0], [1], [0, 0, 1, 1], [], []>} : vector<8x128xf32>, vector<128x512xf32>, vector<8x512xf32> -> vector<8x512xf32>
    %419 = arith.addf %416, %418 : vector<8x512xf32>
    %420 = vector.extract_strided_slice %419 {offsets = [0, 0], sizes = [8, 128], strides = [1, 1]} : vector<8x512xf32> to vector<8x128xf32>
    %421 = arith.negf %420 : vector<8x128xf32>
    %422 = math.exp %421 : vector<8x128xf32>
    %cst_214 = arith.constant 1.000000e+00 : f32
    %423 = vector.broadcast %cst_214 : f32 to vector<8x128xf32>
    %424 = arith.addf %423, %422 : vector<8x128xf32>
    %425 = arith.divf %423, %424 : vector<8x128xf32>
    %426 = vector.extract_strided_slice %419 {offsets = [0, 128], sizes = [8, 128], strides = [1, 1]} : vector<8x512xf32> to vector<8x128xf32>
    %427 = arith.negf %426 : vector<8x128xf32>
    %428 = math.exp %427 : vector<8x128xf32>
    %cst_215 = arith.constant 1.000000e+00 : f32
    %429 = vector.broadcast %cst_215 : f32 to vector<8x128xf32>
    %430 = arith.addf %429, %428 : vector<8x128xf32>
    %431 = arith.divf %429, %430 : vector<8x128xf32>
    %432 = vector.extract_strided_slice %419 {offsets = [0, 256], sizes = [8, 128], strides = [1, 1]} : vector<8x512xf32> to vector<8x128xf32>
    %433 = math.tanh %432 : vector<8x128xf32>
    %434 = vector.extract_strided_slice %419 {offsets = [0, 384], sizes = [8, 128], strides = [1, 1]} : vector<8x512xf32> to vector<8x128xf32>
    %435 = arith.negf %434 : vector<8x128xf32>
    %436 = math.exp %435 : vector<8x128xf32>
    %cst_216 = arith.constant 1.000000e+00 : f32
    %437 = vector.broadcast %cst_216 : f32 to vector<8x128xf32>
    %438 = arith.addf %437, %436 : vector<8x128xf32>
    %439 = arith.divf %437, %438 : vector<8x128xf32>
    %c0_217 = arith.constant 0 : index
    %c0_218 = arith.constant 0 : index
    %440 = vector.load %arg15[%c0_217, %c0_218] : memref<8x128xf32, #tpu.memory_space<vmem>>, vector<8x128xf32>
    %441 = arith.mulf %431, %440 : vector<8x128xf32>
    %442 = arith.mulf %425, %433 : vector<8x128xf32>
    %443 = arith.addf %441, %442 : vector<8x128xf32>
    %444 = math.tanh %443 : vector<8x128xf32>
    %445 = arith.mulf %439, %444 : vector<8x128xf32>
    %c0_219 = arith.constant 0 : index
    %c0_220 = arith.constant 0 : index
    %446 = vector.load %arg15[%c0_219, %c0_220] : memref<8x128xf32, #tpu.memory_space<vmem>>, vector<8x128xf32>
    tpu.vector_store %arg15[%c0_219, %c0_220], %443 {strides = array<i32>} : memref<8x128xf32, #tpu.memory_space<vmem>>, vector<8x128xf32>,
    %c0_221 = arith.constant 0 : index
    %c0_222 = arith.constant 0 : index
    %447 = vector.load %arg14[%c0_221, %c0_222] : memref<8x128xf32, #tpu.memory_space<vmem>>, vector<8x128xf32>
    tpu.vector_store %arg14[%c0_221, %c0_222], %445 {strides = array<i32>} : memref<8x128xf32, #tpu.memory_space<vmem>>, vector<8x128xf32>,
    %c40_223 = arith.constant 40 : index
    %c0_224 = arith.constant 0 : index
    %448 = vector.load %arg11[%c40_223, %c0_224] : memref<64x512xf32, #tpu.memory_space<vmem>>, vector<8x512xf32>
    %c0_225 = arith.constant 0 : index
    %c0_226 = arith.constant 0 : index
    %449 = vector.load %arg14[%c0_225, %c0_226] : memref<8x128xf32, #tpu.memory_space<vmem>>, vector<8x128xf32>
    %cst_227 = arith.constant dense<0.000000e+00> : vector<8x512xf32>
    %450 = tpu.matmul %449, %287, %cst_227 {dimension_numbers = #tpu.dot_dimension_numbers<[1], [0], [0], [1], [0, 0, 1, 1], [], []>} : vector<8x128xf32>, vector<128x512xf32>, vector<8x512xf32> -> vector<8x512xf32>
    %451 = arith.addf %448, %450 : vector<8x512xf32>
    %452 = vector.extract_strided_slice %451 {offsets = [0, 0], sizes = [8, 128], strides = [1, 1]} : vector<8x512xf32> to vector<8x128xf32>
    %453 = arith.negf %452 : vector<8x128xf32>
    %454 = math.exp %453 : vector<8x128xf32>
    %cst_228 = arith.constant 1.000000e+00 : f32
    %455 = vector.broadcast %cst_228 : f32 to vector<8x128xf32>
    %456 = arith.addf %455, %454 : vector<8x128xf32>
    %457 = arith.divf %455, %456 : vector<8x128xf32>
    %458 = vector.extract_strided_slice %451 {offsets = [0, 128], sizes = [8, 128], strides = [1, 1]} : vector<8x512xf32> to vector<8x128xf32>
    %459 = arith.negf %458 : vector<8x128xf32>
    %460 = math.exp %459 : vector<8x128xf32>
    %cst_229 = arith.constant 1.000000e+00 : f32
    %461 = vector.broadcast %cst_229 : f32 to vector<8x128xf32>
    %462 = arith.addf %461, %460 : vector<8x128xf32>
    %463 = arith.divf %461, %462 : vector<8x128xf32>
    %464 = vector.extract_strided_slice %451 {offsets = [0, 256], sizes = [8, 128], strides = [1, 1]} : vector<8x512xf32> to vector<8x128xf32>
    %465 = math.tanh %464 : vector<8x128xf32>
    %466 = vector.extract_strided_slice %451 {offsets = [0, 384], sizes = [8, 128], strides = [1, 1]} : vector<8x512xf32> to vector<8x128xf32>
    %467 = arith.negf %466 : vector<8x128xf32>
    %468 = math.exp %467 : vector<8x128xf32>
    %cst_230 = arith.constant 1.000000e+00 : f32
    %469 = vector.broadcast %cst_230 : f32 to vector<8x128xf32>
    %470 = arith.addf %469, %468 : vector<8x128xf32>
    %471 = arith.divf %469, %470 : vector<8x128xf32>
    %c0_231 = arith.constant 0 : index
    %c0_232 = arith.constant 0 : index
    %472 = vector.load %arg15[%c0_231, %c0_232] : memref<8x128xf32, #tpu.memory_space<vmem>>, vector<8x128xf32>
    %473 = arith.mulf %463, %472 : vector<8x128xf32>
    %474 = arith.mulf %457, %465 : vector<8x128xf32>
    %475 = arith.addf %473, %474 : vector<8x128xf32>
    %476 = math.tanh %475 : vector<8x128xf32>
    %477 = arith.mulf %471, %476 : vector<8x128xf32>
    %c0_233 = arith.constant 0 : index
    %c0_234 = arith.constant 0 : index
    %478 = vector.load %arg15[%c0_233, %c0_234] : memref<8x128xf32, #tpu.memory_space<vmem>>, vector<8x128xf32>
    tpu.vector_store %arg15[%c0_233, %c0_234], %475 {strides = array<i32>} : memref<8x128xf32, #tpu.memory_space<vmem>>, vector<8x128xf32>,
    %c0_235 = arith.constant 0 : index
    %c0_236 = arith.constant 0 : index
    %479 = vector.load %arg14[%c0_235, %c0_236] : memref<8x128xf32, #tpu.memory_space<vmem>>, vector<8x128xf32>
    tpu.vector_store %arg14[%c0_235, %c0_236], %477 {strides = array<i32>} : memref<8x128xf32, #tpu.memory_space<vmem>>, vector<8x128xf32>,
    %c48_237 = arith.constant 48 : index
    %c0_238 = arith.constant 0 : index
    %480 = vector.load %arg11[%c48_237, %c0_238] : memref<64x512xf32, #tpu.memory_space<vmem>>, vector<8x512xf32>
    %c0_239 = arith.constant 0 : index
    %c0_240 = arith.constant 0 : index
    %481 = vector.load %arg14[%c0_239, %c0_240] : memref<8x128xf32, #tpu.memory_space<vmem>>, vector<8x128xf32>
    %cst_241 = arith.constant dense<0.000000e+00> : vector<8x512xf32>
    %482 = tpu.matmul %481, %287, %cst_241 {dimension_numbers = #tpu.dot_dimension_numbers<[1], [0], [0], [1], [0, 0, 1, 1], [], []>} : vector<8x128xf32>, vector<128x512xf32>, vector<8x512xf32> -> vector<8x512xf32>
    %483 = arith.addf %480, %482 : vector<8x512xf32>
    %484 = vector.extract_strided_slice %483 {offsets = [0, 0], sizes = [8, 128], strides = [1, 1]} : vector<8x512xf32> to vector<8x128xf32>
    %485 = arith.negf %484 : vector<8x128xf32>
    %486 = math.exp %485 : vector<8x128xf32>
    %cst_242 = arith.constant 1.000000e+00 : f32
    %487 = vector.broadcast %cst_242 : f32 to vector<8x128xf32>
    %488 = arith.addf %487, %486 : vector<8x128xf32>
    %489 = arith.divf %487, %488 : vector<8x128xf32>
    %490 = vector.extract_strided_slice %483 {offsets = [0, 128], sizes = [8, 128], strides = [1, 1]} : vector<8x512xf32> to vector<8x128xf32>
    %491 = arith.negf %490 : vector<8x128xf32>
    %492 = math.exp %491 : vector<8x128xf32>
    %cst_243 = arith.constant 1.000000e+00 : f32
    %493 = vector.broadcast %cst_243 : f32 to vector<8x128xf32>
    %494 = arith.addf %493, %492 : vector<8x128xf32>
    %495 = arith.divf %493, %494 : vector<8x128xf32>
    %496 = vector.extract_strided_slice %483 {offsets = [0, 256], sizes = [8, 128], strides = [1, 1]} : vector<8x512xf32> to vector<8x128xf32>
    %497 = math.tanh %496 : vector<8x128xf32>
    %498 = vector.extract_strided_slice %483 {offsets = [0, 384], sizes = [8, 128], strides = [1, 1]} : vector<8x512xf32> to vector<8x128xf32>
    %499 = arith.negf %498 : vector<8x128xf32>
    %500 = math.exp %499 : vector<8x128xf32>
    %cst_244 = arith.constant 1.000000e+00 : f32
    %501 = vector.broadcast %cst_244 : f32 to vector<8x128xf32>
    %502 = arith.addf %501, %500 : vector<8x128xf32>
    %503 = arith.divf %501, %502 : vector<8x128xf32>
    %c0_245 = arith.constant 0 : index
    %c0_246 = arith.constant 0 : index
    %504 = vector.load %arg15[%c0_245, %c0_246] : memref<8x128xf32, #tpu.memory_space<vmem>>, vector<8x128xf32>
    %505 = arith.mulf %495, %504 : vector<8x128xf32>
    %506 = arith.mulf %489, %497 : vector<8x128xf32>
    %507 = arith.addf %505, %506 : vector<8x128xf32>
    %508 = math.tanh %507 : vector<8x128xf32>
    %509 = arith.mulf %503, %508 : vector<8x128xf32>
    %c0_247 = arith.constant 0 : index
    %c0_248 = arith.constant 0 : index
    %510 = vector.load %arg15[%c0_247, %c0_248] : memref<8x128xf32, #tpu.memory_space<vmem>>, vector<8x128xf32>
    tpu.vector_store %arg15[%c0_247, %c0_248], %507 {strides = array<i32>} : memref<8x128xf32, #tpu.memory_space<vmem>>, vector<8x128xf32>,
    %c0_249 = arith.constant 0 : index
    %c0_250 = arith.constant 0 : index
    %511 = vector.load %arg14[%c0_249, %c0_250] : memref<8x128xf32, #tpu.memory_space<vmem>>, vector<8x128xf32>
    tpu.vector_store %arg14[%c0_249, %c0_250], %509 {strides = array<i32>} : memref<8x128xf32, #tpu.memory_space<vmem>>, vector<8x128xf32>,
    %c56_251 = arith.constant 56 : index
    %c0_252 = arith.constant 0 : index
    %512 = vector.load %arg11[%c56_251, %c0_252] : memref<64x512xf32, #tpu.memory_space<vmem>>, vector<8x512xf32>
    %c0_253 = arith.constant 0 : index
    %c0_254 = arith.constant 0 : index
    %513 = vector.load %arg14[%c0_253, %c0_254] : memref<8x128xf32, #tpu.memory_space<vmem>>, vector<8x128xf32>
    %cst_255 = arith.constant dense<0.000000e+00> : vector<8x512xf32>
    %514 = tpu.matmul %513, %287, %cst_255 {dimension_numbers = #tpu.dot_dimension_numbers<[1], [0], [0], [1], [0, 0, 1, 1], [], []>} : vector<8x128xf32>, vector<128x512xf32>, vector<8x512xf32> -> vector<8x512xf32>
    %515 = arith.addf %512, %514 : vector<8x512xf32>
    %516 = vector.extract_strided_slice %515 {offsets = [0, 0], sizes = [8, 128], strides = [1, 1]} : vector<8x512xf32> to vector<8x128xf32>
    %517 = arith.negf %516 : vector<8x128xf32>
    %518 = math.exp %517 : vector<8x128xf32>
    %cst_256 = arith.constant 1.000000e+00 : f32
    %519 = vector.broadcast %cst_256 : f32 to vector<8x128xf32>
    %520 = arith.addf %519, %518 : vector<8x128xf32>
    %521 = arith.divf %519, %520 : vector<8x128xf32>
    %522 = vector.extract_strided_slice %515 {offsets = [0, 128], sizes = [8, 128], strides = [1, 1]} : vector<8x512xf32> to vector<8x128xf32>
    %523 = arith.negf %522 : vector<8x128xf32>
    %524 = math.exp %523 : vector<8x128xf32>
    %cst_257 = arith.constant 1.000000e+00 : f32
    %525 = vector.broadcast %cst_257 : f32 to vector<8x128xf32>
    %526 = arith.addf %525, %524 : vector<8x128xf32>
    %527 = arith.divf %525, %526 : vector<8x128xf32>
    %528 = vector.extract_strided_slice %515 {offsets = [0, 256], sizes = [8, 128], strides = [1, 1]} : vector<8x512xf32> to vector<8x128xf32>
    %529 = math.tanh %528 : vector<8x128xf32>
    %530 = vector.extract_strided_slice %515 {offsets = [0, 384], sizes = [8, 128], strides = [1, 1]} : vector<8x512xf32> to vector<8x128xf32>
    %531 = arith.negf %530 : vector<8x128xf32>
    %532 = math.exp %531 : vector<8x128xf32>
    %cst_258 = arith.constant 1.000000e+00 : f32
    %533 = vector.broadcast %cst_258 : f32 to vector<8x128xf32>
    %534 = arith.addf %533, %532 : vector<8x128xf32>
    %535 = arith.divf %533, %534 : vector<8x128xf32>
    %c0_259 = arith.constant 0 : index
    %c0_260 = arith.constant 0 : index
    %536 = vector.load %arg15[%c0_259, %c0_260] : memref<8x128xf32, #tpu.memory_space<vmem>>, vector<8x128xf32>
    %537 = arith.mulf %527, %536 : vector<8x128xf32>
    %538 = arith.mulf %521, %529 : vector<8x128xf32>
    %539 = arith.addf %537, %538 : vector<8x128xf32>
    %540 = math.tanh %539 : vector<8x128xf32>
    %541 = arith.mulf %535, %540 : vector<8x128xf32>
    %c0_261 = arith.constant 0 : index
    %c0_262 = arith.constant 0 : index
    %542 = vector.load %arg15[%c0_261, %c0_262] : memref<8x128xf32, #tpu.memory_space<vmem>>, vector<8x128xf32>
    tpu.vector_store %arg15[%c0_261, %c0_262], %539 {strides = array<i32>} : memref<8x128xf32, #tpu.memory_space<vmem>>, vector<8x128xf32>,
    %c0_263 = arith.constant 0 : index
    %c0_264 = arith.constant 0 : index
    %543 = vector.load %arg14[%c0_263, %c0_264] : memref<8x128xf32, #tpu.memory_space<vmem>>, vector<8x128xf32>
    tpu.vector_store %arg14[%c0_263, %c0_264], %541 {strides = array<i32>} : memref<8x128xf32, #tpu.memory_space<vmem>>, vector<8x128xf32>,
    %c0_265 = arith.constant 0 : index
    %c0_266 = arith.constant 0 : index
    %544 = vector.load %arg14[%c0_265, %c0_266] : memref<8x128xf32, #tpu.memory_space<vmem>>, vector<8x128xf32>
    %c0_267 = arith.constant 0 : index
    %c0_268 = arith.constant 0 : index
    %545 = vector.load %arg8[%c0_267, %c0_268] : memref<128x128xf32, #tpu.memory_space<vmem>>, vector<128x128xf32>
    %cst_269 = arith.constant dense<0.000000e+00> : vector<8x128xf32>
    %546 = tpu.matmul %544, %545, %cst_269 {dimension_numbers = #tpu.dot_dimension_numbers<[1], [0], [0], [1], [0, 0, 1, 1], [], []>} : vector<8x128xf32>, vector<128x128xf32>, vector<8x128xf32> -> vector<8x128xf32>
    %c0_270 = arith.constant 0 : index
    %c0_271 = arith.constant 0 : index
    %547 = vector.load %arg9[%c0_270, %c0_271] : memref<1x128xf32, #tpu.memory_space<vmem>>, vector<1x128xf32>
    %548 = vector.broadcast %547 : vector<1x128xf32> to vector<8x128xf32>
    %549 = arith.addf %546, %548 : vector<8x128xf32>
    %c0_272 = arith.constant 0 : index
    %c0_273 = arith.constant 0 : index
    %550 = vector.load %arg10[%c0_272, %c0_273] : memref<8x128xf32, #tpu.memory_space<vmem>>, vector<8x128xf32>
    tpu.vector_store %arg10[%c0_272, %c0_273], %549 {strides = array<i32>} : memref<8x128xf32, #tpu.memory_space<vmem>>, vector<8x128xf32>,
    return
  }
  func.func @transform_0(%arg0: i32) -> (i32, i32) {
    %c0_i32 = arith.constant 0 : i32
    %c0_i32_0 = arith.constant 0 : i32
    %c0_i32_1 = arith.constant 0 : i32
    return %c0_i32, %c0_i32_0 : i32, i32
  }
  func.func @transform_1(%arg0: i32) -> (i32, i32) {
    %c0_i32 = arith.constant 0 : i32
    %c0_i32_0 = arith.constant 0 : i32
    %c0_i32_1 = arith.constant 0 : i32
    return %c0_i32, %c0_i32_0 : i32, i32
  }
  func.func @transform_2(%arg0: i32) -> (i32, i32) {
    %c0_i32 = arith.constant 0 : i32
    %c0_i32_0 = arith.constant 0 : i32
    %c0_i32_1 = arith.constant 0 : i32
    return %c0_i32, %c0_i32_0 : i32, i32
  }
  func.func @transform_3(%arg0: i32) -> (i32, i32) {
    %c0_i32 = arith.constant 0 : i32
    %c0_i32_0 = arith.constant 0 : i32
    %c0_i32_1 = arith.constant 0 : i32
    return %c0_i32, %c0_i32_0 : i32, i32
  }
  func.func @transform_4(%arg0: i32) -> (i32, i32) {
    %c0_i32 = arith.constant 0 : i32
    %c0_i32_0 = arith.constant 0 : i32
    %c0_i32_1 = arith.constant 0 : i32
    return %c0_i32, %c0_i32_0 : i32, i32
  }
  func.func @transform_5(%arg0: i32) -> (i32, i32) {
    %c0_i32 = arith.constant 0 : i32
    %c0_i32_0 = arith.constant 0 : i32
    %c0_i32_1 = arith.constant 0 : i32
    return %c0_i32, %c0_i32_0 : i32, i32
  }
  func.func @transform_6(%arg0: i32) -> (i32, i32) {
    %c0_i32 = arith.constant 0 : i32
    %c0_i32_0 = arith.constant 0 : i32
    %c0_i32_1 = arith.constant 0 : i32
    return %c0_i32, %c0_i32_0 : i32, i32
  }
  func.func @transform_7(%arg0: i32) -> (i32, i32) {
    %c0_i32 = arith.constant 0 : i32
    %c0_i32_0 = arith.constant 0 : i32
    %c0_i32_1 = arith.constant 0 : i32
    return %c0_i32, %c0_i32_0 : i32, i32
  }
  func.func @transform_8(%arg0: i32) -> (i32, i32) {
    %c0_i32 = arith.constant 0 : i32
    %c0_i32_0 = arith.constant 0 : i32
    %c0_i32_1 = arith.constant 0 : i32
    return %c0_i32, %c0_i32_0 : i32, i32
  }
  func.func @transform_9(%arg0: i32) -> (i32, i32) {
    %c0_i32 = arith.constant 0 : i32
    %c0_i32_0 = arith.constant 0 : i32
    %c0_i32_1 = arith.constant 0 : i32
    return %c0_i32, %c0_i32_0 : i32, i32
  }
}

</mosaic_0001>

<llo_original>
// kernel: lstm_model_forward.1
$region0: #{lstm_model_forward.1}
  #allocation0 [shape = 'u32[]', space=smem, size = 0x4, offset = 0x4, fixed_abs, tag = 'smem constant byte address 0x4 - core index']
  #allocation1 [shape = 'u32[72,128]{1,0:T(1,128)}', space=vmem, size = 0x9000, scoped, tag = 'internal scratch']
  #allocation2 [shape = 'f32[64,512]{1,0:T(8,128)}', space=vmem, size = 0x20000, scoped, tag = 'scratch operand']
  #allocation3 [shape = 'f32[64,128]{1,0:T(8,128)}', space=vmem, size = 0x8000, scoped, tag = 'scratch operand']
  #allocation4 [shape = 'f32[64,128]{1,0:T(8,128)}', space=vmem, size = 0x8000, scoped, tag = 'scratch operand']
  #allocation5 [shape = 'f32[8,128]{1,0:T(8,128)}', space=vmem, size = 0x1000, scoped, tag = 'scratch operand']
  #allocation6 [shape = 'f32[8,128]{1,0:T(8,128)}', space=vmem, size = 0x1000, scoped, tag = 'scratch operand']
  %s0 = inlined_call_operand.vmem [shape: f32[64,16], index: 0, kind: input, shape index: {}]
  %s1 = inlined_call_operand.vmem [shape: f32[16,512], index: 1, kind: input, shape index: {}]
  %s2 = inlined_call_operand.hbm [shape: f32[128,512], index: 2, kind: input, shape index: {}]
  %s3 = inlined_call_operand.vmem [shape: f32[1,512], index: 3, kind: input, shape index: {}]
  %s4 = inlined_call_operand.hbm [shape: f32[128,512], index: 4, kind: input, shape index: {}]
  %s5 = inlined_call_operand.hbm [shape: f32[128,512], index: 5, kind: input, shape index: {}]
  %s6 = inlined_call_operand.vmem [shape: f32[1,512], index: 6, kind: input, shape index: {}]
  %s7 = inlined_call_operand.vmem [shape: f32[128,128], index: 7, kind: input, shape index: {}]
  %s8 = inlined_call_operand.vmem [shape: f32[1,128], index: 8, kind: input, shape index: {}]
  %s9 = inlined_call_operand.vmem [shape: f32[8,128], index: 9, kind: output, shape index: {}]
  %s10 = sld [smem:[#allocation0]]
  $region58: #{lstm_model_forward.1} parent=0
    _
  %s12 = ssub.s32 1, %s10
  %s13 = scalar_select 0, %s12, %s10
  $region1: #{lstm_model_forward.1} parent=0
    #allocation7 [shape = 'u8[262144]{0}', space=vmem, size = 0x40000, scoped, tag = 'input window, operand 2, single buffered']
    #allocation8 [shape = 's32[1]{0}', space=sflag, size = 0x4, scoped, tag = 'scoped memory for lstm_model_forward.1']
    #allocation9 [shape = 'u8[262144]{0}', space=vmem, size = 0x40000, scoped, tag = 'input window, operand 4, single buffered']
    #allocation10 [shape = 's32[1]{0}', space=sflag, size = 0x4, scoped, tag = 'scoped memory for lstm_model_forward.1']
    #allocation11 [shape = 'u8[262144]{0}', space=vmem, size = 0x40000, scoped, tag = 'input window, operand 5, single buffered']
    %14 = vsyncpa [#allocation8], 0
    %15 = vsyncpa [#allocation10], 0
    // Predicated region
    $region2: #{lstm_model_forward.1} parent=1 // pred_check
      _
    $region3: #{lstm_model_forward.1} parent=1 // pred_check_branch
      %17 = sbr.rel (0) target = $region5
    $region4: #{lstm_model_forward.1} parent=1 // pred_region
      _
    $region5: #{lstm_model_forward.1} parent=1 // pred_fallthru
      _
    // Predicated region
    $region6: #{lstm_model_forward.1} parent=1 // pred_check
      _
    $region7: #{lstm_model_forward.1} parent=1 // pred_check_branch
      %19 = sbr.rel (0) target = $region9
    $region8: #{lstm_model_forward.1} parent=1 // pred_region
      _
    $region9: #{lstm_model_forward.1} parent=1 // pred_fallthru
      _
    // Predicated region
    $region10: #{lstm_model_forward.1} parent=1 // pred_check
      _
    $region11: #{lstm_model_forward.1} parent=1 // pred_check_branch
      %21 = sbr.rel (0) target = $region13
    $region12: #{lstm_model_forward.1} parent=1 // pred_region
      %23 = vsyncadd [#allocation8], 0
      %s24 = sshll.u32 %s2, 4
      %s25 = int_to_ptr.hbm [resolvable:$true] %s24
      %s26 = sshll.u32 [#allocation7], 4
      %s27 = int_to_ptr.vmem [resolvable:$true] %s26
      %32 = dma.hbm_to_vmem [thread:$0]  %s25, 8192, %s27, [#allocation8], 512, 512, 32
    $region13: #{lstm_model_forward.1} parent=1 // pred_fallthru
      _
    // Predicated region
    $region14: #{lstm_model_forward.1} parent=1 // pred_check
      _
    $region15: #{lstm_model_forward.1} parent=1 // pred_check_branch
      %34 = sbr.rel (0) target = $region17
    $region16: #{lstm_model_forward.1} parent=1 // pred_region
      _
    $region17: #{lstm_model_forward.1} parent=1 // pred_fallthru
      _
    // Predicated region
    $region18: #{lstm_model_forward.1} parent=1 // pred_check
      _
    $region19: #{lstm_model_forward.1} parent=1 // pred_check_branch
      %36 = sbr.rel (0) target = $region21
    $region20: #{lstm_model_forward.1} parent=1 // pred_region
      %38 = vsyncadd [#allocation10], 0
      %s39 = sshll.u32 %s4, 4
      %s40 = int_to_ptr.hbm [resolvable:$true] %s39
      %s41 = sshll.u32 [#allocation9], 4
      %s42 = int_to_ptr.vmem [resolvable:$true] %s41
      %47 = dma.hbm_to_vmem [thread:$0]  %s40, 8192, %s42, [#allocation10], 512, 512, 32
    $region21: #{lstm_model_forward.1} parent=1 // pred_fallthru
      _
    // Predicated region
    $region22: #{lstm_model_forward.1} parent=1 // pred_check
      _
    $region23: #{lstm_model_forward.1} parent=1 // pred_check_branch
      %49 = sbr.rel (0) target = $region25
    $region24: #{lstm_model_forward.1} parent=1 // pred_region
      %51 = vsyncadd [#allocation10], 0
      %s52 = sshll.u32 %s5, 4
      %s53 = int_to_ptr.hbm [resolvable:$true] %s52
      %s54 = sshll.u32 [#allocation11], 4
      %s55 = int_to_ptr.vmem [resolvable:$true] %s54
      %60 = dma.hbm_to_vmem [thread:$0]  %s53, 8192, %s55, [#allocation10], 512, 512, 32
    $region25: #{lstm_model_forward.1} parent=1 // pred_fallthru
      _
    // Predicated region
    $region26: #{lstm_model_forward.1} parent=1 // pred_check
      _
    $region27: #{lstm_model_forward.1} parent=1 // pred_check_branch
      %62 = sbr.rel (0) target = $region29
    $region28: #{lstm_model_forward.1} parent=1 // pred_region
      _
    $region29: #{lstm_model_forward.1} parent=1 // pred_fallthru
      _
    // Predicated region
    $region30: #{lstm_model_forward.1} parent=1 // pred_check
      _
    $region31: #{lstm_model_forward.1} parent=1 // pred_check_branch
      %64 = sbr.rel (0) target = $region33
    $region32: #{lstm_model_forward.1} parent=1 // pred_region
      _
    $region33: #{lstm_model_forward.1} parent=1 // pred_fallthru
      _
    // Predicated region
    $region34: #{lstm_model_forward.1} parent=1 // pred_check
      _
    $region35: #{lstm_model_forward.1} parent=1 // pred_check_branch
      %66 = sbr.rel (0) target = $region37
    $region36: #{lstm_model_forward.1} parent=1 // pred_region
      _
    $region37: #{lstm_model_forward.1} parent=1 // pred_fallthru
      _
    // Predicated region
    $region38: #{lstm_model_forward.1} parent=1 // pred_check
      _
    $region39: #{lstm_model_forward.1} parent=1 // pred_check_branch
      %68 = sbr.rel (0) target = $region41
    $region40: #{lstm_model_forward.1} parent=1 // pred_region
      %70 = dma.done [#allocation8], 8192
    $region41: #{lstm_model_forward.1} parent=1 // pred_fallthru
      _
    // Predicated region
    $region42: #{lstm_model_forward.1} parent=1 // pred_check
      _
    $region43: #{lstm_model_forward.1} parent=1 // pred_check_branch
      %72 = sbr.rel (0) target = $region45
    $region44: #{lstm_model_forward.1} parent=1 // pred_region
      %74 = dma.done [#allocation10], 8192
    $region45: #{lstm_model_forward.1} parent=1 // pred_fallthru
      _
    // Predicated region
    $region46: #{lstm_model_forward.1} parent=1 // pred_check
      _
    $region47: #{lstm_model_forward.1} parent=1 // pred_check_branch
      %76 = sbr.rel (0) target = $region49
    $region48: #{lstm_model_forward.1} parent=1 // pred_region
      %78 = dma.done [#allocation10], 8192
    $region49: #{lstm_model_forward.1} parent=1 // pred_fallthru
      _
    %v79 = vld [vmem:[%s0] sm:$0xff]
    %v80 = vld [vmem:[%s0 + $0x8] sm:$0xff]
    %v81 = vld [vmem:[%s0 + $0x10] sm:$0xff]
    %v82 = vld [vmem:[%s0 + $0x18] sm:$0xff]
    %v83 = vld [vmem:[%s0 + $0x20] sm:$0xff]
    %v84 = vld [vmem:[%s0 + $0x28] sm:$0xff]
    %v85 = vld [vmem:[%s0 + $0x30] sm:$0xff]
    %v86 = vld [vmem:[%s0 + $0x38] sm:$0xff]
    %v87 = vld [vmem:[%s1] sm:$0xff]
    %v88 = vld [vmem:[%s1 + $0x8] sm:$0xff]
    %v89 = vld [vmem:[%s1 + $0x10] sm:$0xff]
    %v90 = vld [vmem:[%s1 + $0x18] sm:$0xff]
    %v91 = vld [vmem:[%s1 + $0x20] sm:$0xff]
    %v92 = vld [vmem:[%s1 + $0x28] sm:$0xff]
    %v93 = vld [vmem:[%s1 + $0x30] sm:$0xff]
    %v94 = vld [vmem:[%s1 + $0x38] sm:$0xff]
    %v95 = vld [vmem:[%s3] sm:$0xf]
    %v97 = vperm.slane %v95, 0
    %v98 = vperm.slane %v95, 1
    %v99 = vperm.slane %v95, 2
    %v100 = vperm.slane %v95, 3
    %vm105 = vcmask 130048
    %v107 = vsel %vm105, %v79, 0
    %v110 = vsel %vm105, %v80, 0
    %v113 = vsel %vm105, %v81, 0
    %v116 = vsel %vm105, %v82, 0
    %v119 = vsel %vm105, %v83, 0
    %v122 = vsel %vm105, %v84, 0
    %v125 = vsel %vm105, %v85, 0
    %v128 = vsel %vm105, %v86, 0
    %130 = vmatpush.msra.mxu0 0.0
    %131 = vmatpush.msra.mxu0 0.0
    %132 = vmatpush.msra.mxu0 0.0
    %133 = vmatpush.msra.mxu0 0.0
    %134 = vmatpush.msra.mxu0 0.0
    %135 = vmatpush.msra.mxu0 0.0
    %136 = vmatpush.msra.mxu0 0.0
    %137 = vmatpush.msra.mxu0 0.0
    %138 = vmatpush.msra.mxu0 0.0
    %139 = vmatpush.msra.mxu0 0.0
    %140 = vmatpush.msra.mxu0 0.0
    %141 = vmatpush.msra.mxu0 0.0
    %142 = vmatpush.msra.mxu0 0.0
    %143 = vmatpush.msra.mxu0 0.0
    %144 = vmatpush.msra.mxu0 %v91
    %145 = vmatpush.msra.mxu0 %v87
    %146 = vmatmul.f32.gmra.mxu0 %v107
    %v147 = vpop.f32.mrf.mxu0
    %v148 = vadd.f32 %v97, %v147
    %149 = vmatmul.f32.gmra.mxu0 %v110
    %v150 = vpop.f32.mrf.mxu0
    %v151 = vadd.f32 %v97, %v150
    %152 = vmatmul.f32.gmra.mxu0 %v113
    %v153 = vpop.f32.mrf.mxu0
    %v154 = vadd.f32 %v97, %v153
    %155 = vmatmul.f32.gmra.mxu0 %v116
    %v156 = vpop.f32.mrf.mxu0
    %v157 = vadd.f32 %v97, %v156
    %158 = vmatmul.f32.gmra.mxu0 %v119
    %v159 = vpop.f32.mrf.mxu0
    %v160 = vadd.f32 %v97, %v159
    %161 = vmatmul.f32.gmra.mxu0 %v122
    %v162 = vpop.f32.mrf.mxu0
    %v163 = vadd.f32 %v97, %v162
    %164 = vmatmul.f32.gmra.mxu0 %v125
    %v165 = vpop.f32.mrf.mxu0
    %v166 = vadd.f32 %v97, %v165
    %167 = vmatmul.f32.gmra.mxu0 %v128
    %v168 = vpop.f32.mrf.mxu0
    %v169 = vadd.f32 %v97, %v168
    %170 = vdwg.mxu0
    %171 = vmatpush.msra.mxu0 0.0
    %172 = vmatpush.msra.mxu0 0.0
    %173 = vmatpush.msra.mxu0 0.0
    %174 = vmatpush.msra.mxu0 0.0
    %175 = vmatpush.msra.mxu0 0.0
    %176 = vmatpush.msra.mxu0 0.0
    %177 = vmatpush.msra.mxu0 0.0
    %178 = vmatpush.msra.mxu0 0.0
    %179 = vmatpush.msra.mxu0 0.0
    %180 = vmatpush.msra.mxu0 0.0
    %181 = vmatpush.msra.mxu0 0.0
    %182 = vmatpush.msra.mxu0 0.0
    %183 = vmatpush.msra.mxu0 0.0
    %184 = vmatpush.msra.mxu0 0.0
    %185 = vmatpush.msra.mxu0 %v92
    %186 = vmatpush.msra.mxu0 %v88
    %187 = vmatmul.f32.gmra.mxu0 %v107
    %v188 = vpop.f32.mrf.mxu0
    %v189 = vadd.f32 %v98, %v188
    %190 = vmatmul.f32.gmra.mxu0 %v110
    %v191 = vpop.f32.mrf.mxu0
    %v192 = vadd.f32 %v98, %v191
    %193 = vmatmul.f32.gmra.mxu0 %v113
    %v194 = vpop.f32.mrf.mxu0
    %v195 = vadd.f32 %v98, %v194
    %196 = vmatmul.f32.gmra.mxu0 %v116
    %v197 = vpop.f32.mrf.mxu0
    %v198 = vadd.f32 %v98, %v197
    %199 = vmatmul.f32.gmra.mxu0 %v119
    %v200 = vpop.f32.mrf.mxu0
    %v201 = vadd.f32 %v98, %v200
    %202 = vmatmul.f32.gmra.mxu0 %v122
    %v203 = vpop.f32.mrf.mxu0
    %v204 = vadd.f32 %v98, %v203
    %205 = vmatmul.f32.gmra.mxu0 %v125
    %v206 = vpop.f32.mrf.mxu0
    %v207 = vadd.f32 %v98, %v206
    %208 = vmatmul.f32.gmra.mxu0 %v128
    %v209 = vpop.f32.mrf.mxu0
    %v210 = vadd.f32 %v98, %v209
    %211 = vdwg.mxu0
    %212 = vmatpush.msra.mxu0 0.0
    %213 = vmatpush.msra.mxu0 0.0
    %214 = vmatpush.msra.mxu0 0.0
    %215 = vmatpush.msra.mxu0 0.0
    %216 = vmatpush.msra.mxu0 0.0
    %217 = vmatpush.msra.mxu0 0.0
    %218 = vmatpush.msra.mxu0 0.0
    %219 = vmatpush.msra.mxu0 0.0
    %220 = vmatpush.msra.mxu0 0.0
    %221 = vmatpush.msra.mxu0 0.0
    %222 = vmatpush.msra.mxu0 0.0
    %223 = vmatpush.msra.mxu0 0.0
    %224 = vmatpush.msra.mxu0 0.0
    %225 = vmatpush.msra.mxu0 0.0
    %226 = vmatpush.msra.mxu0 %v93
    %227 = vmatpush.msra.mxu0 %v89
    %228 = vmatmul.f32.gmra.mxu0 %v107
    %v229 = vpop.f32.mrf.mxu0
    %v230 = vadd.f32 %v99, %v229
    %231 = vmatmul.f32.gmra.mxu0 %v110
    %v232 = vpop.f32.mrf.mxu0
    %v233 = vadd.f32 %v99, %v232
    %234 = vmatmul.f32.gmra.mxu0 %v113
    %v235 = vpop.f32.mrf.mxu0
    %v236 = vadd.f32 %v99, %v235
    %237 = vmatmul.f32.gmra.mxu0 %v116
    %v238 = vpop.f32.mrf.mxu0
    %v239 = vadd.f32 %v99, %v238
    %240 = vmatmul.f32.gmra.mxu0 %v119
    %v241 = vpop.f32.mrf.mxu0
    %v242 = vadd.f32 %v99, %v241
    %243 = vmatmul.f32.gmra.mxu0 %v122
    %v244 = vpop.f32.mrf.mxu0
    %v245 = vadd.f32 %v99, %v244
    %246 = vmatmul.f32.gmra.mxu0 %v125
    %v247 = vpop.f32.mrf.mxu0
    %v248 = vadd.f32 %v99, %v247
    %249 = vmatmul.f32.gmra.mxu0 %v128
    %v250 = vpop.f32.mrf.mxu0
    %v251 = vadd.f32 %v99, %v250
    %252 = vdwg.mxu0
    %253 = vmatpush.msra.mxu0 0.0
    %254 = vmatpush.msra.mxu0 0.0
    %255 = vmatpush.msra.mxu0 0.0
    %256 = vmatpush.msra.mxu0 0.0
    %257 = vmatpush.msra.mxu0 0.0
    %258 = vmatpush.msra.mxu0 0.0
    %259 = vmatpush.msra.mxu0 0.0
    %260 = vmatpush.msra.mxu0 0.0
    %261 = vmatpush.msra.mxu0 0.0
    %262 = vmatpush.msra.mxu0 0.0
    %263 = vmatpush.msra.mxu0 0.0
    %264 = vmatpush.msra.mxu0 0.0
    %265 = vmatpush.msra.mxu0 0.0
    %266 = vmatpush.msra.mxu0 0.0
    %267 = vmatpush.msra.mxu0 %v94
    %268 = vmatpush.msra.mxu0 %v90
    %269 = vmatmul.f32.gmra.mxu0 %v107
    %v270 = vpop.f32.mrf.mxu0
    %v271 = vadd.f32 %v100, %v270
    %272 = vmatmul.f32.gmra.mxu0 %v110
    %v273 = vpop.f32.mrf.mxu0
    %v274 = vadd.f32 %v100, %v273
    %275 = vmatmul.f32.gmra.mxu0 %v113
    %v276 = vpop.f32.mrf.mxu0
    %v277 = vadd.f32 %v100, %v276
    %278 = vmatmul.f32.gmra.mxu0 %v116
    %v279 = vpop.f32.mrf.mxu0
    %v280 = vadd.f32 %v100, %v279
    %281 = vmatmul.f32.gmra.mxu0 %v119
    %v282 = vpop.f32.mrf.mxu0
    %v283 = vadd.f32 %v100, %v282
    %284 = vmatmul.f32.gmra.mxu0 %v122
    %v285 = vpop.f32.mrf.mxu0
    %v286 = vadd.f32 %v100, %v285
    %287 = vmatmul.f32.gmra.mxu0 %v125
    %v288 = vpop.f32.mrf.mxu0
    %v289 = vadd.f32 %v100, %v288
    %290 = vmatmul.f32.gmra.mxu0 %v128
    %v291 = vpop.f32.mrf.mxu0
    %v292 = vadd.f32 %v100, %v291
    %293 = vdwg.mxu0
    %294 = vst [vmem:[#allocation2] sm:$0xff] %v148
    %295 = vst [vmem:[#allocation2 + $0x8] sm:$0xff] %v189
    %296 = vst [vmem:[#allocation2 + $0x10] sm:$0xff] %v230
    %297 = vst [vmem:[#allocation2 + $0x18] sm:$0xff] %v271
    %298 = vst [vmem:[#allocation2 + $0x20] sm:$0xff] %v151
    %299 = vst [vmem:[#allocation2 + $0x28] sm:$0xff] %v192
    %300 = vst [vmem:[#allocation2 + $0x30] sm:$0xff] %v233
    %301 = vst [vmem:[#allocation2 + $0x38] sm:$0xff] %v274
    %302 = vst [vmem:[#allocation2 + $0x40] sm:$0xff] %v154
    %303 = vst [vmem:[#allocation2 + $0x48] sm:$0xff] %v195
    %304 = vst [vmem:[#allocation2 + $0x50] sm:$0xff] %v236
    %305 = vst [vmem:[#allocation2 + $0x58] sm:$0xff] %v277
    %306 = vst [vmem:[#allocation2 + $0x60] sm:$0xff] %v157
    %307 = vst [vmem:[#allocation2 + $0x68] sm:$0xff] %v198
    %308 = vst [vmem:[#allocation2 + $0x70] sm:$0xff] %v239
    %309 = vst [vmem:[#allocation2 + $0x78] sm:$0xff] %v280
    %310 = vst [vmem:[#allocation2 + $0x80] sm:$0xff] %v160
    %311 = vst [vmem:[#allocation2 + $0x88] sm:$0xff] %v201
    %312 = vst [vmem:[#allocation2 + $0x90] sm:$0xff] %v242
    %313 = vst [vmem:[#allocation2 + $0x98] sm:$0xff] %v283
    %314 = vst [vmem:[#allocation2 + $0xa0] sm:$0xff] %v163
    %315 = vst [vmem:[#allocation2 + $0xa8] sm:$0xff] %v204
    %316 = vst [vmem:[#allocation2 + $0xb0] sm:$0xff] %v245
    %317 = vst [vmem:[#allocation2 + $0xb8] sm:$0xff] %v286
    %318 = vst [vmem:[#allocation2 + $0xc0] sm:$0xff] %v166
    %319 = vst [vmem:[#allocation2 + $0xc8] sm:$0xff] %v207
    %320 = vst [vmem:[#allocation2 + $0xd0] sm:$0xff] %v248
    %321 = vst [vmem:[#allocation2 + $0xd8] sm:$0xff] %v289
    %322 = vst [vmem:[#allocation2 + $0xe0] sm:$0xff] %v169
    %323 = vst [vmem:[#allocation2 + $0xe8] sm:$0xff] %v210
    %324 = vst [vmem:[#allocation2 + $0xf0] sm:$0xff] %v251
    %325 = vst [vmem:[#allocation2 + $0xf8] sm:$0xff] %v292
    %326 = vst [vmem:[#allocation5] sm:$0xff] 0.0
    %327 = vst [vmem:[#allocation6] sm:$0xff] 0.0
    %v328 = vld [vmem:[#allocation7] sm:$0xff]
    %v329 = vld [vmem:[#allocation7 + $0x8] sm:$0xff]
    %v330 = vld [vmem:[#allocation7 + $0x10] sm:$0xff]
    %v331 = vld [vmem:[#allocation7 + $0x18] sm:$0xff]
    %v332 = vld [vmem:[#allocation7 + $0x20] sm:$0xff]
    %v333 = vld [vmem:[#allocation7 + $0x28] sm:$0xff]
    %v334 = vld [vmem:[#allocation7 + $0x30] sm:$0xff]
    %v335 = vld [vmem:[#allocation7 + $0x38] sm:$0xff]
    %v336 = vld [vmem:[#allocation7 + $0x40] sm:$0xff]
    %v337 = vld [vmem:[#allocation7 + $0x48] sm:$0xff]
    %v338 = vld [vmem:[#allocation7 + $0x50] sm:$0xff]
    %v339 = vld [vmem:[#allocation7 + $0x58] sm:$0xff]
    %v340 = vld [vmem:[#allocation7 + $0x60] sm:$0xff]
    %v341 = vld [vmem:[#allocation7 + $0x68] sm:$0xff]
    %v342 = vld [vmem:[#allocation7 + $0x70] sm:$0xff]
    %v343 = vld [vmem:[#allocation7 + $0x78] sm:$0xff]
    %v344 = vld [vmem:[#allocation7 + $0x80] sm:$0xff]
    %v345 = vld [vmem:[#allocation7 + $0x88] sm:$0xff]
    %v346 = vld [vmem:[#allocation7 + $0x90] sm:$0xff]
    %v347 = vld [vmem:[#allocation7 + $0x98] sm:$0xff]
    %v348 = vld [vmem:[#allocation7 + $0xa0] sm:$0xff]
    %v349 = vld [vmem:[#allocation7 + $0xa8] sm:$0xff]
    %v350 = vld [vmem:[#allocation7 + $0xb0] sm:$0xff]
    %v351 = vld [vmem:[#allocation7 + $0xb8] sm:$0xff]
    %v352 = vld [vmem:[#allocation7 + $0xc0] sm:$0xff]
    %v353 = vld [vmem:[#allocation7 + $0xc8] sm:$0xff]
    %v354 = vld [vmem:[#allocation7 + $0xd0] sm:$0xff]
    %v355 = vld [vmem:[#allocation7 + $0xd8] sm:$0xff]
    %v356 = vld [vmem:[#allocation7 + $0xe0] sm:$0xff]
    %v357 = vld [vmem:[#allocation7 + $0xe8] sm:$0xff]
    %v358 = vld [vmem:[#allocation7 + $0xf0] sm:$0xff]
    %v359 = vld [vmem:[#allocation7 + $0xf8] sm:$0xff]
    %v360 = vld [vmem:[#allocation7 + $0x100] sm:$0xff]
    %v361 = vld [vmem:[#allocation7 + $0x108] sm:$0xff]
    %v362 = vld [vmem:[#allocation7 + $0x110] sm:$0xff]
    %v363 = vld [vmem:[#allocation7 + $0x118] sm:$0xff]
    %v364 = vld [vmem:[#allocation7 + $0x120] sm:$0xff]
    %v365 = vld [vmem:[#allocation7 + $0x128] sm:$0xff]
    %v366 = vld [vmem:[#allocation7 + $0x130] sm:$0xff]
    %v367 = vld [vmem:[#allocation7 + $0x138] sm:$0xff]
    %v368 = vld [vmem:[#allocation7 + $0x140] sm:$0xff]
    %v369 = vld [vmem:[#allocation7 + $0x148] sm:$0xff]
    %v370 = vld [vmem:[#allocation7 + $0x150] sm:$0xff]
    %v371 = vld [vmem:[#allocation7 + $0x158] sm:$0xff]
    %v372 = vld [vmem:[#allocation7 + $0x160] sm:$0xff]
    %v373 = vld [vmem:[#allocation7 + $0x168] sm:$0xff]
    %v374 = vld [vmem:[#allocation7 + $0x170] sm:$0xff]
    %v375 = vld [vmem:[#allocation7 + $0x178] sm:$0xff]
    %v376 = vld [vmem:[#allocation7 + $0x180] sm:$0xff]
    %v377 = vld [vmem:[#allocation7 + $0x188] sm:$0xff]
    %v378 = vld [vmem:[#allocation7 + $0x190] sm:$0xff]
    %v379 = vld [vmem:[#allocation7 + $0x198] sm:$0xff]
    %v380 = vld [vmem:[#allocation7 + $0x1a0] sm:$0xff]
    %v381 = vld [vmem:[#allocation7 + $0x1a8] sm:$0xff]
    %v382 = vld [vmem:[#allocation7 + $0x1b0] sm:$0xff]
    %v383 = vld [vmem:[#allocation7 + $0x1b8] sm:$0xff]
    %v384 = vld [vmem:[#allocation7 + $0x1c0] sm:$0xff]
    %v385 = vld [vmem:[#allocation7 + $0x1c8] sm:$0xff]
    %v386 = vld [vmem:[#allocation7 + $0x1d0] sm:$0xff]
    %v387 = vld [vmem:[#allocation7 + $0x1d8] sm:$0xff]
    %v388 = vld [vmem:[#allocation7 + $0x1e0] sm:$0xff]
    %v389 = vld [vmem:[#allocation7 + $0x1e8] sm:$0xff]
    %v390 = vld [vmem:[#allocation7 + $0x1f0] sm:$0xff]
    %v391 = vld [vmem:[#allocation7 + $0x1f8] sm:$0xff]
    %v392 = vld [vmem:[#allocation2] sm:$0xff]
    %v393 = vld [vmem:[#allocation2 + $0x8] sm:$0xff]
    %v394 = vld [vmem:[#allocation2 + $0x10] sm:$0xff]
    %v395 = vld [vmem:[#allocation2 + $0x18] sm:$0xff]
    %v396 = vld [vmem:[#allocation5] sm:$0xff]
    %397 = vmatpush.msra.mxu0 %v388
    %398 = vmatpush.msra.mxu0 %v384
    %399 = vmatpush.msra.mxu0 %v380
    %400 = vmatpush.msra.mxu0 %v376
    %401 = vmatpush.msra.mxu0 %v372
    %402 = vmatpush.msra.mxu0 %v368
    %403 = vmatpush.msra.mxu0 %v364
    %404 = vmatpush.msra.mxu0 %v360
    %405 = vmatpush.msra.mxu0 %v356
    %406 = vmatpush.msra.mxu0 %v352
    %407 = vmatpush.msra.mxu0 %v348
    %408 = vmatpush.msra.mxu0 %v344
    %409 = vmatpush.msra.mxu0 %v340
    %410 = vmatpush.msra.mxu0 %v336
    %411 = vmatpush.msra.mxu0 %v332
    %412 = vmatpush.msra.mxu0 %v328
    %413 = vmatmul.f32.gmra.mxu0 %v396
    %v414 = vpop.f32.mrf.mxu0
    %v415 = vadd.f32 0.0, %v414
    %416 = vdwg.mxu0
    %417 = vmatpush.msra.mxu0 %v389
    %418 = vmatpush.msra.mxu0 %v385
    %419 = vmatpush.msra.mxu0 %v381
    %420 = vmatpush.msra.mxu0 %v377
    %421 = vmatpush.msra.mxu0 %v373
    %422 = vmatpush.msra.mxu0 %v369
    %423 = vmatpush.msra.mxu0 %v365
    %424 = vmatpush.msra.mxu0 %v361
    %425 = vmatpush.msra.mxu0 %v357
    %426 = vmatpush.msra.mxu0 %v353
    %427 = vmatpush.msra.mxu0 %v349
    %428 = vmatpush.msra.mxu0 %v345
    %429 = vmatpush.msra.mxu0 %v341
    %430 = vmatpush.msra.mxu0 %v337
    %431 = vmatpush.msra.mxu0 %v333
    %432 = vmatpush.msra.mxu0 %v329
    %433 = vmatmul.f32.gmra.mxu0 %v396
    %v434 = vpop.f32.mrf.mxu0
    %v435 = vadd.f32 0.0, %v434
    %436 = vdwg.mxu0
    %437 = vmatpush.msra.mxu0 %v390
    %438 = vmatpush.msra.mxu0 %v386
    %439 = vmatpush.msra.mxu0 %v382
    %440 = vmatpush.msra.mxu0 %v378
    %441 = vmatpush.msra.mxu0 %v374
    %442 = vmatpush.msra.mxu0 %v370
    %443 = vmatpush.msra.mxu0 %v366
    %444 = vmatpush.msra.mxu0 %v362
    %445 = vmatpush.msra.mxu0 %v358
    %446 = vmatpush.msra.mxu0 %v354
    %447 = vmatpush.msra.mxu0 %v350
    %448 = vmatpush.msra.mxu0 %v346
    %449 = vmatpush.msra.mxu0 %v342
    %450 = vmatpush.msra.mxu0 %v338
    %451 = vmatpush.msra.mxu0 %v334
    %452 = vmatpush.msra.mxu0 %v330
    %453 = vmatmul.f32.gmra.mxu0 %v396
    %v454 = vpop.f32.mrf.mxu0
    %v455 = vadd.f32 0.0, %v454
    %456 = vdwg.mxu0
    %457 = vmatpush.msra.mxu0 %v391
    %458 = vmatpush.msra.mxu0 %v387
    %459 = vmatpush.msra.mxu0 %v383
    %460 = vmatpush.msra.mxu0 %v379
    %461 = vmatpush.msra.mxu0 %v375
    %462 = vmatpush.msra.mxu0 %v371
    %463 = vmatpush.msra.mxu0 %v367
    %464 = vmatpush.msra.mxu0 %v363
    %465 = vmatpush.msra.mxu0 %v359
    %466 = vmatpush.msra.mxu0 %v355
    %467 = vmatpush.msra.mxu0 %v351
    %468 = vmatpush.msra.mxu0 %v347
    %469 = vmatpush.msra.mxu0 %v343
    %470 = vmatpush.msra.mxu0 %v339
    %471 = vmatpush.msra.mxu0 %v335
    %472 = vmatpush.msra.mxu0 %v331
    %473 = vmatmul.f32.gmra.mxu0 %v396
    %v474 = vpop.f32.mrf.mxu0
    %v475 = vadd.f32 0.0, %v474
    %476 = vdwg.mxu0
    %v477 = vadd.f32 %v392, %v415
    %v478 = vadd.f32 %v393, %v435
    %v479 = vadd.f32 %v394, %v455
    %v480 = vadd.f32 %v395, %v475
    %v481 = vxor.u32 %v477, 2147483648
    %v482 = vmul.f32 %v481, 1.442695
    %v483 = vpow.pop %v482
    %v484 = vadd.f32 %v483, 1.0
    %v485 = vrcp.pop %v484
    %v486 = vmul.f32 %v484, %v485
    %v487 = vsub.f32 1.0, %v486
    %v488 = vmul.f32 %v485, %v487
    %v489 = vadd.f32 %v485, %v488
    %vm490 = vweird.f32 %v484
    %vm491 = vweird.f32 %v485
    %vm492 = vmor %vm490, %vm491
    %v493 = vsel %vm492, %v485, %v489
    %v494 = vand.u32 2147483647, %v484
    %vm495 = vcmp.eq.f32.partialorder %v494, 8.507059e+37
    %v496 = vand.u32 %v484, 2147483648
    %v497 = vor.u32 1.1754944e-38, %v496
    %v498 = vsel %vm495, %v497, %v493
    %v499 = vmul.f32 1.0, %v498
    %v500 = vxor.u32 %v478, 2147483648
    %v501 = vmul.f32 %v500, 1.442695
    %v502 = vpow.pop %v501
    %v503 = vadd.f32 %v502, 1.0
    %v504 = vrcp.pop %v503
    %v505 = vmul.f32 %v503, %v504
    %v506 = vsub.f32 1.0, %v505
    %v507 = vmul.f32 %v504, %v506
    %v508 = vadd.f32 %v504, %v507
    %vm509 = vweird.f32 %v503
    %vm510 = vweird.f32 %v504
    %vm511 = vmor %vm509, %vm510
    %v512 = vsel %vm511, %v504, %v508
    %v513 = vand.u32 2147483647, %v503
    %vm514 = vcmp.eq.f32.partialorder %v513, 8.507059e+37
    %v515 = vand.u32 %v503, 2147483648
    %v516 = vor.u32 1.1754944e-38, %v515
    %v517 = vsel %vm514, %v516, %v512
    %v518 = vmul.f32 1.0, %v517
    %v519 = vtanh.pop %v479
    %v520 = vxor.u32 %v480, 2147483648
    %v521 = vmul.f32 %v520, 1.442695
    %v522 = vpow.pop %v521
    %v523 = vadd.f32 %v522, 1.0
    %v524 = vrcp.pop %v523
    %v525 = vmul.f32 %v523, %v524
    %v526 = vsub.f32 1.0, %v525
    %v527 = vmul.f32 %v524, %v526
    %v528 = vadd.f32 %v524, %v527
    %vm529 = vweird.f32 %v523
    %vm530 = vweird.f32 %v524
    %vm531 = vmor %vm529, %vm530
    %v532 = vsel %vm531, %v524, %v528
    %v533 = vand.u32 2147483647, %v523
    %vm534 = vcmp.eq.f32.partialorder %v533, 8.507059e+37
    %v535 = vand.u32 %v523, 2147483648
    %v536 = vor.u32 1.1754944e-38, %v535
    %v537 = vsel %vm534, %v536, %v532
    %v538 = vmul.f32 1.0, %v537
    %v539 = vld [vmem:[#allocation6] sm:$0xff]
    %v540 = vmul.f32 %v518, %v539
    %v541 = vmul.f32 %v499, %v519
    %v542 = vadd.f32 %v540, %v541
    %v543 = vtanh.pop %v542
    %v544 = vmul.f32 %v538, %v543
    %545 = vst [vmem:[#allocation6] sm:$0xff] %v542
    %546 = vst [vmem:[#allocation5] sm:$0xff] %v544
    %547 = vst [vmem:[#allocation3] sm:$0xff] %v544
    %v548 = vld [vmem:[#allocation2 + $0x20] sm:$0xff]
    %v549 = vld [vmem:[#allocation2 + $0x28] sm:$0xff]
    %v550 = vld [vmem:[#allocation2 + $0x30] sm:$0xff]
    %v551 = vld [vmem:[#allocation2 + $0x38] sm:$0xff]
    %v552 = vld [vmem:[#allocation5] sm:$0xff]
    %553 = vmatpush.msra.mxu0 %v388
    %554 = vmatpush.msra.mxu0 %v384
    %555 = vmatpush.msra.mxu0 %v380
    %556 = vmatpush.msra.mxu0 %v376
    %557 = vmatpush.msra.mxu0 %v372
    %558 = vmatpush.msra.mxu0 %v368
    %559 = vmatpush.msra.mxu0 %v364
    %560 = vmatpush.msra.mxu0 %v360
    %561 = vmatpush.msra.mxu0 %v356
    %562 = vmatpush.msra.mxu0 %v352
    %563 = vmatpush.msra.mxu0 %v348
    %564 = vmatpush.msra.mxu0 %v344
    %565 = vmatpush.msra.mxu0 %v340
    %566 = vmatpush.msra.mxu0 %v336
    %567 = vmatpush.msra.mxu0 %v332
    %568 = vmatpush.msra.mxu0 %v328
    %569 = vmatmul.f32.gmra.mxu0 %v552
    %v570 = vpop.f32.mrf.mxu0
    %v571 = vadd.f32 0.0, %v570
    %572 = vdwg.mxu0
    %573 = vmatpush.msra.mxu0 %v389
    %574 = vmatpush.msra.mxu0 %v385
    %575 = vmatpush.msra.mxu0 %v381
    %576 = vmatpush.msra.mxu0 %v377
    %577 = vmatpush.msra.mxu0 %v373
    %578 = vmatpush.msra.mxu0 %v369
    %579 = vmatpush.msra.mxu0 %v365
    %580 = vmatpush.msra.mxu0 %v361
    %581 = vmatpush.msra.mxu0 %v357
    %582 = vmatpush.msra.mxu0 %v353
    %583 = vmatpush.msra.mxu0 %v349
    %584 = vmatpush.msra.mxu0 %v345
    %585 = vmatpush.msra.mxu0 %v341
    %586 = vmatpush.msra.mxu0 %v337
    %587 = vmatpush.msra.mxu0 %v333
    %588 = vmatpush.msra.mxu0 %v329
    %589 = vmatmul.f32.gmra.mxu0 %v552
    %v590 = vpop.f32.mrf.mxu0
    %v591 = vadd.f32 0.0, %v590
    %592 = vdwg.mxu0
    %593 = vmatpush.msra.mxu0 %v390
    %594 = vmatpush.msra.mxu0 %v386
    %595 = vmatpush.msra.mxu0 %v382
    %596 = vmatpush.msra.mxu0 %v378
    %597 = vmatpush.msra.mxu0 %v374
    %598 = vmatpush.msra.mxu0 %v370
    %599 = vmatpush.msra.mxu0 %v366
    %600 = vmatpush.msra.mxu0 %v362
    %601 = vmatpush.msra.mxu0 %v358
    %602 = vmatpush.msra.mxu0 %v354
    %603 = vmatpush.msra.mxu0 %v350
    %604 = vmatpush.msra.mxu0 %v346
    %605 = vmatpush.msra.mxu0 %v342
    %606 = vmatpush.msra.mxu0 %v338
    %607 = vmatpush.msra.mxu0 %v334
    %608 = vmatpush.msra.mxu0 %v330
    %609 = vmatmul.f32.gmra.mxu0 %v552
    %v610 = vpop.f32.mrf.mxu0
    %v611 = vadd.f32 0.0, %v610
    %612 = vdwg.mxu0
    %613 = vmatpush.msra.mxu0 %v391
    %614 = vmatpush.msra.mxu0 %v387
    %615 = vmatpush.msra.mxu0 %v383
    %616 = vmatpush.msra.mxu0 %v379
    %617 = vmatpush.msra.mxu0 %v375
    %618 = vmatpush.msra.mxu0 %v371
    %619 = vmatpush.msra.mxu0 %v367
    %620 = vmatpush.msra.mxu0 %v363
    %621 = vmatpush.msra.mxu0 %v359
    %622 = vmatpush.msra.mxu0 %v355
    %623 = vmatpush.msra.mxu0 %v351
    %624 = vmatpush.msra.mxu0 %v347
    %625 = vmatpush.msra.mxu0 %v343
    %626 = vmatpush.msra.mxu0 %v339
    %627 = vmatpush.msra.mxu0 %v335
    %628 = vmatpush.msra.mxu0 %v331
    %629 = vmatmul.f32.gmra.mxu0 %v552
    %v630 = vpop.f32.mrf.mxu0
    %v631 = vadd.f32 0.0, %v630
    %632 = vdwg.mxu0
    %v633 = vadd.f32 %v548, %v571
    %v634 = vadd.f32 %v549, %v591
    %v635 = vadd.f32 %v550, %v611
    %v636 = vadd.f32 %v551, %v631
    %v637 = vxor.u32 %v633, 2147483648
    %v638 = vmul.f32 %v637, 1.442695
    %v639 = vpow.pop %v638
    %v640 = vadd.f32 %v639, 1.0
    %v641 = vrcp.pop %v640
    %v642 = vmul.f32 %v640, %v641
    %v643 = vsub.f32 1.0, %v642
    %v644 = vmul.f32 %v641, %v643
    %v645 = vadd.f32 %v641, %v644
    %vm646 = vweird.f32 %v640
    %vm647 = vweird.f32 %v641
    %vm648 = vmor %vm646, %vm647
    %v649 = vsel %vm648, %v641, %v645
    %v650 = vand.u32 2147483647, %v640
    %vm651 = vcmp.eq.f32.partialorder %v650, 8.507059e+37
    %v652 = vand.u32 %v640, 2147483648
    %v653 = vor.u32 1.1754944e-38, %v652
    %v654 = vsel %vm651, %v653, %v649
    %v655 = vmul.f32 1.0, %v654
    %v656 = vxor.u32 %v634, 2147483648
    %v657 = vmul.f32 %v656, 1.442695
    %v658 = vpow.pop %v657
    %v659 = vadd.f32 %v658, 1.0
    %v660 = vrcp.pop %v659
    %v661 = vmul.f32 %v659, %v660
    %v662 = vsub.f32 1.0, %v661
    %v663 = vmul.f32 %v660, %v662
    %v664 = vadd.f32 %v660, %v663
    %vm665 = vweird.f32 %v659
    %vm666 = vweird.f32 %v660
    %vm667 = vmor %vm665, %vm666
    %v668 = vsel %vm667, %v660, %v664
    %v669 = vand.u32 2147483647, %v659
    %vm670 = vcmp.eq.f32.partialorder %v669, 8.507059e+37
    %v671 = vand.u32 %v659, 2147483648
    %v672 = vor.u32 1.1754944e-38, %v671
    %v673 = vsel %vm670, %v672, %v668
    %v674 = vmul.f32 1.0, %v673
    %v675 = vtanh.pop %v635
    %v676 = vxor.u32 %v636, 2147483648
    %v677 = vmul.f32 %v676, 1.442695
    %v678 = vpow.pop %v677
    %v679 = vadd.f32 %v678, 1.0
    %v680 = vrcp.pop %v679
    %v681 = vmul.f32 %v679, %v680
    %v682 = vsub.f32 1.0, %v681
    %v683 = vmul.f32 %v680, %v682
    %v684 = vadd.f32 %v680, %v683
    %vm685 = vweird.f32 %v679
    %vm686 = vweird.f32 %v680
    %vm687 = vmor %vm685, %vm686
    %v688 = vsel %vm687, %v680, %v684
    %v689 = vand.u32 2147483647, %v679
    %vm690 = vcmp.eq.f32.partialorder %v689, 8.507059e+37
    %v691 = vand.u32 %v679, 2147483648
    %v692 = vor.u32 1.1754944e-38, %v691
    %v693 = vsel %vm690, %v692, %v688
    %v694 = vmul.f32 1.0, %v693
    %v695 = vld [vmem:[#allocation6] sm:$0xff]
    %v696 = vmul.f32 %v674, %v695
    %v697 = vmul.f32 %v655, %v675
    %v698 = vadd.f32 %v696, %v697
    %v699 = vtanh.pop %v698
    %v700 = vmul.f32 %v694, %v699
    %701 = vst [vmem:[#allocation6] sm:$0xff] %v698
    %702 = vst [vmem:[#allocation5] sm:$0xff] %v700
    %703 = vst [vmem:[#allocation3 + $0x8] sm:$0xff] %v700
    %v704 = vld [vmem:[#allocation2 + $0x40] sm:$0xff]
    %v705 = vld [vmem:[#allocation2 + $0x48] sm:$0xff]
    %v706 = vld [vmem:[#allocation2 + $0x50] sm:$0xff]
    %v707 = vld [vmem:[#allocation2 + $0x58] sm:$0xff]
    %v708 = vld [vmem:[#allocation5] sm:$0xff]
    %709 = vmatpush.msra.mxu0 %v388
    %710 = vmatpush.msra.mxu0 %v384
    %711 = vmatpush.msra.mxu0 %v380
    %712 = vmatpush.msra.mxu0 %v376
    %713 = vmatpush.msra.mxu0 %v372
    %714 = vmatpush.msra.mxu0 %v368
    %715 = vmatpush.msra.mxu0 %v364
    %716 = vmatpush.msra.mxu0 %v360
    %717 = vmatpush.msra.mxu0 %v356
    %718 = vmatpush.msra.mxu0 %v352
    %719 = vmatpush.msra.mxu0 %v348
    %720 = vmatpush.msra.mxu0 %v344
    %721 = vmatpush.msra.mxu0 %v340
    %722 = vmatpush.msra.mxu0 %v336
    %723 = vmatpush.msra.mxu0 %v332
    %724 = vmatpush.msra.mxu0 %v328
    %725 = vmatmul.f32.gmra.mxu0 %v708
    %v726 = vpop.f32.mrf.mxu0
    %v727 = vadd.f32 0.0, %v726
    %728 = vdwg.mxu0
    %729 = vmatpush.msra.mxu0 %v389
    %730 = vmatpush.msra.mxu0 %v385
    %731 = vmatpush.msra.mxu0 %v381
    %732 = vmatpush.msra.mxu0 %v377
    %733 = vmatpush.msra.mxu0 %v373
    %734 = vmatpush.msra.mxu0 %v369
    %735 = vmatpush.msra.mxu0 %v365
    %736 = vmatpush.msra.mxu0 %v361
    %737 = vmatpush.msra.mxu0 %v357
    %738 = vmatpush.msra.mxu0 %v353
    %739 = vmatpush.msra.mxu0 %v349
    %740 = vmatpush.msra.mxu0 %v345
    %741 = vmatpush.msra.mxu0 %v341
    %742 = vmatpush.msra.mxu0 %v337
    %743 = vmatpush.msra.mxu0 %v333
    %744 = vmatpush.msra.mxu0 %v329
    %745 = vmatmul.f32.gmra.mxu0 %v708
    %v746 = vpop.f32.mrf.mxu0
    %v747 = vadd.f32 0.0, %v746
    %748 = vdwg.mxu0
    %749 = vmatpush.msra.mxu0 %v390
    %750 = vmatpush.msra.mxu0 %v386
    %751 = vmatpush.msra.mxu0 %v382
    %752 = vmatpush.msra.mxu0 %v378
    %753 = vmatpush.msra.mxu0 %v374
    %754 = vmatpush.msra.mxu0 %v370
    %755 = vmatpush.msra.mxu0 %v366
    %756 = vmatpush.msra.mxu0 %v362
    %757 = vmatpush.msra.mxu0 %v358
    %758 = vmatpush.msra.mxu0 %v354
    %759 = vmatpush.msra.mxu0 %v350
    %760 = vmatpush.msra.mxu0 %v346
    %761 = vmatpush.msra.mxu0 %v342
    %762 = vmatpush.msra.mxu0 %v338
    %763 = vmatpush.msra.mxu0 %v334
    %764 = vmatpush.msra.mxu0 %v330
    %765 = vmatmul.f32.gmra.mxu0 %v708
    %v766 = vpop.f32.mrf.mxu0
    %v767 = vadd.f32 0.0, %v766
    %768 = vdwg.mxu0
    %769 = vmatpush.msra.mxu0 %v391
    %770 = vmatpush.msra.mxu0 %v387
    %771 = vmatpush.msra.mxu0 %v383
    %772 = vmatpush.msra.mxu0 %v379
    %773 = vmatpush.msra.mxu0 %v375
    %774 = vmatpush.msra.mxu0 %v371
    %775 = vmatpush.msra.mxu0 %v367
    %776 = vmatpush.msra.mxu0 %v363
    %777 = vmatpush.msra.mxu0 %v359
    %778 = vmatpush.msra.mxu0 %v355
    %779 = vmatpush.msra.mxu0 %v351
    %780 = vmatpush.msra.mxu0 %v347
    %781 = vmatpush.msra.mxu0 %v343
    %782 = vmatpush.msra.mxu0 %v339
    %783 = vmatpush.msra.mxu0 %v335
    %784 = vmatpush.msra.mxu0 %v331
    %785 = vmatmul.f32.gmra.mxu0 %v708
    %v786 = vpop.f32.mrf.mxu0
    %v787 = vadd.f32 0.0, %v786
    %788 = vdwg.mxu0
    %v789 = vadd.f32 %v704, %v727
    %v790 = vadd.f32 %v705, %v747
    %v791 = vadd.f32 %v706, %v767
    %v792 = vadd.f32 %v707, %v787
    %v793 = vxor.u32 %v789, 2147483648
    %v794 = vmul.f32 %v793, 1.442695
    %v795 = vpow.pop %v794
    %v796 = vadd.f32 %v795, 1.0
    %v797 = vrcp.pop %v796
    %v798 = vmul.f32 %v796, %v797
    %v799 = vsub.f32 1.0, %v798
    %v800 = vmul.f32 %v797, %v799
    %v801 = vadd.f32 %v797, %v800
    %vm802 = vweird.f32 %v796
    %vm803 = vweird.f32 %v797
    %vm804 = vmor %vm802, %vm803
    %v805 = vsel %vm804, %v797, %v801
    %v806 = vand.u32 2147483647, %v796
    %vm807 = vcmp.eq.f32.partialorder %v806, 8.507059e+37
    %v808 = vand.u32 %v796, 2147483648
    %v809 = vor.u32 1.1754944e-38, %v808
    %v810 = vsel %vm807, %v809, %v805
    %v811 = vmul.f32 1.0, %v810
    %v812 = vxor.u32 %v790, 2147483648
    %v813 = vmul.f32 %v812, 1.442695
    %v814 = vpow.pop %v813
    %v815 = vadd.f32 %v814, 1.0
    %v816 = vrcp.pop %v815
    %v817 = vmul.f32 %v815, %v816
    %v818 = vsub.f32 1.0, %v817
    %v819 = vmul.f32 %v816, %v818
    %v820 = vadd.f32 %v816, %v819
    %vm821 = vweird.f32 %v815
    %vm822 = vweird.f32 %v816
    %vm823 = vmor %vm821, %vm822
    %v824 = vsel %vm823, %v816, %v820
    %v825 = vand.u32 2147483647, %v815
    %vm826 = vcmp.eq.f32.partialorder %v825, 8.507059e+37
    %v827 = vand.u32 %v815, 2147483648
    %v828 = vor.u32 1.1754944e-38, %v827
    %v829 = vsel %vm826, %v828, %v824
    %v830 = vmul.f32 1.0, %v829
    %v831 = vtanh.pop %v791
    %v832 = vxor.u32 %v792, 2147483648
    %v833 = vmul.f32 %v832, 1.442695
    %v834 = vpow.pop %v833
    %v835 = vadd.f32 %v834, 1.0
    %v836 = vrcp.pop %v835
    %v837 = vmul.f32 %v835, %v836
    %v838 = vsub.f32 1.0, %v837
    %v839 = vmul.f32 %v836, %v838
    %v840 = vadd.f32 %v836, %v839
    %vm841 = vweird.f32 %v835
    %vm842 = vweird.f32 %v836
    %vm843 = vmor %vm841, %vm842
    %v844 = vsel %vm843, %v836, %v840
    %v845 = vand.u32 2147483647, %v835
    %vm846 = vcmp.eq.f32.partialorder %v845, 8.507059e+37
    %v847 = vand.u32 %v835, 2147483648
    %v848 = vor.u32 1.1754944e-38, %v847
    %v849 = vsel %vm846, %v848, %v844
    %v850 = vmul.f32 1.0, %v849
    %v851 = vld [vmem:[#allocation6] sm:$0xff]
    %v852 = vmul.f32 %v830, %v851
    %v853 = vmul.f32 %v811, %v831
    %v854 = vadd.f32 %v852, %v853
    %v855 = vtanh.pop %v854
    %v856 = vmul.f32 %v850, %v855
    %857 = vst [vmem:[#allocation6] sm:$0xff] %v854
    %858 = vst [vmem:[#allocation5] sm:$0xff] %v856
    %859 = vst [vmem:[#allocation3 + $0x10] sm:$0xff] %v856
    %v860 = vld [vmem:[#allocation2 + $0x60] sm:$0xff]
    %v861 = vld [vmem:[#allocation2 + $0x68] sm:$0xff]
    %v862 = vld [vmem:[#allocation2 + $0x70] sm:$0xff]
    %v863 = vld [vmem:[#allocation2 + $0x78] sm:$0xff]
    %v864 = vld [vmem:[#allocation5] sm:$0xff]
    %865 = vmatpush.msra.mxu0 %v388
    %866 = vmatpush.msra.mxu0 %v384
    %867 = vmatpush.msra.mxu0 %v380
    %868 = vmatpush.msra.mxu0 %v376
    %869 = vmatpush.msra.mxu0 %v372
    %870 = vmatpush.msra.mxu0 %v368
    %871 = vmatpush.msra.mxu0 %v364
    %872 = vmatpush.msra.mxu0 %v360
    %873 = vmatpush.msra.mxu0 %v356
    %874 = vmatpush.msra.mxu0 %v352
    %875 = vmatpush.msra.mxu0 %v348
    %876 = vmatpush.msra.mxu0 %v344
    %877 = vmatpush.msra.mxu0 %v340
    %878 = vmatpush.msra.mxu0 %v336
    %879 = vmatpush.msra.mxu0 %v332
    %880 = vmatpush.msra.mxu0 %v328
    %881 = vmatmul.f32.gmra.mxu0 %v864
    %v882 = vpop.f32.mrf.mxu0
    %v883 = vadd.f32 0.0, %v882
    %884 = vdwg.mxu0
    %885 = vmatpush.msra.mxu0 %v389
    %886 = vmatpush.msra.mxu0 %v385
    %887 = vmatpush.msra.mxu0 %v381
    %888 = vmatpush.msra.mxu0 %v377
    %889 = vmatpush.msra.mxu0 %v373
    %890 = vmatpush.msra.mxu0 %v369
    %891 = vmatpush.msra.mxu0 %v365
    %892 = vmatpush.msra.mxu0 %v361
    %893 = vmatpush.msra.mxu0 %v357
    %894 = vmatpush.msra.mxu0 %v353
    %895 = vmatpush.msra.mxu0 %v349
    %896 = vmatpush.msra.mxu0 %v345
    %897 = vmatpush.msra.mxu0 %v341
    %898 = vmatpush.msra.mxu0 %v337
    %899 = vmatpush.msra.mxu0 %v333
    %900 = vmatpush.msra.mxu0 %v329
    %901 = vmatmul.f32.gmra.mxu0 %v864
    %v902 = vpop.f32.mrf.mxu0
    %v903 = vadd.f32 0.0, %v902
    %904 = vdwg.mxu0
    %905 = vmatpush.msra.mxu0 %v390
    %906 = vmatpush.msra.mxu0 %v386
    %907 = vmatpush.msra.mxu0 %v382
    %908 = vmatpush.msra.mxu0 %v378
    %909 = vmatpush.msra.mxu0 %v374
    %910 = vmatpush.msra.mxu0 %v370
    %911 = vmatpush.msra.mxu0 %v366
    %912 = vmatpush.msra.mxu0 %v362
    %913 = vmatpush.msra.mxu0 %v358
    %914 = vmatpush.msra.mxu0 %v354
    %915 = vmatpush.msra.mxu0 %v350
    %916 = vmatpush.msra.mxu0 %v346
    %917 = vmatpush.msra.mxu0 %v342
    %918 = vmatpush.msra.mxu0 %v338
    %919 = vmatpush.msra.mxu0 %v334
    %920 = vmatpush.msra.mxu0 %v330
    %921 = vmatmul.f32.gmra.mxu0 %v864
    %v922 = vpop.f32.mrf.mxu0
    %v923 = vadd.f32 0.0, %v922
    %924 = vdwg.mxu0
    %925 = vmatpush.msra.mxu0 %v391
    %926 = vmatpush.msra.mxu0 %v387
    %927 = vmatpush.msra.mxu0 %v383
    %928 = vmatpush.msra.mxu0 %v379
    %929 = vmatpush.msra.mxu0 %v375
    %930 = vmatpush.msra.mxu0 %v371
    %931 = vmatpush.msra.mxu0 %v367
    %932 = vmatpush.msra.mxu0 %v363
    %933 = vmatpush.msra.mxu0 %v359
    %934 = vmatpush.msra.mxu0 %v355
    %935 = vmatpush.msra.mxu0 %v351
    %936 = vmatpush.msra.mxu0 %v347
    %937 = vmatpush.msra.mxu0 %v343
    %938 = vmatpush.msra.mxu0 %v339
    %939 = vmatpush.msra.mxu0 %v335
    %940 = vmatpush.msra.mxu0 %v331
    %941 = vmatmul.f32.gmra.mxu0 %v864
    %v942 = vpop.f32.mrf.mxu0
    %v943 = vadd.f32 0.0, %v942
    %944 = vdwg.mxu0
    %v945 = vadd.f32 %v860, %v883
    %v946 = vadd.f32 %v861, %v903
    %v947 = vadd.f32 %v862, %v923
    %v948 = vadd.f32 %v863, %v943
    %v949 = vxor.u32 %v945, 2147483648
    %v950 = vmul.f32 %v949, 1.442695
    %v951 = vpow.pop %v950
    %v952 = vadd.f32 %v951, 1.0
    %v953 = vrcp.pop %v952
    %v954 = vmul.f32 %v952, %v953
    %v955 = vsub.f32 1.0, %v954
    %v956 = vmul.f32 %v953, %v955
    %v957 = vadd.f32 %v953, %v956
    %vm958 = vweird.f32 %v952
    %vm959 = vweird.f32 %v953
    %vm960 = vmor %vm958, %vm959
    %v961 = vsel %vm960, %v953, %v957
    %v962 = vand.u32 2147483647, %v952
    %vm963 = vcmp.eq.f32.partialorder %v962, 8.507059e+37
    %v964 = vand.u32 %v952, 2147483648
    %v965 = vor.u32 1.1754944e-38, %v964
    %v966 = vsel %vm963, %v965, %v961
    %v967 = vmul.f32 1.0, %v966
    %v968 = vxor.u32 %v946, 2147483648
    %v969 = vmul.f32 %v968, 1.442695
    %v970 = vpow.pop %v969
    %v971 = vadd.f32 %v970, 1.0
    %v972 = vrcp.pop %v971
    %v973 = vmul.f32 %v971, %v972
    %v974 = vsub.f32 1.0, %v973
    %v975 = vmul.f32 %v972, %v974
    %v976 = vadd.f32 %v972, %v975
    %vm977 = vweird.f32 %v971
    %vm978 = vweird.f32 %v972
    %vm979 = vmor %vm977, %vm978
    %v980 = vsel %vm979, %v972, %v976
    %v981 = vand.u32 2147483647, %v971
    %vm982 = vcmp.eq.f32.partialorder %v981, 8.507059e+37
    %v983 = vand.u32 %v971, 2147483648
    %v984 = vor.u32 1.1754944e-38, %v983
    %v985 = vsel %vm982, %v984, %v980
    %v986 = vmul.f32 1.0, %v985
    %v987 = vtanh.pop %v947
    %v988 = vxor.u32 %v948, 2147483648
    %v989 = vmul.f32 %v988, 1.442695
    %v990 = vpow.pop %v989
    %v991 = vadd.f32 %v990, 1.0
    %v992 = vrcp.pop %v991
    %v993 = vmul.f32 %v991, %v992
    %v994 = vsub.f32 1.0, %v993
    %v995 = vmul.f32 %v992, %v994
    %v996 = vadd.f32 %v992, %v995
    %vm997 = vweird.f32 %v991
    %vm998 = vweird.f32 %v992
    %vm999 = vmor %vm997, %vm998
    %v1000 = vsel %vm999, %v992, %v996
    %v1001 = vand.u32 2147483647, %v991
    %vm1002 = vcmp.eq.f32.partialorder %v1001, 8.507059e+37
    %v1003 = vand.u32 %v991, 2147483648
    %v1004 = vor.u32 1.1754944e-38, %v1003
    %v1005 = vsel %vm1002, %v1004, %v1000
    %v1006 = vmul.f32 1.0, %v1005
    %v1007 = vld [vmem:[#allocation6] sm:$0xff]
    %v1008 = vmul.f32 %v986, %v1007
    %v1009 = vmul.f32 %v967, %v987
    %v1010 = vadd.f32 %v1008, %v1009
    %v1011 = vtanh.pop %v1010
    %v1012 = vmul.f32 %v1006, %v1011
    %1013 = vst [vmem:[#allocation6] sm:$0xff] %v1010
    %1014 = vst [vmem:[#allocation5] sm:$0xff] %v1012
    %1015 = vst [vmem:[#allocation3 + $0x18] sm:$0xff] %v1012
    %v1016 = vld [vmem:[#allocation2 + $0x80] sm:$0xff]
    %v1017 = vld [vmem:[#allocation2 + $0x88] sm:$0xff]
    %v1018 = vld [vmem:[#allocation2 + $0x90] sm:$0xff]
    %v1019 = vld [vmem:[#allocation2 + $0x98] sm:$0xff]
    %v1020 = vld [vmem:[#allocation5] sm:$0xff]
    %1021 = vmatpush.msra.mxu0 %v388
    %1022 = vmatpush.msra.mxu0 %v384
    %1023 = vmatpush.msra.mxu0 %v380
    %1024 = vmatpush.msra.mxu0 %v376
    %1025 = vmatpush.msra.mxu0 %v372
    %1026 = vmatpush.msra.mxu0 %v368
    %1027 = vmatpush.msra.mxu0 %v364
    %1028 = vmatpush.msra.mxu0 %v360
    %1029 = vmatpush.msra.mxu0 %v356
    %1030 = vmatpush.msra.mxu0 %v352
    %1031 = vmatpush.msra.mxu0 %v348
    %1032 = vmatpush.msra.mxu0 %v344
    %1033 = vmatpush.msra.mxu0 %v340
    %1034 = vmatpush.msra.mxu0 %v336
    %1035 = vmatpush.msra.mxu0 %v332
    %1036 = vmatpush.msra.mxu0 %v328
    %1037 = vmatmul.f32.gmra.mxu0 %v1020
    %v1038 = vpop.f32.mrf.mxu0
    %v1039 = vadd.f32 0.0, %v1038
    %1040 = vdwg.mxu0
    %1041 = vmatpush.msra.mxu0 %v389
    %1042 = vmatpush.msra.mxu0 %v385
    %1043 = vmatpush.msra.mxu0 %v381
    %1044 = vmatpush.msra.mxu0 %v377
    %1045 = vmatpush.msra.mxu0 %v373
    %1046 = vmatpush.msra.mxu0 %v369
    %1047 = vmatpush.msra.mxu0 %v365
    %1048 = vmatpush.msra.mxu0 %v361
    %1049 = vmatpush.msra.mxu0 %v357
    %1050 = vmatpush.msra.mxu0 %v353
    %1051 = vmatpush.msra.mxu0 %v349
    %1052 = vmatpush.msra.mxu0 %v345
    %1053 = vmatpush.msra.mxu0 %v341
    %1054 = vmatpush.msra.mxu0 %v337
    %1055 = vmatpush.msra.mxu0 %v333
    %1056 = vmatpush.msra.mxu0 %v329
    %1057 = vmatmul.f32.gmra.mxu0 %v1020
    %v1058 = vpop.f32.mrf.mxu0
    %v1059 = vadd.f32 0.0, %v1058
    %1060 = vdwg.mxu0
    %1061 = vmatpush.msra.mxu0 %v390
    %1062 = vmatpush.msra.mxu0 %v386
    %1063 = vmatpush.msra.mxu0 %v382
    %1064 = vmatpush.msra.mxu0 %v378
    %1065 = vmatpush.msra.mxu0 %v374
    %1066 = vmatpush.msra.mxu0 %v370
    %1067 = vmatpush.msra.mxu0 %v366
    %1068 = vmatpush.msra.mxu0 %v362
    %1069 = vmatpush.msra.mxu0 %v358
    %1070 = vmatpush.msra.mxu0 %v354
    %1071 = vmatpush.msra.mxu0 %v350
    %1072 = vmatpush.msra.mxu0 %v346
    %1073 = vmatpush.msra.mxu0 %v342
    %1074 = vmatpush.msra.mxu0 %v338
    %1075 = vmatpush.msra.mxu0 %v334
    %1076 = vmatpush.msra.mxu0 %v330
    %1077 = vmatmul.f32.gmra.mxu0 %v1020
    %v1078 = vpop.f32.mrf.mxu0
    %v1079 = vadd.f32 0.0, %v1078
    %1080 = vdwg.mxu0
    %1081 = vmatpush.msra.mxu0 %v391
    %1082 = vmatpush.msra.mxu0 %v387
    %1083 = vmatpush.msra.mxu0 %v383
    %1084 = vmatpush.msra.mxu0 %v379
    %1085 = vmatpush.msra.mxu0 %v375
    %1086 = vmatpush.msra.mxu0 %v371
    %1087 = vmatpush.msra.mxu0 %v367
    %1088 = vmatpush.msra.mxu0 %v363
    %1089 = vmatpush.msra.mxu0 %v359
    %1090 = vmatpush.msra.mxu0 %v355
    %1091 = vmatpush.msra.mxu0 %v351
    %1092 = vmatpush.msra.mxu0 %v347
    %1093 = vmatpush.msra.mxu0 %v343
    %1094 = vmatpush.msra.mxu0 %v339
    %1095 = vmatpush.msra.mxu0 %v335
    %1096 = vmatpush.msra.mxu0 %v331
    %1097 = vmatmul.f32.gmra.mxu0 %v1020
    %v1098 = vpop.f32.mrf.mxu0
    %v1099 = vadd.f32 0.0, %v1098
    %1100 = vdwg.mxu0
    %v1101 = vadd.f32 %v1016, %v1039
    %v1102 = vadd.f32 %v1017, %v1059
    %v1103 = vadd.f32 %v1018, %v1079
    %v1104 = vadd.f32 %v1019, %v1099
    %v1105 = vxor.u32 %v1101, 2147483648
    %v1106 = vmul.f32 %v1105, 1.442695
    %v1107 = vpow.pop %v1106
    %v1108 = vadd.f32 %v1107, 1.0
    %v1109 = vrcp.pop %v1108
    %v1110 = vmul.f32 %v1108, %v1109
    %v1111 = vsub.f32 1.0, %v1110
    %v1112 = vmul.f32 %v1109, %v1111
    %v1113 = vadd.f32 %v1109, %v1112
    %vm1114 = vweird.f32 %v1108
    %vm1115 = vweird.f32 %v1109
    %vm1116 = vmor %vm1114, %vm1115
    %v1117 = vsel %vm1116, %v1109, %v1113
    %v1118 = vand.u32 2147483647, %v1108
    %vm1119 = vcmp.eq.f32.partialorder %v1118, 8.507059e+37
    %v1120 = vand.u32 %v1108, 2147483648
    %v1121 = vor.u32 1.1754944e-38, %v1120
    %v1122 = vsel %vm1119, %v1121, %v1117
    %v1123 = vmul.f32 1.0, %v1122
    %v1124 = vxor.u32 %v1102, 2147483648
    %v1125 = vmul.f32 %v1124, 1.442695
    %v1126 = vpow.pop %v1125
    %v1127 = vadd.f32 %v1126, 1.0
    %v1128 = vrcp.pop %v1127
    %v1129 = vmul.f32 %v1127, %v1128
    %v1130 = vsub.f32 1.0, %v1129
    %v1131 = vmul.f32 %v1128, %v1130
    %v1132 = vadd.f32 %v1128, %v1131
    %vm1133 = vweird.f32 %v1127
    %vm1134 = vweird.f32 %v1128
    %vm1135 = vmor %vm1133, %vm1134
    %v1136 = vsel %vm1135, %v1128, %v1132
    %v1137 = vand.u32 2147483647, %v1127
    %vm1138 = vcmp.eq.f32.partialorder %v1137, 8.507059e+37
    %v1139 = vand.u32 %v1127, 2147483648
    %v1140 = vor.u32 1.1754944e-38, %v1139
    %v1141 = vsel %vm1138, %v1140, %v1136
    %v1142 = vmul.f32 1.0, %v1141
    %v1143 = vtanh.pop %v1103
    %v1144 = vxor.u32 %v1104, 2147483648
    %v1145 = vmul.f32 %v1144, 1.442695
    %v1146 = vpow.pop %v1145
    %v1147 = vadd.f32 %v1146, 1.0
    %v1148 = vrcp.pop %v1147
    %v1149 = vmul.f32 %v1147, %v1148
    %v1150 = vsub.f32 1.0, %v1149
    %v1151 = vmul.f32 %v1148, %v1150
    %v1152 = vadd.f32 %v1148, %v1151
    %vm1153 = vweird.f32 %v1147
    %vm1154 = vweird.f32 %v1148
    %vm1155 = vmor %vm1153, %vm1154
    %v1156 = vsel %vm1155, %v1148, %v1152
    %v1157 = vand.u32 2147483647, %v1147
    %vm1158 = vcmp.eq.f32.partialorder %v1157, 8.507059e+37
    %v1159 = vand.u32 %v1147, 2147483648
    %v1160 = vor.u32 1.1754944e-38, %v1159
    %v1161 = vsel %vm1158, %v1160, %v1156
    %v1162 = vmul.f32 1.0, %v1161
    %v1163 = vld [vmem:[#allocation6] sm:$0xff]
    %v1164 = vmul.f32 %v1142, %v1163
    %v1165 = vmul.f32 %v1123, %v1143
    %v1166 = vadd.f32 %v1164, %v1165
    %v1167 = vtanh.pop %v1166
    %v1168 = vmul.f32 %v1162, %v1167
    %1169 = vst [vmem:[#allocation6] sm:$0xff] %v1166
    %1170 = vst [vmem:[#allocation5] sm:$0xff] %v1168
    %1171 = vst [vmem:[#allocation3 + $0x20] sm:$0xff] %v1168
    %v1172 = vld [vmem:[#allocation2 + $0xa0] sm:$0xff]
    %v1173 = vld [vmem:[#allocation2 + $0xa8] sm:$0xff]
    %v1174 = vld [vmem:[#allocation2 + $0xb0] sm:$0xff]
    %v1175 = vld [vmem:[#allocation2 + $0xb8] sm:$0xff]
    %v1176 = vld [vmem:[#allocation5] sm:$0xff]
    %1177 = vmatpush.msra.mxu0 %v388
    %1178 = vmatpush.msra.mxu0 %v384
    %1179 = vmatpush.msra.mxu0 %v380
    %1180 = vmatpush.msra.mxu0 %v376
    %1181 = vmatpush.msra.mxu0 %v372
    %1182 = vmatpush.msra.mxu0 %v368
    %1183 = vmatpush.msra.mxu0 %v364
    %1184 = vmatpush.msra.mxu0 %v360
    %1185 = vmatpush.msra.mxu0 %v356
    %1186 = vmatpush.msra.mxu0 %v352
    %1187 = vmatpush.msra.mxu0 %v348
    %1188 = vmatpush.msra.mxu0 %v344
    %1189 = vmatpush.msra.mxu0 %v340
    %1190 = vmatpush.msra.mxu0 %v336
    %1191 = vmatpush.msra.mxu0 %v332
    %1192 = vmatpush.msra.mxu0 %v328
    %1193 = vmatmul.f32.gmra.mxu0 %v1176
    %v1194 = vpop.f32.mrf.mxu0
    %v1195 = vadd.f32 0.0, %v1194
    %1196 = vdwg.mxu0
    %1197 = vmatpush.msra.mxu0 %v389
    %1198 = vmatpush.msra.mxu0 %v385
    %1199 = vmatpush.msra.mxu0 %v381
    %1200 = vmatpush.msra.mxu0 %v377
    %1201 = vmatpush.msra.mxu0 %v373
    %1202 = vmatpush.msra.mxu0 %v369
    %1203 = vmatpush.msra.mxu0 %v365
    %1204 = vmatpush.msra.mxu0 %v361
    %1205 = vmatpush.msra.mxu0 %v357
    %1206 = vmatpush.msra.mxu0 %v353
    %1207 = vmatpush.msra.mxu0 %v349
    %1208 = vmatpush.msra.mxu0 %v345
    %1209 = vmatpush.msra.mxu0 %v341
    %1210 = vmatpush.msra.mxu0 %v337
    %1211 = vmatpush.msra.mxu0 %v333
    %1212 = vmatpush.msra.mxu0 %v329
    %1213 = vmatmul.f32.gmra.mxu0 %v1176
    %v1214 = vpop.f32.mrf.mxu0
    %v1215 = vadd.f32 0.0, %v1214
    %1216 = vdwg.mxu0
    %1217 = vmatpush.msra.mxu0 %v390
    %1218 = vmatpush.msra.mxu0 %v386
    %1219 = vmatpush.msra.mxu0 %v382
    %1220 = vmatpush.msra.mxu0 %v378
    %1221 = vmatpush.msra.mxu0 %v374
    %1222 = vmatpush.msra.mxu0 %v370
    %1223 = vmatpush.msra.mxu0 %v366
    %1224 = vmatpush.msra.mxu0 %v362
    %1225 = vmatpush.msra.mxu0 %v358
    %1226 = vmatpush.msra.mxu0 %v354
    %1227 = vmatpush.msra.mxu0 %v350
    %1228 = vmatpush.msra.mxu0 %v346
    %1229 = vmatpush.msra.mxu0 %v342
    %1230 = vmatpush.msra.mxu0 %v338
    %1231 = vmatpush.msra.mxu0 %v334
    %1232 = vmatpush.msra.mxu0 %v330
    %1233 = vmatmul.f32.gmra.mxu0 %v1176
    %v1234 = vpop.f32.mrf.mxu0
    %v1235 = vadd.f32 0.0, %v1234
    %1236 = vdwg.mxu0
    %1237 = vmatpush.msra.mxu0 %v391
    %1238 = vmatpush.msra.mxu0 %v387
    %1239 = vmatpush.msra.mxu0 %v383
    %1240 = vmatpush.msra.mxu0 %v379
    %1241 = vmatpush.msra.mxu0 %v375
    %1242 = vmatpush.msra.mxu0 %v371
    %1243 = vmatpush.msra.mxu0 %v367
    %1244 = vmatpush.msra.mxu0 %v363
    %1245 = vmatpush.msra.mxu0 %v359
    %1246 = vmatpush.msra.mxu0 %v355
    %1247 = vmatpush.msra.mxu0 %v351
    %1248 = vmatpush.msra.mxu0 %v347
    %1249 = vmatpush.msra.mxu0 %v343
    %1250 = vmatpush.msra.mxu0 %v339
    %1251 = vmatpush.msra.mxu0 %v335
    %1252 = vmatpush.msra.mxu0 %v331
    %1253 = vmatmul.f32.gmra.mxu0 %v1176
    %v1254 = vpop.f32.mrf.mxu0
    %v1255 = vadd.f32 0.0, %v1254
    %1256 = vdwg.mxu0
    %v1257 = vadd.f32 %v1172, %v1195
    %v1258 = vadd.f32 %v1173, %v1215
    %v1259 = vadd.f32 %v1174, %v1235
    %v1260 = vadd.f32 %v1175, %v1255
    %v1261 = vxor.u32 %v1257, 2147483648
    %v1262 = vmul.f32 %v1261, 1.442695
    %v1263 = vpow.pop %v1262
    %v1264 = vadd.f32 %v1263, 1.0
    %v1265 = vrcp.pop %v1264
    %v1266 = vmul.f32 %v1264, %v1265
    %v1267 = vsub.f32 1.0, %v1266
    %v1268 = vmul.f32 %v1265, %v1267
    %v1269 = vadd.f32 %v1265, %v1268
    %vm1270 = vweird.f32 %v1264
    %vm1271 = vweird.f32 %v1265
    %vm1272 = vmor %vm1270, %vm1271
    %v1273 = vsel %vm1272, %v1265, %v1269
    %v1274 = vand.u32 2147483647, %v1264
    %vm1275 = vcmp.eq.f32.partialorder %v1274, 8.507059e+37
    %v1276 = vand.u32 %v1264, 2147483648
    %v1277 = vor.u32 1.1754944e-38, %v1276
    %v1278 = vsel %vm1275, %v1277, %v1273
    %v1279 = vmul.f32 1.0, %v1278
    %v1280 = vxor.u32 %v1258, 2147483648
    %v1281 = vmul.f32 %v1280, 1.442695
    %v1282 = vpow.pop %v1281
    %v1283 = vadd.f32 %v1282, 1.0
    %v1284 = vrcp.pop %v1283
    %v1285 = vmul.f32 %v1283, %v1284
    %v1286 = vsub.f32 1.0, %v1285
    %v1287 = vmul.f32 %v1284, %v1286
    %v1288 = vadd.f32 %v1284, %v1287
    %vm1289 = vweird.f32 %v1283
    %vm1290 = vweird.f32 %v1284
    %vm1291 = vmor %vm1289, %vm1290
    %v1292 = vsel %vm1291, %v1284, %v1288
    %v1293 = vand.u32 2147483647, %v1283
    %vm1294 = vcmp.eq.f32.partialorder %v1293, 8.507059e+37
    %v1295 = vand.u32 %v1283, 2147483648
    %v1296 = vor.u32 1.1754944e-38, %v1295
    %v1297 = vsel %vm1294, %v1296, %v1292
    %v1298 = vmul.f32 1.0, %v1297
    %v1299 = vtanh.pop %v1259
    %v1300 = vxor.u32 %v1260, 2147483648
    %v1301 = vmul.f32 %v1300, 1.442695
    %v1302 = vpow.pop %v1301
    %v1303 = vadd.f32 %v1302, 1.0
    %v1304 = vrcp.pop %v1303
    %v1305 = vmul.f32 %v1303, %v1304
    %v1306 = vsub.f32 1.0, %v1305
    %v1307 = vmul.f32 %v1304, %v1306
    %v1308 = vadd.f32 %v1304, %v1307
    %vm1309 = vweird.f32 %v1303
    %vm1310 = vweird.f32 %v1304
    %vm1311 = vmor %vm1309, %vm1310
    %v1312 = vsel %vm1311, %v1304, %v1308
    %v1313 = vand.u32 2147483647, %v1303
    %vm1314 = vcmp.eq.f32.partialorder %v1313, 8.507059e+37
    %v1315 = vand.u32 %v1303, 2147483648
    %v1316 = vor.u32 1.1754944e-38, %v1315
    %v1317 = vsel %vm1314, %v1316, %v1312
    %v1318 = vmul.f32 1.0, %v1317
    %v1319 = vld [vmem:[#allocation6] sm:$0xff]
    %v1320 = vmul.f32 %v1298, %v1319
    %v1321 = vmul.f32 %v1279, %v1299
    %v1322 = vadd.f32 %v1320, %v1321
    %v1323 = vtanh.pop %v1322
    %v1324 = vmul.f32 %v1318, %v1323
    %1325 = vst [vmem:[#allocation6] sm:$0xff] %v1322
    %1326 = vst [vmem:[#allocation5] sm:$0xff] %v1324
    %1327 = vst [vmem:[#allocation3 + $0x28] sm:$0xff] %v1324
    %v1328 = vld [vmem:[#allocation2 + $0xc0] sm:$0xff]
    %v1329 = vld [vmem:[#allocation2 + $0xc8] sm:$0xff]
    %v1330 = vld [vmem:[#allocation2 + $0xd0] sm:$0xff]
    %v1331 = vld [vmem:[#allocation2 + $0xd8] sm:$0xff]
    %v1332 = vld [vmem:[#allocation5] sm:$0xff]
    %1333 = vmatpush.msra.mxu0 %v388
    %1334 = vmatpush.msra.mxu0 %v384
    %1335 = vmatpush.msra.mxu0 %v380
    %1336 = vmatpush.msra.mxu0 %v376
    %1337 = vmatpush.msra.mxu0 %v372
    %1338 = vmatpush.msra.mxu0 %v368
    %1339 = vmatpush.msra.mxu0 %v364
    %1340 = vmatpush.msra.mxu0 %v360
    %1341 = vmatpush.msra.mxu0 %v356
    %1342 = vmatpush.msra.mxu0 %v352
    %1343 = vmatpush.msra.mxu0 %v348
    %1344 = vmatpush.msra.mxu0 %v344
    %1345 = vmatpush.msra.mxu0 %v340
    %1346 = vmatpush.msra.mxu0 %v336
    %1347 = vmatpush.msra.mxu0 %v332
    %1348 = vmatpush.msra.mxu0 %v328
    %1349 = vmatmul.f32.gmra.mxu0 %v1332
    %v1350 = vpop.f32.mrf.mxu0
    %v1351 = vadd.f32 0.0, %v1350
    %1352 = vdwg.mxu0
    %1353 = vmatpush.msra.mxu0 %v389
    %1354 = vmatpush.msra.mxu0 %v385
    %1355 = vmatpush.msra.mxu0 %v381
    %1356 = vmatpush.msra.mxu0 %v377
    %1357 = vmatpush.msra.mxu0 %v373
    %1358 = vmatpush.msra.mxu0 %v369
    %1359 = vmatpush.msra.mxu0 %v365
    %1360 = vmatpush.msra.mxu0 %v361
    %1361 = vmatpush.msra.mxu0 %v357
    %1362 = vmatpush.msra.mxu0 %v353
    %1363 = vmatpush.msra.mxu0 %v349
    %1364 = vmatpush.msra.mxu0 %v345
    %1365 = vmatpush.msra.mxu0 %v341
    %1366 = vmatpush.msra.mxu0 %v337
    %1367 = vmatpush.msra.mxu0 %v333
    %1368 = vmatpush.msra.mxu0 %v329
    %1369 = vmatmul.f32.gmra.mxu0 %v1332
    %v1370 = vpop.f32.mrf.mxu0
    %v1371 = vadd.f32 0.0, %v1370
    %1372 = vdwg.mxu0
    %1373 = vmatpush.msra.mxu0 %v390
    %1374 = vmatpush.msra.mxu0 %v386
    %1375 = vmatpush.msra.mxu0 %v382
    %1376 = vmatpush.msra.mxu0 %v378
    %1377 = vmatpush.msra.mxu0 %v374
    %1378 = vmatpush.msra.mxu0 %v370
    %1379 = vmatpush.msra.mxu0 %v366
    %1380 = vmatpush.msra.mxu0 %v362
    %1381 = vmatpush.msra.mxu0 %v358
    %1382 = vmatpush.msra.mxu0 %v354
    %1383 = vmatpush.msra.mxu0 %v350
    %1384 = vmatpush.msra.mxu0 %v346
    %1385 = vmatpush.msra.mxu0 %v342
    %1386 = vmatpush.msra.mxu0 %v338
    %1387 = vmatpush.msra.mxu0 %v334
    %1388 = vmatpush.msra.mxu0 %v330
    %1389 = vmatmul.f32.gmra.mxu0 %v1332
    %v1390 = vpop.f32.mrf.mxu0
    %v1391 = vadd.f32 0.0, %v1390
    %1392 = vdwg.mxu0
    %1393 = vmatpush.msra.mxu0 %v391
    %1394 = vmatpush.msra.mxu0 %v387
    %1395 = vmatpush.msra.mxu0 %v383
    %1396 = vmatpush.msra.mxu0 %v379
    %1397 = vmatpush.msra.mxu0 %v375
    %1398 = vmatpush.msra.mxu0 %v371
    %1399 = vmatpush.msra.mxu0 %v367
    %1400 = vmatpush.msra.mxu0 %v363
    %1401 = vmatpush.msra.mxu0 %v359
    %1402 = vmatpush.msra.mxu0 %v355
    %1403 = vmatpush.msra.mxu0 %v351
    %1404 = vmatpush.msra.mxu0 %v347
    %1405 = vmatpush.msra.mxu0 %v343
    %1406 = vmatpush.msra.mxu0 %v339
    %1407 = vmatpush.msra.mxu0 %v335
    %1408 = vmatpush.msra.mxu0 %v331
    %1409 = vmatmul.f32.gmra.mxu0 %v1332
    %v1410 = vpop.f32.mrf.mxu0
    %v1411 = vadd.f32 0.0, %v1410
    %1412 = vdwg.mxu0
    %v1413 = vadd.f32 %v1328, %v1351
    %v1414 = vadd.f32 %v1329, %v1371
    %v1415 = vadd.f32 %v1330, %v1391
    %v1416 = vadd.f32 %v1331, %v1411
    %v1417 = vxor.u32 %v1413, 2147483648
    %v1418 = vmul.f32 %v1417, 1.442695
    %v1419 = vpow.pop %v1418
    %v1420 = vadd.f32 %v1419, 1.0
    %v1421 = vrcp.pop %v1420
    %v1422 = vmul.f32 %v1420, %v1421
    %v1423 = vsub.f32 1.0, %v1422
    %v1424 = vmul.f32 %v1421, %v1423
    %v1425 = vadd.f32 %v1421, %v1424
    %vm1426 = vweird.f32 %v1420
    %vm1427 = vweird.f32 %v1421
    %vm1428 = vmor %vm1426, %vm1427
    %v1429 = vsel %vm1428, %v1421, %v1425
    %v1430 = vand.u32 2147483647, %v1420
    %vm1431 = vcmp.eq.f32.partialorder %v1430, 8.507059e+37
    %v1432 = vand.u32 %v1420, 2147483648
    %v1433 = vor.u32 1.1754944e-38, %v1432
    %v1434 = vsel %vm1431, %v1433, %v1429
    %v1435 = vmul.f32 1.0, %v1434
    %v1436 = vxor.u32 %v1414, 2147483648
    %v1437 = vmul.f32 %v1436, 1.442695
    %v1438 = vpow.pop %v1437
    %v1439 = vadd.f32 %v1438, 1.0
    %v1440 = vrcp.pop %v1439
    %v1441 = vmul.f32 %v1439, %v1440
    %v1442 = vsub.f32 1.0, %v1441
    %v1443 = vmul.f32 %v1440, %v1442
    %v1444 = vadd.f32 %v1440, %v1443
    %vm1445 = vweird.f32 %v1439
    %vm1446 = vweird.f32 %v1440
    %vm1447 = vmor %vm1445, %vm1446
    %v1448 = vsel %vm1447, %v1440, %v1444
    %v1449 = vand.u32 2147483647, %v1439
    %vm1450 = vcmp.eq.f32.partialorder %v1449, 8.507059e+37
    %v1451 = vand.u32 %v1439, 2147483648
    %v1452 = vor.u32 1.1754944e-38, %v1451
    %v1453 = vsel %vm1450, %v1452, %v1448
    %v1454 = vmul.f32 1.0, %v1453
    %v1455 = vtanh.pop %v1415
    %v1456 = vxor.u32 %v1416, 2147483648
    %v1457 = vmul.f32 %v1456, 1.442695
    %v1458 = vpow.pop %v1457
    %v1459 = vadd.f32 %v1458, 1.0
    %v1460 = vrcp.pop %v1459
    %v1461 = vmul.f32 %v1459, %v1460
    %v1462 = vsub.f32 1.0, %v1461
    %v1463 = vmul.f32 %v1460, %v1462
    %v1464 = vadd.f32 %v1460, %v1463
    %vm1465 = vweird.f32 %v1459
    %vm1466 = vweird.f32 %v1460
    %vm1467 = vmor %vm1465, %vm1466
    %v1468 = vsel %vm1467, %v1460, %v1464
    %v1469 = vand.u32 2147483647, %v1459
    %vm1470 = vcmp.eq.f32.partialorder %v1469, 8.507059e+37
    %v1471 = vand.u32 %v1459, 2147483648
    %v1472 = vor.u32 1.1754944e-38, %v1471
    %v1473 = vsel %vm1470, %v1472, %v1468
    %v1474 = vmul.f32 1.0, %v1473
    %v1475 = vld [vmem:[#allocation6] sm:$0xff]
    %v1476 = vmul.f32 %v1454, %v1475
    %v1477 = vmul.f32 %v1435, %v1455
    %v1478 = vadd.f32 %v1476, %v1477
    %v1479 = vtanh.pop %v1478
    %v1480 = vmul.f32 %v1474, %v1479
    %1481 = vst [vmem:[#allocation6] sm:$0xff] %v1478
    %1482 = vst [vmem:[#allocation5] sm:$0xff] %v1480
    %1483 = vst [vmem:[#allocation3 + $0x30] sm:$0xff] %v1480
    %v1484 = vld [vmem:[#allocation2 + $0xe0] sm:$0xff]
    %v1485 = vld [vmem:[#allocation2 + $0xe8] sm:$0xff]
    %v1486 = vld [vmem:[#allocation2 + $0xf0] sm:$0xff]
    %v1487 = vld [vmem:[#allocation2 + $0xf8] sm:$0xff]
    %v1488 = vld [vmem:[#allocation5] sm:$0xff]
    %1489 = vmatpush.msra.mxu0 %v388
    %1490 = vmatpush.msra.mxu0 %v384
    %1491 = vmatpush.msra.mxu0 %v380
    %1492 = vmatpush.msra.mxu0 %v376
    %1493 = vmatpush.msra.mxu0 %v372
    %1494 = vmatpush.msra.mxu0 %v368
    %1495 = vmatpush.msra.mxu0 %v364
    %1496 = vmatpush.msra.mxu0 %v360
    %1497 = vmatpush.msra.mxu0 %v356
    %1498 = vmatpush.msra.mxu0 %v352
    %1499 = vmatpush.msra.mxu0 %v348
    %1500 = vmatpush.msra.mxu0 %v344
    %1501 = vmatpush.msra.mxu0 %v340
    %1502 = vmatpush.msra.mxu0 %v336
    %1503 = vmatpush.msra.mxu0 %v332
    %1504 = vmatpush.msra.mxu0 %v328
    %1505 = vmatmul.f32.gmra.mxu0 %v1488
    %v1506 = vpop.f32.mrf.mxu0
    %v1507 = vadd.f32 0.0, %v1506
    %1508 = vdwg.mxu0
    %1509 = vmatpush.msra.mxu0 %v389
    %1510 = vmatpush.msra.mxu0 %v385
    %1511 = vmatpush.msra.mxu0 %v381
    %1512 = vmatpush.msra.mxu0 %v377
    %1513 = vmatpush.msra.mxu0 %v373
    %1514 = vmatpush.msra.mxu0 %v369
    %1515 = vmatpush.msra.mxu0 %v365
    %1516 = vmatpush.msra.mxu0 %v361
    %1517 = vmatpush.msra.mxu0 %v357
    %1518 = vmatpush.msra.mxu0 %v353
    %1519 = vmatpush.msra.mxu0 %v349
    %1520 = vmatpush.msra.mxu0 %v345
    %1521 = vmatpush.msra.mxu0 %v341
    %1522 = vmatpush.msra.mxu0 %v337
    %1523 = vmatpush.msra.mxu0 %v333
    %1524 = vmatpush.msra.mxu0 %v329
    %1525 = vmatmul.f32.gmra.mxu0 %v1488
    %v1526 = vpop.f32.mrf.mxu0
    %v1527 = vadd.f32 0.0, %v1526
    %1528 = vdwg.mxu0
    %1529 = vmatpush.msra.mxu0 %v390
    %1530 = vmatpush.msra.mxu0 %v386
    %1531 = vmatpush.msra.mxu0 %v382
    %1532 = vmatpush.msra.mxu0 %v378
    %1533 = vmatpush.msra.mxu0 %v374
    %1534 = vmatpush.msra.mxu0 %v370
    %1535 = vmatpush.msra.mxu0 %v366
    %1536 = vmatpush.msra.mxu0 %v362
    %1537 = vmatpush.msra.mxu0 %v358
    %1538 = vmatpush.msra.mxu0 %v354
    %1539 = vmatpush.msra.mxu0 %v350
    %1540 = vmatpush.msra.mxu0 %v346
    %1541 = vmatpush.msra.mxu0 %v342
    %1542 = vmatpush.msra.mxu0 %v338
    %1543 = vmatpush.msra.mxu0 %v334
    %1544 = vmatpush.msra.mxu0 %v330
    %1545 = vmatmul.f32.gmra.mxu0 %v1488
    %v1546 = vpop.f32.mrf.mxu0
    %v1547 = vadd.f32 0.0, %v1546
    %1548 = vdwg.mxu0
    %1549 = vmatpush.msra.mxu0 %v391
    %1550 = vmatpush.msra.mxu0 %v387
    %1551 = vmatpush.msra.mxu0 %v383
    %1552 = vmatpush.msra.mxu0 %v379
    %1553 = vmatpush.msra.mxu0 %v375
    %1554 = vmatpush.msra.mxu0 %v371
    %1555 = vmatpush.msra.mxu0 %v367
    %1556 = vmatpush.msra.mxu0 %v363
    %1557 = vmatpush.msra.mxu0 %v359
    %1558 = vmatpush.msra.mxu0 %v355
    %1559 = vmatpush.msra.mxu0 %v351
    %1560 = vmatpush.msra.mxu0 %v347
    %1561 = vmatpush.msra.mxu0 %v343
    %1562 = vmatpush.msra.mxu0 %v339
    %1563 = vmatpush.msra.mxu0 %v335
    %1564 = vmatpush.msra.mxu0 %v331
    %1565 = vmatmul.f32.gmra.mxu0 %v1488
    %v1566 = vpop.f32.mrf.mxu0
    %v1567 = vadd.f32 0.0, %v1566
    %1568 = vdwg.mxu0
    %v1569 = vadd.f32 %v1484, %v1507
    %v1570 = vadd.f32 %v1485, %v1527
    %v1571 = vadd.f32 %v1486, %v1547
    %v1572 = vadd.f32 %v1487, %v1567
    %v1573 = vxor.u32 %v1569, 2147483648
    %v1574 = vmul.f32 %v1573, 1.442695
    %v1575 = vpow.pop %v1574
    %v1576 = vadd.f32 %v1575, 1.0
    %v1577 = vrcp.pop %v1576
    %v1578 = vmul.f32 %v1576, %v1577
    %v1579 = vsub.f32 1.0, %v1578
    %v1580 = vmul.f32 %v1577, %v1579
    %v1581 = vadd.f32 %v1577, %v1580
    %vm1582 = vweird.f32 %v1576
    %vm1583 = vweird.f32 %v1577
    %vm1584 = vmor %vm1582, %vm1583
    %v1585 = vsel %vm1584, %v1577, %v1581
    %v1586 = vand.u32 2147483647, %v1576
    %vm1587 = vcmp.eq.f32.partialorder %v1586, 8.507059e+37
    %v1588 = vand.u32 %v1576, 2147483648
    %v1589 = vor.u32 1.1754944e-38, %v1588
    %v1590 = vsel %vm1587, %v1589, %v1585
    %v1591 = vmul.f32 1.0, %v1590
    %v1592 = vxor.u32 %v1570, 2147483648
    %v1593 = vmul.f32 %v1592, 1.442695
    %v1594 = vpow.pop %v1593
    %v1595 = vadd.f32 %v1594, 1.0
    %v1596 = vrcp.pop %v1595
    %v1597 = vmul.f32 %v1595, %v1596
    %v1598 = vsub.f32 1.0, %v1597
    %v1599 = vmul.f32 %v1596, %v1598
    %v1600 = vadd.f32 %v1596, %v1599
    %vm1601 = vweird.f32 %v1595
    %vm1602 = vweird.f32 %v1596
    %vm1603 = vmor %vm1601, %vm1602
    %v1604 = vsel %vm1603, %v1596, %v1600
    %v1605 = vand.u32 2147483647, %v1595
    %vm1606 = vcmp.eq.f32.partialorder %v1605, 8.507059e+37
    %v1607 = vand.u32 %v1595, 2147483648
    %v1608 = vor.u32 1.1754944e-38, %v1607
    %v1609 = vsel %vm1606, %v1608, %v1604
    %v1610 = vmul.f32 1.0, %v1609
    %v1611 = vtanh.pop %v1571
    %v1612 = vxor.u32 %v1572, 2147483648
    %v1613 = vmul.f32 %v1612, 1.442695
    %v1614 = vpow.pop %v1613
    %v1615 = vadd.f32 %v1614, 1.0
    %v1616 = vrcp.pop %v1615
    %v1617 = vmul.f32 %v1615, %v1616
    %v1618 = vsub.f32 1.0, %v1617
    %v1619 = vmul.f32 %v1616, %v1618
    %v1620 = vadd.f32 %v1616, %v1619
    %vm1621 = vweird.f32 %v1615
    %vm1622 = vweird.f32 %v1616
    %vm1623 = vmor %vm1621, %vm1622
    %v1624 = vsel %vm1623, %v1616, %v1620
    %v1625 = vand.u32 2147483647, %v1615
    %vm1626 = vcmp.eq.f32.partialorder %v1625, 8.507059e+37
    %v1627 = vand.u32 %v1615, 2147483648
    %v1628 = vor.u32 1.1754944e-38, %v1627
    %v1629 = vsel %vm1626, %v1628, %v1624
    %v1630 = vmul.f32 1.0, %v1629
    %v1631 = vld [vmem:[#allocation6] sm:$0xff]
    %v1632 = vmul.f32 %v1610, %v1631
    %v1633 = vmul.f32 %v1591, %v1611
    %v1634 = vadd.f32 %v1632, %v1633
    %v1635 = vtanh.pop %v1634
    %v1636 = vmul.f32 %v1630, %v1635
    %1637 = vst [vmem:[#allocation6] sm:$0xff] %v1634
    %1638 = vst [vmem:[#allocation5] sm:$0xff] %v1636
    %1639 = vst [vmem:[#allocation3 + $0x38] sm:$0xff] %v1636
    %v1640 = vld [vmem:[#allocation3] sm:$0xff]
    %v1641 = vld [vmem:[#allocation3 + $0x8] sm:$0xff]
    %v1642 = vld [vmem:[#allocation3 + $0x10] sm:$0xff]
    %v1643 = vld [vmem:[#allocation3 + $0x18] sm:$0xff]
    %v1644 = vld [vmem:[#allocation3 + $0x20] sm:$0xff]
    %v1645 = vld [vmem:[#allocation3 + $0x28] sm:$0xff]
    %v1646 = vld [vmem:[#allocation3 + $0x30] sm:$0xff]
    %v1647 = vld [vmem:[#allocation3 + $0x38] sm:$0xff]
    %v1648 = vld [vmem:[#allocation9] sm:$0xff]
    %v1649 = vld [vmem:[#allocation9 + $0x8] sm:$0xff]
    %v1650 = vld [vmem:[#allocation9 + $0x10] sm:$0xff]
    %v1651 = vld [vmem:[#allocation9 + $0x18] sm:$0xff]
    %v1652 = vld [vmem:[#allocation9 + $0x20] sm:$0xff]
    %v1653 = vld [vmem:[#allocation9 + $0x28] sm:$0xff]
    %v1654 = vld [vmem:[#allocation9 + $0x30] sm:$0xff]
    %v1655 = vld [vmem:[#allocation9 + $0x38] sm:$0xff]
    %v1656 = vld [vmem:[#allocation9 + $0x40] sm:$0xff]
    %v1657 = vld [vmem:[#allocation9 + $0x48] sm:$0xff]
    %v1658 = vld [vmem:[#allocation9 + $0x50] sm:$0xff]
    %v1659 = vld [vmem:[#allocation9 + $0x58] sm:$0xff]
    %v1660 = vld [vmem:[#allocation9 + $0x60] sm:$0xff]
    %v1661 = vld [vmem:[#allocation9 + $0x68] sm:$0xff]
    %v1662 = vld [vmem:[#allocation9 + $0x70] sm:$0xff]
    %v1663 = vld [vmem:[#allocation9 + $0x78] sm:$0xff]
    %v1664 = vld [vmem:[#allocation9 + $0x80] sm:$0xff]
    %v1665 = vld [vmem:[#allocation9 + $0x88] sm:$0xff]
    %v1666 = vld [vmem:[#allocation9 + $0x90] sm:$0xff]
    %v1667 = vld [vmem:[#allocation9 + $0x98] sm:$0xff]
    %v1668 = vld [vmem:[#allocation9 + $0xa0] sm:$0xff]
    %v1669 = vld [vmem:[#allocation9 + $0xa8] sm:$0xff]
    %v1670 = vld [vmem:[#allocation9 + $0xb0] sm:$0xff]
    %v1671 = vld [vmem:[#allocation9 + $0xb8] sm:$0xff]
    %v1672 = vld [vmem:[#allocation9 + $0xc0] sm:$0xff]
    %v1673 = vld [vmem:[#allocation9 + $0xc8] sm:$0xff]
    %v1674 = vld [vmem:[#allocation9 + $0xd0] sm:$0xff]
    %v1675 = vld [vmem:[#allocation9 + $0xd8] sm:$0xff]
    %v1676 = vld [vmem:[#allocation9 + $0xe0] sm:$0xff]
    %v1677 = vld [vmem:[#allocation9 + $0xe8] sm:$0xff]
    %v1678 = vld [vmem:[#allocation9 + $0xf0] sm:$0xff]
    %v1679 = vld [vmem:[#allocation9 + $0xf8] sm:$0xff]
    %v1680 = vld [vmem:[#allocation9 + $0x100] sm:$0xff]
    %v1681 = vld [vmem:[#allocation9 + $0x108] sm:$0xff]
    %v1682 = vld [vmem:[#allocation9 + $0x110] sm:$0xff]
    %v1683 = vld [vmem:[#allocation9 + $0x118] sm:$0xff]
    %v1684 = vld [vmem:[#allocation9 + $0x120] sm:$0xff]
    %v1685 = vld [vmem:[#allocation9 + $0x128] sm:$0xff]
    %v1686 = vld [vmem:[#allocation9 + $0x130] sm:$0xff]
    %v1687 = vld [vmem:[#allocation9 + $0x138] sm:$0xff]
    %v1688 = vld [vmem:[#allocation9 + $0x140] sm:$0xff]
    %v1689 = vld [vmem:[#allocation9 + $0x148] sm:$0xff]
    %v1690 = vld [vmem:[#allocation9 + $0x150] sm:$0xff]
    %v1691 = vld [vmem:[#allocation9 + $0x158] sm:$0xff]
    %v1692 = vld [vmem:[#allocation9 + $0x160] sm:$0xff]
    %v1693 = vld [vmem:[#allocation9 + $0x168] sm:$0xff]
    %v1694 = vld [vmem:[#allocation9 + $0x170] sm:$0xff]
    %v1695 = vld [vmem:[#allocation9 + $0x178] sm:$0xff]
    %v1696 = vld [vmem:[#allocation9 + $0x180] sm:$0xff]
    %v1697 = vld [vmem:[#allocation9 + $0x188] sm:$0xff]
    %v1698 = vld [vmem:[#allocation9 + $0x190] sm:$0xff]
    %v1699 = vld [vmem:[#allocation9 + $0x198] sm:$0xff]
    %v1700 = vld [vmem:[#allocation9 + $0x1a0] sm:$0xff]
    %v1701 = vld [vmem:[#allocation9 + $0x1a8] sm:$0xff]
    %v1702 = vld [vmem:[#allocation9 + $0x1b0] sm:$0xff]
    %v1703 = vld [vmem:[#allocation9 + $0x1b8] sm:$0xff]
    %v1704 = vld [vmem:[#allocation9 + $0x1c0] sm:$0xff]
    %v1705 = vld [vmem:[#allocation9 + $0x1c8] sm:$0xff]
    %v1706 = vld [vmem:[#allocation9 + $0x1d0] sm:$0xff]
    %v1707 = vld [vmem:[#allocation9 + $0x1d8] sm:$0xff]
    %v1708 = vld [vmem:[#allocation9 + $0x1e0] sm:$0xff]
    %v1709 = vld [vmem:[#allocation9 + $0x1e8] sm:$0xff]
    %v1710 = vld [vmem:[#allocation9 + $0x1f0] sm:$0xff]
    %v1711 = vld [vmem:[#allocation9 + $0x1f8] sm:$0xff]
    %v1712 = vld [vmem:[%s6] sm:$0xf]
    %v1714 = vperm.slane %v1712, 0
    %v1715 = vperm.slane %v1712, 1
    %v1716 = vperm.slane %v1712, 2
    %v1717 = vperm.slane %v1712, 3
    %1722 = vmatpush.msra.mxu0 %v1708
    %1723 = vmatpush.msra.mxu0 %v1704
    %1724 = vmatpush.msra.mxu0 %v1700
    %1725 = vmatpush.msra.mxu0 %v1696
    %1726 = vmatpush.msra.mxu0 %v1692
    %1727 = vmatpush.msra.mxu0 %v1688
    %1728 = vmatpush.msra.mxu0 %v1684
    %1729 = vmatpush.msra.mxu0 %v1680
    %1730 = vmatpush.msra.mxu0 %v1676
    %1731 = vmatpush.msra.mxu0 %v1672
    %1732 = vmatpush.msra.mxu0 %v1668
    %1733 = vmatpush.msra.mxu0 %v1664
    %1734 = vmatpush.msra.mxu0 %v1660
    %1735 = vmatpush.msra.mxu0 %v1656
    %1736 = vmatpush.msra.mxu0 %v1652
    %1737 = vmatpush.msra.mxu0 %v1648
    %1738 = vmatmul.f32.gmra.mxu0 %v1640
    %v1739 = vpop.f32.mrf.mxu0
    %v1740 = vadd.f32 %v1714, %v1739
    %1741 = vmatmul.f32.gmra.mxu0 %v1641
    %v1742 = vpop.f32.mrf.mxu0
    %v1743 = vadd.f32 %v1714, %v1742
    %1744 = vmatmul.f32.gmra.mxu0 %v1642
    %v1745 = vpop.f32.mrf.mxu0
    %v1746 = vadd.f32 %v1714, %v1745
    %1747 = vmatmul.f32.gmra.mxu0 %v1643
    %v1748 = vpop.f32.mrf.mxu0
    %v1749 = vadd.f32 %v1714, %v1748
    %1750 = vmatmul.f32.gmra.mxu0 %v1644
    %v1751 = vpop.f32.mrf.mxu0
    %v1752 = vadd.f32 %v1714, %v1751
    %1753 = vmatmul.f32.gmra.mxu0 %v1645
    %v1754 = vpop.f32.mrf.mxu0
    %v1755 = vadd.f32 %v1714, %v1754
    %1756 = vmatmul.f32.gmra.mxu0 %v1646
    %v1757 = vpop.f32.mrf.mxu0
    %v1758 = vadd.f32 %v1714, %v1757
    %1759 = vmatmul.f32.gmra.mxu0 %v1647
    %v1760 = vpop.f32.mrf.mxu0
    %v1761 = vadd.f32 %v1714, %v1760
    %1762 = vdwg.mxu0
    %1763 = vmatpush.msra.mxu0 %v1709
    %1764 = vmatpush.msra.mxu0 %v1705
    %1765 = vmatpush.msra.mxu0 %v1701
    %1766 = vmatpush.msra.mxu0 %v1697
    %1767 = vmatpush.msra.mxu0 %v1693
    %1768 = vmatpush.msra.mxu0 %v1689
    %1769 = vmatpush.msra.mxu0 %v1685
    %1770 = vmatpush.msra.mxu0 %v1681
    %1771 = vmatpush.msra.mxu0 %v1677
    %1772 = vmatpush.msra.mxu0 %v1673
    %1773 = vmatpush.msra.mxu0 %v1669
    %1774 = vmatpush.msra.mxu0 %v1665
    %1775 = vmatpush.msra.mxu0 %v1661
    %1776 = vmatpush.msra.mxu0 %v1657
    %1777 = vmatpush.msra.mxu0 %v1653
    %1778 = vmatpush.msra.mxu0 %v1649
    %1779 = vmatmul.f32.gmra.mxu0 %v1640
    %v1780 = vpop.f32.mrf.mxu0
    %v1781 = vadd.f32 %v1715, %v1780
    %1782 = vmatmul.f32.gmra.mxu0 %v1641
    %v1783 = vpop.f32.mrf.mxu0
    %v1784 = vadd.f32 %v1715, %v1783
    %1785 = vmatmul.f32.gmra.mxu0 %v1642
    %v1786 = vpop.f32.mrf.mxu0
    %v1787 = vadd.f32 %v1715, %v1786
    %1788 = vmatmul.f32.gmra.mxu0 %v1643
    %v1789 = vpop.f32.mrf.mxu0
    %v1790 = vadd.f32 %v1715, %v1789
    %1791 = vmatmul.f32.gmra.mxu0 %v1644
    %v1792 = vpop.f32.mrf.mxu0
    %v1793 = vadd.f32 %v1715, %v1792
    %1794 = vmatmul.f32.gmra.mxu0 %v1645
    %v1795 = vpop.f32.mrf.mxu0
    %v1796 = vadd.f32 %v1715, %v1795
    %1797 = vmatmul.f32.gmra.mxu0 %v1646
    %v1798 = vpop.f32.mrf.mxu0
    %v1799 = vadd.f32 %v1715, %v1798
    %1800 = vmatmul.f32.gmra.mxu0 %v1647
    %v1801 = vpop.f32.mrf.mxu0
    %v1802 = vadd.f32 %v1715, %v1801
    %1803 = vdwg.mxu0
    %1804 = vmatpush.msra.mxu0 %v1710
    %1805 = vmatpush.msra.mxu0 %v1706
    %1806 = vmatpush.msra.mxu0 %v1702
    %1807 = vmatpush.msra.mxu0 %v1698
    %1808 = vmatpush.msra.mxu0 %v1694
    %1809 = vmatpush.msra.mxu0 %v1690
    %1810 = vmatpush.msra.mxu0 %v1686
    %1811 = vmatpush.msra.mxu0 %v1682
    %1812 = vmatpush.msra.mxu0 %v1678
    %1813 = vmatpush.msra.mxu0 %v1674
    %1814 = vmatpush.msra.mxu0 %v1670
    %1815 = vmatpush.msra.mxu0 %v1666
    %1816 = vmatpush.msra.mxu0 %v1662
    %1817 = vmatpush.msra.mxu0 %v1658
    %1818 = vmatpush.msra.mxu0 %v1654
    %1819 = vmatpush.msra.mxu0 %v1650
    %1820 = vmatmul.f32.gmra.mxu0 %v1640
    %v1821 = vpop.f32.mrf.mxu0
    %v1822 = vadd.f32 %v1716, %v1821
    %1823 = vmatmul.f32.gmra.mxu0 %v1641
    %v1824 = vpop.f32.mrf.mxu0
    %v1825 = vadd.f32 %v1716, %v1824
    %1826 = vmatmul.f32.gmra.mxu0 %v1642
    %v1827 = vpop.f32.mrf.mxu0
    %v1828 = vadd.f32 %v1716, %v1827
    %1829 = vmatmul.f32.gmra.mxu0 %v1643
    %v1830 = vpop.f32.mrf.mxu0
    %v1831 = vadd.f32 %v1716, %v1830
    %1832 = vmatmul.f32.gmra.mxu0 %v1644
    %v1833 = vpop.f32.mrf.mxu0
    %v1834 = vadd.f32 %v1716, %v1833
    %1835 = vmatmul.f32.gmra.mxu0 %v1645
    %v1836 = vpop.f32.mrf.mxu0
    %v1837 = vadd.f32 %v1716, %v1836
    %1838 = vmatmul.f32.gmra.mxu0 %v1646
    %v1839 = vpop.f32.mrf.mxu0
    %v1840 = vadd.f32 %v1716, %v1839
    %1841 = vmatmul.f32.gmra.mxu0 %v1647
    %v1842 = vpop.f32.mrf.mxu0
    %v1843 = vadd.f32 %v1716, %v1842
    %1844 = vdwg.mxu0
    %1845 = vmatpush.msra.mxu0 %v1711
    %1846 = vmatpush.msra.mxu0 %v1707
    %1847 = vmatpush.msra.mxu0 %v1703
    %1848 = vmatpush.msra.mxu0 %v1699
    %1849 = vmatpush.msra.mxu0 %v1695
    %1850 = vmatpush.msra.mxu0 %v1691
    %1851 = vmatpush.msra.mxu0 %v1687
    %1852 = vmatpush.msra.mxu0 %v1683
    %1853 = vmatpush.msra.mxu0 %v1679
    %1854 = vmatpush.msra.mxu0 %v1675
    %1855 = vmatpush.msra.mxu0 %v1671
    %1856 = vmatpush.msra.mxu0 %v1667
    %1857 = vmatpush.msra.mxu0 %v1663
    %1858 = vmatpush.msra.mxu0 %v1659
    %1859 = vmatpush.msra.mxu0 %v1655
    %1860 = vmatpush.msra.mxu0 %v1651
    %1861 = vmatmul.f32.gmra.mxu0 %v1640
    %v1862 = vpop.f32.mrf.mxu0
    %v1863 = vadd.f32 %v1717, %v1862
    %1864 = vmatmul.f32.gmra.mxu0 %v1641
    %v1865 = vpop.f32.mrf.mxu0
    %v1866 = vadd.f32 %v1717, %v1865
    %1867 = vmatmul.f32.gmra.mxu0 %v1642
    %v1868 = vpop.f32.mrf.mxu0
    %v1869 = vadd.f32 %v1717, %v1868
    %1870 = vmatmul.f32.gmra.mxu0 %v1643
    %v1871 = vpop.f32.mrf.mxu0
    %v1872 = vadd.f32 %v1717, %v1871
    %1873 = vmatmul.f32.gmra.mxu0 %v1644
    %v1874 = vpop.f32.mrf.mxu0
    %v1875 = vadd.f32 %v1717, %v1874
    %1876 = vmatmul.f32.gmra.mxu0 %v1645
    %v1877 = vpop.f32.mrf.mxu0
    %v1878 = vadd.f32 %v1717, %v1877
    %1879 = vmatmul.f32.gmra.mxu0 %v1646
    %v1880 = vpop.f32.mrf.mxu0
    %v1881 = vadd.f32 %v1717, %v1880
    %1882 = vmatmul.f32.gmra.mxu0 %v1647
    %v1883 = vpop.f32.mrf.mxu0
    %v1884 = vadd.f32 %v1717, %v1883
    %1885 = vdwg.mxu0
    %1886 = vst [vmem:[#allocation2] sm:$0xff] %v1740
    %1887 = vst [vmem:[#allocation2 + $0x8] sm:$0xff] %v1781
    %1888 = vst [vmem:[#allocation2 + $0x10] sm:$0xff] %v1822
    %1889 = vst [vmem:[#allocation2 + $0x18] sm:$0xff] %v1863
    %1890 = vst [vmem:[#allocation2 + $0x20] sm:$0xff] %v1743
    %1891 = vst [vmem:[#allocation2 + $0x28] sm:$0xff] %v1784
    %1892 = vst [vmem:[#allocation2 + $0x30] sm:$0xff] %v1825
    %1893 = vst [vmem:[#allocation2 + $0x38] sm:$0xff] %v1866
    %1894 = vst [vmem:[#allocation2 + $0x40] sm:$0xff] %v1746
    %1895 = vst [vmem:[#allocation2 + $0x48] sm:$0xff] %v1787
    %1896 = vst [vmem:[#allocation2 + $0x50] sm:$0xff] %v1828
    %1897 = vst [vmem:[#allocation2 + $0x58] sm:$0xff] %v1869
    %1898 = vst [vmem:[#allocation2 + $0x60] sm:$0xff] %v1749
    %1899 = vst [vmem:[#allocation2 + $0x68] sm:$0xff] %v1790
    %1900 = vst [vmem:[#allocation2 + $0x70] sm:$0xff] %v1831
    %1901 = vst [vmem:[#allocation2 + $0x78] sm:$0xff] %v1872
    %1902 = vst [vmem:[#allocation2 + $0x80] sm:$0xff] %v1752
    %1903 = vst [vmem:[#allocation2 + $0x88] sm:$0xff] %v1793
    %1904 = vst [vmem:[#allocation2 + $0x90] sm:$0xff] %v1834
    %1905 = vst [vmem:[#allocation2 + $0x98] sm:$0xff] %v1875
    %1906 = vst [vmem:[#allocation2 + $0xa0] sm:$0xff] %v1755
    %1907 = vst [vmem:[#allocation2 + $0xa8] sm:$0xff] %v1796
    %1908 = vst [vmem:[#allocation2 + $0xb0] sm:$0xff] %v1837
    %1909 = vst [vmem:[#allocation2 + $0xb8] sm:$0xff] %v1878
    %1910 = vst [vmem:[#allocation2 + $0xc0] sm:$0xff] %v1758
    %1911 = vst [vmem:[#allocation2 + $0xc8] sm:$0xff] %v1799
    %1912 = vst [vmem:[#allocation2 + $0xd0] sm:$0xff] %v1840
    %1913 = vst [vmem:[#allocation2 + $0xd8] sm:$0xff] %v1881
    %1914 = vst [vmem:[#allocation2 + $0xe0] sm:$0xff] %v1761
    %1915 = vst [vmem:[#allocation2 + $0xe8] sm:$0xff] %v1802
    %1916 = vst [vmem:[#allocation2 + $0xf0] sm:$0xff] %v1843
    %1917 = vst [vmem:[#allocation2 + $0xf8] sm:$0xff] %v1884
    %1918 = vst [vmem:[#allocation5] sm:$0xff] 0.0
    %1919 = vst [vmem:[#allocation6] sm:$0xff] 0.0
    %v1920 = vld [vmem:[#allocation11] sm:$0xff]
    %v1921 = vld [vmem:[#allocation11 + $0x8] sm:$0xff]
    %v1922 = vld [vmem:[#allocation11 + $0x10] sm:$0xff]
    %v1923 = vld [vmem:[#allocation11 + $0x18] sm:$0xff]
    %v1924 = vld [vmem:[#allocation11 + $0x20] sm:$0xff]
    %v1925 = vld [vmem:[#allocation11 + $0x28] sm:$0xff]
    %v1926 = vld [vmem:[#allocation11 + $0x30] sm:$0xff]
    %v1927 = vld [vmem:[#allocation11 + $0x38] sm:$0xff]
    %v1928 = vld [vmem:[#allocation11 + $0x40] sm:$0xff]
    %v1929 = vld [vmem:[#allocation11 + $0x48] sm:$0xff]
    %v1930 = vld [vmem:[#allocation11 + $0x50] sm:$0xff]
    %v1931 = vld [vmem:[#allocation11 + $0x58] sm:$0xff]
    %v1932 = vld [vmem:[#allocation11 + $0x60] sm:$0xff]
    %v1933 = vld [vmem:[#allocation11 + $0x68] sm:$0xff]
    %v1934 = vld [vmem:[#allocation11 + $0x70] sm:$0xff]
    %v1935 = vld [vmem:[#allocation11 + $0x78] sm:$0xff]
    %v1936 = vld [vmem:[#allocation11 + $0x80] sm:$0xff]
    %v1937 = vld [vmem:[#allocation11 + $0x88] sm:$0xff]
    %v1938 = vld [vmem:[#allocation11 + $0x90] sm:$0xff]
    %v1939 = vld [vmem:[#allocation11 + $0x98] sm:$0xff]
    %v1940 = vld [vmem:[#allocation11 + $0xa0] sm:$0xff]
    %v1941 = vld [vmem:[#allocation11 + $0xa8] sm:$0xff]
    %v1942 = vld [vmem:[#allocation11 + $0xb0] sm:$0xff]
    %v1943 = vld [vmem:[#allocation11 + $0xb8] sm:$0xff]
    %v1944 = vld [vmem:[#allocation11 + $0xc0] sm:$0xff]
    %v1945 = vld [vmem:[#allocation11 + $0xc8] sm:$0xff]
    %v1946 = vld [vmem:[#allocation11 + $0xd0] sm:$0xff]
    %v1947 = vld [vmem:[#allocation11 + $0xd8] sm:$0xff]
    %v1948 = vld [vmem:[#allocation11 + $0xe0] sm:$0xff]
    %v1949 = vld [vmem:[#allocation11 + $0xe8] sm:$0xff]
    %v1950 = vld [vmem:[#allocation11 + $0xf0] sm:$0xff]
    %v1951 = vld [vmem:[#allocation11 + $0xf8] sm:$0xff]
    %v1952 = vld [vmem:[#allocation11 + $0x100] sm:$0xff]
    %v1953 = vld [vmem:[#allocation11 + $0x108] sm:$0xff]
    %v1954 = vld [vmem:[#allocation11 + $0x110] sm:$0xff]
    %v1955 = vld [vmem:[#allocation11 + $0x118] sm:$0xff]
    %v1956 = vld [vmem:[#allocation11 + $0x120] sm:$0xff]
    %v1957 = vld [vmem:[#allocation11 + $0x128] sm:$0xff]
    %v1958 = vld [vmem:[#allocation11 + $0x130] sm:$0xff]
    %v1959 = vld [vmem:[#allocation11 + $0x138] sm:$0xff]
    %v1960 = vld [vmem:[#allocation11 + $0x140] sm:$0xff]
    %v1961 = vld [vmem:[#allocation11 + $0x148] sm:$0xff]
    %v1962 = vld [vmem:[#allocation11 + $0x150] sm:$0xff]
    %v1963 = vld [vmem:[#allocation11 + $0x158] sm:$0xff]
    %v1964 = vld [vmem:[#allocation11 + $0x160] sm:$0xff]
    %v1965 = vld [vmem:[#allocation11 + $0x168] sm:$0xff]
    %v1966 = vld [vmem:[#allocation11 + $0x170] sm:$0xff]
    %v1967 = vld [vmem:[#allocation11 + $0x178] sm:$0xff]
    %v1968 = vld [vmem:[#allocation11 + $0x180] sm:$0xff]
    %v1969 = vld [vmem:[#allocation11 + $0x188] sm:$0xff]
    %v1970 = vld [vmem:[#allocation11 + $0x190] sm:$0xff]
    %v1971 = vld [vmem:[#allocation11 + $0x198] sm:$0xff]
    %v1972 = vld [vmem:[#allocation11 + $0x1a0] sm:$0xff]
    %v1973 = vld [vmem:[#allocation11 + $0x1a8] sm:$0xff]
    %v1974 = vld [vmem:[#allocation11 + $0x1b0] sm:$0xff]
    %v1975 = vld [vmem:[#allocation11 + $0x1b8] sm:$0xff]
    %v1976 = vld [vmem:[#allocation11 + $0x1c0] sm:$0xff]
    %v1977 = vld [vmem:[#allocation11 + $0x1c8] sm:$0xff]
    %v1978 = vld [vmem:[#allocation11 + $0x1d0] sm:$0xff]
    %v1979 = vld [vmem:[#allocation11 + $0x1d8] sm:$0xff]
    %v1980 = vld [vmem:[#allocation11 + $0x1e0] sm:$0xff]
    %v1981 = vld [vmem:[#allocation11 + $0x1e8] sm:$0xff]
    %v1982 = vld [vmem:[#allocation11 + $0x1f0] sm:$0xff]
    %v1983 = vld [vmem:[#allocation11 + $0x1f8] sm:$0xff]
    %v1984 = vld [vmem:[#allocation2] sm:$0xff]
    %v1985 = vld [vmem:[#allocation2 + $0x8] sm:$0xff]
    %v1986 = vld [vmem:[#allocation2 + $0x10] sm:$0xff]
    %v1987 = vld [vmem:[#allocation2 + $0x18] sm:$0xff]
    %v1988 = vld [vmem:[#allocation5] sm:$0xff]
    %1989 = vmatpush.msra.mxu0 %v1980
    %1990 = vmatpush.msra.mxu0 %v1976
    %1991 = vmatpush.msra.mxu0 %v1972
    %1992 = vmatpush.msra.mxu0 %v1968
    %1993 = vmatpush.msra.mxu0 %v1964
    %1994 = vmatpush.msra.mxu0 %v1960
    %1995 = vmatpush.msra.mxu0 %v1956
    %1996 = vmatpush.msra.mxu0 %v1952
    %1997 = vmatpush.msra.mxu0 %v1948
    %1998 = vmatpush.msra.mxu0 %v1944
    %1999 = vmatpush.msra.mxu0 %v1940
    %2000 = vmatpush.msra.mxu0 %v1936
    %2001 = vmatpush.msra.mxu0 %v1932
    %2002 = vmatpush.msra.mxu0 %v1928
    %2003 = vmatpush.msra.mxu0 %v1924
    %2004 = vmatpush.msra.mxu0 %v1920
    %2005 = vmatmul.f32.gmra.mxu0 %v1988
    %v2006 = vpop.f32.mrf.mxu0
    %v2007 = vadd.f32 0.0, %v2006
    %2008 = vdwg.mxu0
    %2009 = vmatpush.msra.mxu0 %v1981
    %2010 = vmatpush.msra.mxu0 %v1977
    %2011 = vmatpush.msra.mxu0 %v1973
    %2012 = vmatpush.msra.mxu0 %v1969
    %2013 = vmatpush.msra.mxu0 %v1965
    %2014 = vmatpush.msra.mxu0 %v1961
    %2015 = vmatpush.msra.mxu0 %v1957
    %2016 = vmatpush.msra.mxu0 %v1953
    %2017 = vmatpush.msra.mxu0 %v1949
    %2018 = vmatpush.msra.mxu0 %v1945
    %2019 = vmatpush.msra.mxu0 %v1941
    %2020 = vmatpush.msra.mxu0 %v1937
    %2021 = vmatpush.msra.mxu0 %v1933
    %2022 = vmatpush.msra.mxu0 %v1929
    %2023 = vmatpush.msra.mxu0 %v1925
    %2024 = vmatpush.msra.mxu0 %v1921
    %2025 = vmatmul.f32.gmra.mxu0 %v1988
    %v2026 = vpop.f32.mrf.mxu0
    %v2027 = vadd.f32 0.0, %v2026
    %2028 = vdwg.mxu0
    %2029 = vmatpush.msra.mxu0 %v1982
    %2030 = vmatpush.msra.mxu0 %v1978
    %2031 = vmatpush.msra.mxu0 %v1974
    %2032 = vmatpush.msra.mxu0 %v1970
    %2033 = vmatpush.msra.mxu0 %v1966
    %2034 = vmatpush.msra.mxu0 %v1962
    %2035 = vmatpush.msra.mxu0 %v1958
    %2036 = vmatpush.msra.mxu0 %v1954
    %2037 = vmatpush.msra.mxu0 %v1950
    %2038 = vmatpush.msra.mxu0 %v1946
    %2039 = vmatpush.msra.mxu0 %v1942
    %2040 = vmatpush.msra.mxu0 %v1938
    %2041 = vmatpush.msra.mxu0 %v1934
    %2042 = vmatpush.msra.mxu0 %v1930
    %2043 = vmatpush.msra.mxu0 %v1926
    %2044 = vmatpush.msra.mxu0 %v1922
    %2045 = vmatmul.f32.gmra.mxu0 %v1988
    %v2046 = vpop.f32.mrf.mxu0
    %v2047 = vadd.f32 0.0, %v2046
    %2048 = vdwg.mxu0
    %2049 = vmatpush.msra.mxu0 %v1983
    %2050 = vmatpush.msra.mxu0 %v1979
    %2051 = vmatpush.msra.mxu0 %v1975
    %2052 = vmatpush.msra.mxu0 %v1971
    %2053 = vmatpush.msra.mxu0 %v1967
    %2054 = vmatpush.msra.mxu0 %v1963
    %2055 = vmatpush.msra.mxu0 %v1959
    %2056 = vmatpush.msra.mxu0 %v1955
    %2057 = vmatpush.msra.mxu0 %v1951
    %2058 = vmatpush.msra.mxu0 %v1947
    %2059 = vmatpush.msra.mxu0 %v1943
    %2060 = vmatpush.msra.mxu0 %v1939
    %2061 = vmatpush.msra.mxu0 %v1935
    %2062 = vmatpush.msra.mxu0 %v1931
    %2063 = vmatpush.msra.mxu0 %v1927
    %2064 = vmatpush.msra.mxu0 %v1923
    %2065 = vmatmul.f32.gmra.mxu0 %v1988
    %v2066 = vpop.f32.mrf.mxu0
    %v2067 = vadd.f32 0.0, %v2066
    %2068 = vdwg.mxu0
    %v2069 = vadd.f32 %v1984, %v2007
    %v2070 = vadd.f32 %v1985, %v2027
    %v2071 = vadd.f32 %v1986, %v2047
    %v2072 = vadd.f32 %v1987, %v2067
    %v2073 = vxor.u32 %v2069, 2147483648
    %v2074 = vmul.f32 %v2073, 1.442695
    %v2075 = vpow.pop %v2074
    %v2076 = vadd.f32 %v2075, 1.0
    %v2077 = vrcp.pop %v2076
    %v2078 = vmul.f32 %v2076, %v2077
    %v2079 = vsub.f32 1.0, %v2078
    %v2080 = vmul.f32 %v2077, %v2079
    %v2081 = vadd.f32 %v2077, %v2080
    %vm2082 = vweird.f32 %v2076
    %vm2083 = vweird.f32 %v2077
    %vm2084 = vmor %vm2082, %vm2083
    %v2085 = vsel %vm2084, %v2077, %v2081
    %v2086 = vand.u32 2147483647, %v2076
    %vm2087 = vcmp.eq.f32.partialorder %v2086, 8.507059e+37
    %v2088 = vand.u32 %v2076, 2147483648
    %v2089 = vor.u32 1.1754944e-38, %v2088
    %v2090 = vsel %vm2087, %v2089, %v2085
    %v2091 = vmul.f32 1.0, %v2090
    %v2092 = vxor.u32 %v2070, 2147483648
    %v2093 = vmul.f32 %v2092, 1.442695
    %v2094 = vpow.pop %v2093
    %v2095 = vadd.f32 %v2094, 1.0
    %v2096 = vrcp.pop %v2095
    %v2097 = vmul.f32 %v2095, %v2096
    %v2098 = vsub.f32 1.0, %v2097
    %v2099 = vmul.f32 %v2096, %v2098
    %v2100 = vadd.f32 %v2096, %v2099
    %vm2101 = vweird.f32 %v2095
    %vm2102 = vweird.f32 %v2096
    %vm2103 = vmor %vm2101, %vm2102
    %v2104 = vsel %vm2103, %v2096, %v2100
    %v2105 = vand.u32 2147483647, %v2095
    %vm2106 = vcmp.eq.f32.partialorder %v2105, 8.507059e+37
    %v2107 = vand.u32 %v2095, 2147483648
    %v2108 = vor.u32 1.1754944e-38, %v2107
    %v2109 = vsel %vm2106, %v2108, %v2104
    %v2110 = vmul.f32 1.0, %v2109
    %v2111 = vtanh.pop %v2071
    %v2112 = vxor.u32 %v2072, 2147483648
    %v2113 = vmul.f32 %v2112, 1.442695
    %v2114 = vpow.pop %v2113
    %v2115 = vadd.f32 %v2114, 1.0
    %v2116 = vrcp.pop %v2115
    %v2117 = vmul.f32 %v2115, %v2116
    %v2118 = vsub.f32 1.0, %v2117
    %v2119 = vmul.f32 %v2116, %v2118
    %v2120 = vadd.f32 %v2116, %v2119
    %vm2121 = vweird.f32 %v2115
    %vm2122 = vweird.f32 %v2116
    %vm2123 = vmor %vm2121, %vm2122
    %v2124 = vsel %vm2123, %v2116, %v2120
    %v2125 = vand.u32 2147483647, %v2115
    %vm2126 = vcmp.eq.f32.partialorder %v2125, 8.507059e+37
    %v2127 = vand.u32 %v2115, 2147483648
    %v2128 = vor.u32 1.1754944e-38, %v2127
    %v2129 = vsel %vm2126, %v2128, %v2124
    %v2130 = vmul.f32 1.0, %v2129
    %v2131 = vld [vmem:[#allocation6] sm:$0xff]
    %v2132 = vmul.f32 %v2110, %v2131
    %v2133 = vmul.f32 %v2091, %v2111
    %v2134 = vadd.f32 %v2132, %v2133
    %v2135 = vtanh.pop %v2134
    %v2136 = vmul.f32 %v2130, %v2135
    %2137 = vst [vmem:[#allocation6] sm:$0xff] %v2134
    %2138 = vst [vmem:[#allocation5] sm:$0xff] %v2136
    %v2139 = vld [vmem:[#allocation2 + $0x20] sm:$0xff]
    %v2140 = vld [vmem:[#allocation2 + $0x28] sm:$0xff]
    %v2141 = vld [vmem:[#allocation2 + $0x30] sm:$0xff]
    %v2142 = vld [vmem:[#allocation2 + $0x38] sm:$0xff]
    %v2143 = vld [vmem:[#allocation5] sm:$0xff]
    %2144 = vmatpush.msra.mxu0 %v1980
    %2145 = vmatpush.msra.mxu0 %v1976
    %2146 = vmatpush.msra.mxu0 %v1972
    %2147 = vmatpush.msra.mxu0 %v1968
    %2148 = vmatpush.msra.mxu0 %v1964
    %2149 = vmatpush.msra.mxu0 %v1960
    %2150 = vmatpush.msra.mxu0 %v1956
    %2151 = vmatpush.msra.mxu0 %v1952
    %2152 = vmatpush.msra.mxu0 %v1948
    %2153 = vmatpush.msra.mxu0 %v1944
    %2154 = vmatpush.msra.mxu0 %v1940
    %2155 = vmatpush.msra.mxu0 %v1936
    %2156 = vmatpush.msra.mxu0 %v1932
    %2157 = vmatpush.msra.mxu0 %v1928
    %2158 = vmatpush.msra.mxu0 %v1924
    %2159 = vmatpush.msra.mxu0 %v1920
    %2160 = vmatmul.f32.gmra.mxu0 %v2143
    %v2161 = vpop.f32.mrf.mxu0
    %v2162 = vadd.f32 0.0, %v2161
    %2163 = vdwg.mxu0
    %2164 = vmatpush.msra.mxu0 %v1981
    %2165 = vmatpush.msra.mxu0 %v1977
    %2166 = vmatpush.msra.mxu0 %v1973
    %2167 = vmatpush.msra.mxu0 %v1969
    %2168 = vmatpush.msra.mxu0 %v1965
    %2169 = vmatpush.msra.mxu0 %v1961
    %2170 = vmatpush.msra.mxu0 %v1957
    %2171 = vmatpush.msra.mxu0 %v1953
    %2172 = vmatpush.msra.mxu0 %v1949
    %2173 = vmatpush.msra.mxu0 %v1945
    %2174 = vmatpush.msra.mxu0 %v1941
    %2175 = vmatpush.msra.mxu0 %v1937
    %2176 = vmatpush.msra.mxu0 %v1933
    %2177 = vmatpush.msra.mxu0 %v1929
    %2178 = vmatpush.msra.mxu0 %v1925
    %2179 = vmatpush.msra.mxu0 %v1921
    %2180 = vmatmul.f32.gmra.mxu0 %v2143
    %v2181 = vpop.f32.mrf.mxu0
    %v2182 = vadd.f32 0.0, %v2181
    %2183 = vdwg.mxu0
    %2184 = vmatpush.msra.mxu0 %v1982
    %2185 = vmatpush.msra.mxu0 %v1978
    %2186 = vmatpush.msra.mxu0 %v1974
    %2187 = vmatpush.msra.mxu0 %v1970
    %2188 = vmatpush.msra.mxu0 %v1966
    %2189 = vmatpush.msra.mxu0 %v1962
    %2190 = vmatpush.msra.mxu0 %v1958
    %2191 = vmatpush.msra.mxu0 %v1954
    %2192 = vmatpush.msra.mxu0 %v1950
    %2193 = vmatpush.msra.mxu0 %v1946
    %2194 = vmatpush.msra.mxu0 %v1942
    %2195 = vmatpush.msra.mxu0 %v1938
    %2196 = vmatpush.msra.mxu0 %v1934
    %2197 = vmatpush.msra.mxu0 %v1930
    %2198 = vmatpush.msra.mxu0 %v1926
    %2199 = vmatpush.msra.mxu0 %v1922
    %2200 = vmatmul.f32.gmra.mxu0 %v2143
    %v2201 = vpop.f32.mrf.mxu0
    %v2202 = vadd.f32 0.0, %v2201
    %2203 = vdwg.mxu0
    %2204 = vmatpush.msra.mxu0 %v1983
    %2205 = vmatpush.msra.mxu0 %v1979
    %2206 = vmatpush.msra.mxu0 %v1975
    %2207 = vmatpush.msra.mxu0 %v1971
    %2208 = vmatpush.msra.mxu0 %v1967
    %2209 = vmatpush.msra.mxu0 %v1963
    %2210 = vmatpush.msra.mxu0 %v1959
    %2211 = vmatpush.msra.mxu0 %v1955
    %2212 = vmatpush.msra.mxu0 %v1951
    %2213 = vmatpush.msra.mxu0 %v1947
    %2214 = vmatpush.msra.mxu0 %v1943
    %2215 = vmatpush.msra.mxu0 %v1939
    %2216 = vmatpush.msra.mxu0 %v1935
    %2217 = vmatpush.msra.mxu0 %v1931
    %2218 = vmatpush.msra.mxu0 %v1927
    %2219 = vmatpush.msra.mxu0 %v1923
    %2220 = vmatmul.f32.gmra.mxu0 %v2143
    %v2221 = vpop.f32.mrf.mxu0
    %v2222 = vadd.f32 0.0, %v2221
    %2223 = vdwg.mxu0
    %v2224 = vadd.f32 %v2139, %v2162
    %v2225 = vadd.f32 %v2140, %v2182
    %v2226 = vadd.f32 %v2141, %v2202
    %v2227 = vadd.f32 %v2142, %v2222
    %v2228 = vxor.u32 %v2224, 2147483648
    %v2229 = vmul.f32 %v2228, 1.442695
    %v2230 = vpow.pop %v2229
    %v2231 = vadd.f32 %v2230, 1.0
    %v2232 = vrcp.pop %v2231
    %v2233 = vmul.f32 %v2231, %v2232
    %v2234 = vsub.f32 1.0, %v2233
    %v2235 = vmul.f32 %v2232, %v2234
    %v2236 = vadd.f32 %v2232, %v2235
    %vm2237 = vweird.f32 %v2231
    %vm2238 = vweird.f32 %v2232
    %vm2239 = vmor %vm2237, %vm2238
    %v2240 = vsel %vm2239, %v2232, %v2236
    %v2241 = vand.u32 2147483647, %v2231
    %vm2242 = vcmp.eq.f32.partialorder %v2241, 8.507059e+37
    %v2243 = vand.u32 %v2231, 2147483648
    %v2244 = vor.u32 1.1754944e-38, %v2243
    %v2245 = vsel %vm2242, %v2244, %v2240
    %v2246 = vmul.f32 1.0, %v2245
    %v2247 = vxor.u32 %v2225, 2147483648
    %v2248 = vmul.f32 %v2247, 1.442695
    %v2249 = vpow.pop %v2248
    %v2250 = vadd.f32 %v2249, 1.0
    %v2251 = vrcp.pop %v2250
    %v2252 = vmul.f32 %v2250, %v2251
    %v2253 = vsub.f32 1.0, %v2252
    %v2254 = vmul.f32 %v2251, %v2253
    %v2255 = vadd.f32 %v2251, %v2254
    %vm2256 = vweird.f32 %v2250
    %vm2257 = vweird.f32 %v2251
    %vm2258 = vmor %vm2256, %vm2257
    %v2259 = vsel %vm2258, %v2251, %v2255
    %v2260 = vand.u32 2147483647, %v2250
    %vm2261 = vcmp.eq.f32.partialorder %v2260, 8.507059e+37
    %v2262 = vand.u32 %v2250, 2147483648
    %v2263 = vor.u32 1.1754944e-38, %v2262
    %v2264 = vsel %vm2261, %v2263, %v2259
    %v2265 = vmul.f32 1.0, %v2264
    %v2266 = vtanh.pop %v2226
    %v2267 = vxor.u32 %v2227, 2147483648
    %v2268 = vmul.f32 %v2267, 1.442695
    %v2269 = vpow.pop %v2268
    %v2270 = vadd.f32 %v2269, 1.0
    %v2271 = vrcp.pop %v2270
    %v2272 = vmul.f32 %v2270, %v2271
    %v2273 = vsub.f32 1.0, %v2272
    %v2274 = vmul.f32 %v2271, %v2273
    %v2275 = vadd.f32 %v2271, %v2274
    %vm2276 = vweird.f32 %v2270
    %vm2277 = vweird.f32 %v2271
    %vm2278 = vmor %vm2276, %vm2277
    %v2279 = vsel %vm2278, %v2271, %v2275
    %v2280 = vand.u32 2147483647, %v2270
    %vm2281 = vcmp.eq.f32.partialorder %v2280, 8.507059e+37
    %v2282 = vand.u32 %v2270, 2147483648
    %v2283 = vor.u32 1.1754944e-38, %v2282
    %v2284 = vsel %vm2281, %v2283, %v2279
    %v2285 = vmul.f32 1.0, %v2284
    %v2286 = vld [vmem:[#allocation6] sm:$0xff]
    %v2287 = vmul.f32 %v2265, %v2286
    %v2288 = vmul.f32 %v2246, %v2266
    %v2289 = vadd.f32 %v2287, %v2288
    %v2290 = vtanh.pop %v2289
    %v2291 = vmul.f32 %v2285, %v2290
    %2292 = vst [vmem:[#allocation6] sm:$0xff] %v2289
    %2293 = vst [vmem:[#allocation5] sm:$0xff] %v2291
    %v2294 = vld [vmem:[#allocation2 + $0x40] sm:$0xff]
    %v2295 = vld [vmem:[#allocation2 + $0x48] sm:$0xff]
    %v2296 = vld [vmem:[#allocation2 + $0x50] sm:$0xff]
    %v2297 = vld [vmem:[#allocation2 + $0x58] sm:$0xff]
    %v2298 = vld [vmem:[#allocation5] sm:$0xff]
    %2299 = vmatpush.msra.mxu0 %v1980
    %2300 = vmatpush.msra.mxu0 %v1976
    %2301 = vmatpush.msra.mxu0 %v1972
    %2302 = vmatpush.msra.mxu0 %v1968
    %2303 = vmatpush.msra.mxu0 %v1964
    %2304 = vmatpush.msra.mxu0 %v1960
    %2305 = vmatpush.msra.mxu0 %v1956
    %2306 = vmatpush.msra.mxu0 %v1952
    %2307 = vmatpush.msra.mxu0 %v1948
    %2308 = vmatpush.msra.mxu0 %v1944
    %2309 = vmatpush.msra.mxu0 %v1940
    %2310 = vmatpush.msra.mxu0 %v1936
    %2311 = vmatpush.msra.mxu0 %v1932
    %2312 = vmatpush.msra.mxu0 %v1928
    %2313 = vmatpush.msra.mxu0 %v1924
    %2314 = vmatpush.msra.mxu0 %v1920
    %2315 = vmatmul.f32.gmra.mxu0 %v2298
    %v2316 = vpop.f32.mrf.mxu0
    %v2317 = vadd.f32 0.0, %v2316
    %2318 = vdwg.mxu0
    %2319 = vmatpush.msra.mxu0 %v1981
    %2320 = vmatpush.msra.mxu0 %v1977
    %2321 = vmatpush.msra.mxu0 %v1973
    %2322 = vmatpush.msra.mxu0 %v1969
    %2323 = vmatpush.msra.mxu0 %v1965
    %2324 = vmatpush.msra.mxu0 %v1961
    %2325 = vmatpush.msra.mxu0 %v1957
    %2326 = vmatpush.msra.mxu0 %v1953
    %2327 = vmatpush.msra.mxu0 %v1949
    %2328 = vmatpush.msra.mxu0 %v1945
    %2329 = vmatpush.msra.mxu0 %v1941
    %2330 = vmatpush.msra.mxu0 %v1937
    %2331 = vmatpush.msra.mxu0 %v1933
    %2332 = vmatpush.msra.mxu0 %v1929
    %2333 = vmatpush.msra.mxu0 %v1925
    %2334 = vmatpush.msra.mxu0 %v1921
    %2335 = vmatmul.f32.gmra.mxu0 %v2298
    %v2336 = vpop.f32.mrf.mxu0
    %v2337 = vadd.f32 0.0, %v2336
    %2338 = vdwg.mxu0
    %2339 = vmatpush.msra.mxu0 %v1982
    %2340 = vmatpush.msra.mxu0 %v1978
    %2341 = vmatpush.msra.mxu0 %v1974
    %2342 = vmatpush.msra.mxu0 %v1970
    %2343 = vmatpush.msra.mxu0 %v1966
    %2344 = vmatpush.msra.mxu0 %v1962
    %2345 = vmatpush.msra.mxu0 %v1958
    %2346 = vmatpush.msra.mxu0 %v1954
    %2347 = vmatpush.msra.mxu0 %v1950
    %2348 = vmatpush.msra.mxu0 %v1946
    %2349 = vmatpush.msra.mxu0 %v1942
    %2350 = vmatpush.msra.mxu0 %v1938
    %2351 = vmatpush.msra.mxu0 %v1934
    %2352 = vmatpush.msra.mxu0 %v1930
    %2353 = vmatpush.msra.mxu0 %v1926
    %2354 = vmatpush.msra.mxu0 %v1922
    %2355 = vmatmul.f32.gmra.mxu0 %v2298
    %v2356 = vpop.f32.mrf.mxu0
    %v2357 = vadd.f32 0.0, %v2356
    %2358 = vdwg.mxu0
    %2359 = vmatpush.msra.mxu0 %v1983
    %2360 = vmatpush.msra.mxu0 %v1979
    %2361 = vmatpush.msra.mxu0 %v1975
    %2362 = vmatpush.msra.mxu0 %v1971
    %2363 = vmatpush.msra.mxu0 %v1967
    %2364 = vmatpush.msra.mxu0 %v1963
    %2365 = vmatpush.msra.mxu0 %v1959
    %2366 = vmatpush.msra.mxu0 %v1955
    %2367 = vmatpush.msra.mxu0 %v1951
    %2368 = vmatpush.msra.mxu0 %v1947
    %2369 = vmatpush.msra.mxu0 %v1943
    %2370 = vmatpush.msra.mxu0 %v1939
    %2371 = vmatpush.msra.mxu0 %v1935
    %2372 = vmatpush.msra.mxu0 %v1931
    %2373 = vmatpush.msra.mxu0 %v1927
    %2374 = vmatpush.msra.mxu0 %v1923
    %2375 = vmatmul.f32.gmra.mxu0 %v2298
    %v2376 = vpop.f32.mrf.mxu0
    %v2377 = vadd.f32 0.0, %v2376
    %2378 = vdwg.mxu0
    %v2379 = vadd.f32 %v2294, %v2317
    %v2380 = vadd.f32 %v2295, %v2337
    %v2381 = vadd.f32 %v2296, %v2357
    %v2382 = vadd.f32 %v2297, %v2377
    %v2383 = vxor.u32 %v2379, 2147483648
    %v2384 = vmul.f32 %v2383, 1.442695
    %v2385 = vpow.pop %v2384
    %v2386 = vadd.f32 %v2385, 1.0
    %v2387 = vrcp.pop %v2386
    %v2388 = vmul.f32 %v2386, %v2387
    %v2389 = vsub.f32 1.0, %v2388
    %v2390 = vmul.f32 %v2387, %v2389
    %v2391 = vadd.f32 %v2387, %v2390
    %vm2392 = vweird.f32 %v2386
    %vm2393 = vweird.f32 %v2387
    %vm2394 = vmor %vm2392, %vm2393
    %v2395 = vsel %vm2394, %v2387, %v2391
    %v2396 = vand.u32 2147483647, %v2386
    %vm2397 = vcmp.eq.f32.partialorder %v2396, 8.507059e+37
    %v2398 = vand.u32 %v2386, 2147483648
    %v2399 = vor.u32 1.1754944e-38, %v2398
    %v2400 = vsel %vm2397, %v2399, %v2395
    %v2401 = vmul.f32 1.0, %v2400
    %v2402 = vxor.u32 %v2380, 2147483648
    %v2403 = vmul.f32 %v2402, 1.442695
    %v2404 = vpow.pop %v2403
    %v2405 = vadd.f32 %v2404, 1.0
    %v2406 = vrcp.pop %v2405
    %v2407 = vmul.f32 %v2405, %v2406
    %v2408 = vsub.f32 1.0, %v2407
    %v2409 = vmul.f32 %v2406, %v2408
    %v2410 = vadd.f32 %v2406, %v2409
    %vm2411 = vweird.f32 %v2405
    %vm2412 = vweird.f32 %v2406
    %vm2413 = vmor %vm2411, %vm2412
    %v2414 = vsel %vm2413, %v2406, %v2410
    %v2415 = vand.u32 2147483647, %v2405
    %vm2416 = vcmp.eq.f32.partialorder %v2415, 8.507059e+37
    %v2417 = vand.u32 %v2405, 2147483648
    %v2418 = vor.u32 1.1754944e-38, %v2417
    %v2419 = vsel %vm2416, %v2418, %v2414
    %v2420 = vmul.f32 1.0, %v2419
    %v2421 = vtanh.pop %v2381
    %v2422 = vxor.u32 %v2382, 2147483648
    %v2423 = vmul.f32 %v2422, 1.442695
    %v2424 = vpow.pop %v2423
    %v2425 = vadd.f32 %v2424, 1.0
    %v2426 = vrcp.pop %v2425
    %v2427 = vmul.f32 %v2425, %v2426
    %v2428 = vsub.f32 1.0, %v2427
    %v2429 = vmul.f32 %v2426, %v2428
    %v2430 = vadd.f32 %v2426, %v2429
    %vm2431 = vweird.f32 %v2425
    %vm2432 = vweird.f32 %v2426
    %vm2433 = vmor %vm2431, %vm2432
    %v2434 = vsel %vm2433, %v2426, %v2430
    %v2435 = vand.u32 2147483647, %v2425
    %vm2436 = vcmp.eq.f32.partialorder %v2435, 8.507059e+37
    %v2437 = vand.u32 %v2425, 2147483648
    %v2438 = vor.u32 1.1754944e-38, %v2437
    %v2439 = vsel %vm2436, %v2438, %v2434
    %v2440 = vmul.f32 1.0, %v2439
    %v2441 = vld [vmem:[#allocation6] sm:$0xff]
    %v2442 = vmul.f32 %v2420, %v2441
    %v2443 = vmul.f32 %v2401, %v2421
    %v2444 = vadd.f32 %v2442, %v2443
    %v2445 = vtanh.pop %v2444
    %v2446 = vmul.f32 %v2440, %v2445
    %2447 = vst [vmem:[#allocation6] sm:$0xff] %v2444
    %2448 = vst [vmem:[#allocation5] sm:$0xff] %v2446
    %v2449 = vld [vmem:[#allocation2 + $0x60] sm:$0xff]
    %v2450 = vld [vmem:[#allocation2 + $0x68] sm:$0xff]
    %v2451 = vld [vmem:[#allocation2 + $0x70] sm:$0xff]
    %v2452 = vld [vmem:[#allocation2 + $0x78] sm:$0xff]
    %v2453 = vld [vmem:[#allocation5] sm:$0xff]
    %2454 = vmatpush.msra.mxu0 %v1980
    %2455 = vmatpush.msra.mxu0 %v1976
    %2456 = vmatpush.msra.mxu0 %v1972
    %2457 = vmatpush.msra.mxu0 %v1968
    %2458 = vmatpush.msra.mxu0 %v1964
    %2459 = vmatpush.msra.mxu0 %v1960
    %2460 = vmatpush.msra.mxu0 %v1956
    %2461 = vmatpush.msra.mxu0 %v1952
    %2462 = vmatpush.msra.mxu0 %v1948
    %2463 = vmatpush.msra.mxu0 %v1944
    %2464 = vmatpush.msra.mxu0 %v1940
    %2465 = vmatpush.msra.mxu0 %v1936
    %2466 = vmatpush.msra.mxu0 %v1932
    %2467 = vmatpush.msra.mxu0 %v1928
    %2468 = vmatpush.msra.mxu0 %v1924
    %2469 = vmatpush.msra.mxu0 %v1920
    %2470 = vmatmul.f32.gmra.mxu0 %v2453
    %v2471 = vpop.f32.mrf.mxu0
    %v2472 = vadd.f32 0.0, %v2471
    %2473 = vdwg.mxu0
    %2474 = vmatpush.msra.mxu0 %v1981
    %2475 = vmatpush.msra.mxu0 %v1977
    %2476 = vmatpush.msra.mxu0 %v1973
    %2477 = vmatpush.msra.mxu0 %v1969
    %2478 = vmatpush.msra.mxu0 %v1965
    %2479 = vmatpush.msra.mxu0 %v1961
    %2480 = vmatpush.msra.mxu0 %v1957
    %2481 = vmatpush.msra.mxu0 %v1953
    %2482 = vmatpush.msra.mxu0 %v1949
    %2483 = vmatpush.msra.mxu0 %v1945
    %2484 = vmatpush.msra.mxu0 %v1941
    %2485 = vmatpush.msra.mxu0 %v1937
    %2486 = vmatpush.msra.mxu0 %v1933
    %2487 = vmatpush.msra.mxu0 %v1929
    %2488 = vmatpush.msra.mxu0 %v1925
    %2489 = vmatpush.msra.mxu0 %v1921
    %2490 = vmatmul.f32.gmra.mxu0 %v2453
    %v2491 = vpop.f32.mrf.mxu0
    %v2492 = vadd.f32 0.0, %v2491
    %2493 = vdwg.mxu0
    %2494 = vmatpush.msra.mxu0 %v1982
    %2495 = vmatpush.msra.mxu0 %v1978
    %2496 = vmatpush.msra.mxu0 %v1974
    %2497 = vmatpush.msra.mxu0 %v1970
    %2498 = vmatpush.msra.mxu0 %v1966
    %2499 = vmatpush.msra.mxu0 %v1962
    %2500 = vmatpush.msra.mxu0 %v1958
    %2501 = vmatpush.msra.mxu0 %v1954
    %2502 = vmatpush.msra.mxu0 %v1950
    %2503 = vmatpush.msra.mxu0 %v1946
    %2504 = vmatpush.msra.mxu0 %v1942
    %2505 = vmatpush.msra.mxu0 %v1938
    %2506 = vmatpush.msra.mxu0 %v1934
    %2507 = vmatpush.msra.mxu0 %v1930
    %2508 = vmatpush.msra.mxu0 %v1926
    %2509 = vmatpush.msra.mxu0 %v1922
    %2510 = vmatmul.f32.gmra.mxu0 %v2453
    %v2511 = vpop.f32.mrf.mxu0
    %v2512 = vadd.f32 0.0, %v2511
    %2513 = vdwg.mxu0
    %2514 = vmatpush.msra.mxu0 %v1983
    %2515 = vmatpush.msra.mxu0 %v1979
    %2516 = vmatpush.msra.mxu0 %v1975
    %2517 = vmatpush.msra.mxu0 %v1971
    %2518 = vmatpush.msra.mxu0 %v1967
    %2519 = vmatpush.msra.mxu0 %v1963
    %2520 = vmatpush.msra.mxu0 %v1959
    %2521 = vmatpush.msra.mxu0 %v1955
    %2522 = vmatpush.msra.mxu0 %v1951
    %2523 = vmatpush.msra.mxu0 %v1947
    %2524 = vmatpush.msra.mxu0 %v1943
    %2525 = vmatpush.msra.mxu0 %v1939
    %2526 = vmatpush.msra.mxu0 %v1935
    %2527 = vmatpush.msra.mxu0 %v1931
    %2528 = vmatpush.msra.mxu0 %v1927
    %2529 = vmatpush.msra.mxu0 %v1923
    %2530 = vmatmul.f32.gmra.mxu0 %v2453
    %v2531 = vpop.f32.mrf.mxu0
    %v2532 = vadd.f32 0.0, %v2531
    %2533 = vdwg.mxu0
    %v2534 = vadd.f32 %v2449, %v2472
    %v2535 = vadd.f32 %v2450, %v2492
    %v2536 = vadd.f32 %v2451, %v2512
    %v2537 = vadd.f32 %v2452, %v2532
    %v2538 = vxor.u32 %v2534, 2147483648
    %v2539 = vmul.f32 %v2538, 1.442695
    %v2540 = vpow.pop %v2539
    %v2541 = vadd.f32 %v2540, 1.0
    %v2542 = vrcp.pop %v2541
    %v2543 = vmul.f32 %v2541, %v2542
    %v2544 = vsub.f32 1.0, %v2543
    %v2545 = vmul.f32 %v2542, %v2544
    %v2546 = vadd.f32 %v2542, %v2545
    %vm2547 = vweird.f32 %v2541
    %vm2548 = vweird.f32 %v2542
    %vm2549 = vmor %vm2547, %vm2548
    %v2550 = vsel %vm2549, %v2542, %v2546
    %v2551 = vand.u32 2147483647, %v2541
    %vm2552 = vcmp.eq.f32.partialorder %v2551, 8.507059e+37
    %v2553 = vand.u32 %v2541, 2147483648
    %v2554 = vor.u32 1.1754944e-38, %v2553
    %v2555 = vsel %vm2552, %v2554, %v2550
    %v2556 = vmul.f32 1.0, %v2555
    %v2557 = vxor.u32 %v2535, 2147483648
    %v2558 = vmul.f32 %v2557, 1.442695
    %v2559 = vpow.pop %v2558
    %v2560 = vadd.f32 %v2559, 1.0
    %v2561 = vrcp.pop %v2560
    %v2562 = vmul.f32 %v2560, %v2561
    %v2563 = vsub.f32 1.0, %v2562
    %v2564 = vmul.f32 %v2561, %v2563
    %v2565 = vadd.f32 %v2561, %v2564
    %vm2566 = vweird.f32 %v2560
    %vm2567 = vweird.f32 %v2561
    %vm2568 = vmor %vm2566, %vm2567
    %v2569 = vsel %vm2568, %v2561, %v2565
    %v2570 = vand.u32 2147483647, %v2560
    %vm2571 = vcmp.eq.f32.partialorder %v2570, 8.507059e+37
    %v2572 = vand.u32 %v2560, 2147483648
    %v2573 = vor.u32 1.1754944e-38, %v2572
    %v2574 = vsel %vm2571, %v2573, %v2569
    %v2575 = vmul.f32 1.0, %v2574
    %v2576 = vtanh.pop %v2536
    %v2577 = vxor.u32 %v2537, 2147483648
    %v2578 = vmul.f32 %v2577, 1.442695
    %v2579 = vpow.pop %v2578
    %v2580 = vadd.f32 %v2579, 1.0
    %v2581 = vrcp.pop %v2580
    %v2582 = vmul.f32 %v2580, %v2581
    %v2583 = vsub.f32 1.0, %v2582
    %v2584 = vmul.f32 %v2581, %v2583
    %v2585 = vadd.f32 %v2581, %v2584
    %vm2586 = vweird.f32 %v2580
    %vm2587 = vweird.f32 %v2581
    %vm2588 = vmor %vm2586, %vm2587
    %v2589 = vsel %vm2588, %v2581, %v2585
    %v2590 = vand.u32 2147483647, %v2580
    %vm2591 = vcmp.eq.f32.partialorder %v2590, 8.507059e+37
    %v2592 = vand.u32 %v2580, 2147483648
    %v2593 = vor.u32 1.1754944e-38, %v2592
    %v2594 = vsel %vm2591, %v2593, %v2589
    %v2595 = vmul.f32 1.0, %v2594
    %v2596 = vld [vmem:[#allocation6] sm:$0xff]
    %v2597 = vmul.f32 %v2575, %v2596
    %v2598 = vmul.f32 %v2556, %v2576
    %v2599 = vadd.f32 %v2597, %v2598
    %v2600 = vtanh.pop %v2599
    %v2601 = vmul.f32 %v2595, %v2600
    %2602 = vst [vmem:[#allocation6] sm:$0xff] %v2599
    %2603 = vst [vmem:[#allocation5] sm:$0xff] %v2601
    %v2604 = vld [vmem:[#allocation2 + $0x80] sm:$0xff]
    %v2605 = vld [vmem:[#allocation2 + $0x88] sm:$0xff]
    %v2606 = vld [vmem:[#allocation2 + $0x90] sm:$0xff]
    %v2607 = vld [vmem:[#allocation2 + $0x98] sm:$0xff]
    %v2608 = vld [vmem:[#allocation5] sm:$0xff]
    %2609 = vmatpush.msra.mxu0 %v1980
    %2610 = vmatpush.msra.mxu0 %v1976
    %2611 = vmatpush.msra.mxu0 %v1972
    %2612 = vmatpush.msra.mxu0 %v1968
    %2613 = vmatpush.msra.mxu0 %v1964
    %2614 = vmatpush.msra.mxu0 %v1960
    %2615 = vmatpush.msra.mxu0 %v1956
    %2616 = vmatpush.msra.mxu0 %v1952
    %2617 = vmatpush.msra.mxu0 %v1948
    %2618 = vmatpush.msra.mxu0 %v1944
    %2619 = vmatpush.msra.mxu0 %v1940
    %2620 = vmatpush.msra.mxu0 %v1936
    %2621 = vmatpush.msra.mxu0 %v1932
    %2622 = vmatpush.msra.mxu0 %v1928
    %2623 = vmatpush.msra.mxu0 %v1924
    %2624 = vmatpush.msra.mxu0 %v1920
    %2625 = vmatmul.f32.gmra.mxu0 %v2608
    %v2626 = vpop.f32.mrf.mxu0
    %v2627 = vadd.f32 0.0, %v2626
    %2628 = vdwg.mxu0
    %2629 = vmatpush.msra.mxu0 %v1981
    %2630 = vmatpush.msra.mxu0 %v1977
    %2631 = vmatpush.msra.mxu0 %v1973
    %2632 = vmatpush.msra.mxu0 %v1969
    %2633 = vmatpush.msra.mxu0 %v1965
    %2634 = vmatpush.msra.mxu0 %v1961
    %2635 = vmatpush.msra.mxu0 %v1957
    %2636 = vmatpush.msra.mxu0 %v1953
    %2637 = vmatpush.msra.mxu0 %v1949
    %2638 = vmatpush.msra.mxu0 %v1945
    %2639 = vmatpush.msra.mxu0 %v1941
    %2640 = vmatpush.msra.mxu0 %v1937
    %2641 = vmatpush.msra.mxu0 %v1933
    %2642 = vmatpush.msra.mxu0 %v1929
    %2643 = vmatpush.msra.mxu0 %v1925
    %2644 = vmatpush.msra.mxu0 %v1921
    %2645 = vmatmul.f32.gmra.mxu0 %v2608
    %v2646 = vpop.f32.mrf.mxu0
    %v2647 = vadd.f32 0.0, %v2646
    %2648 = vdwg.mxu0
    %2649 = vmatpush.msra.mxu0 %v1982
    %2650 = vmatpush.msra.mxu0 %v1978
    %2651 = vmatpush.msra.mxu0 %v1974
    %2652 = vmatpush.msra.mxu0 %v1970
    %2653 = vmatpush.msra.mxu0 %v1966
    %2654 = vmatpush.msra.mxu0 %v1962
    %2655 = vmatpush.msra.mxu0 %v1958
    %2656 = vmatpush.msra.mxu0 %v1954
    %2657 = vmatpush.msra.mxu0 %v1950
    %2658 = vmatpush.msra.mxu0 %v1946
    %2659 = vmatpush.msra.mxu0 %v1942
    %2660 = vmatpush.msra.mxu0 %v1938
    %2661 = vmatpush.msra.mxu0 %v1934
    %2662 = vmatpush.msra.mxu0 %v1930
    %2663 = vmatpush.msra.mxu0 %v1926
    %2664 = vmatpush.msra.mxu0 %v1922
    %2665 = vmatmul.f32.gmra.mxu0 %v2608
    %v2666 = vpop.f32.mrf.mxu0
    %v2667 = vadd.f32 0.0, %v2666
    %2668 = vdwg.mxu0
    %2669 = vmatpush.msra.mxu0 %v1983
    %2670 = vmatpush.msra.mxu0 %v1979
    %2671 = vmatpush.msra.mxu0 %v1975
    %2672 = vmatpush.msra.mxu0 %v1971
    %2673 = vmatpush.msra.mxu0 %v1967
    %2674 = vmatpush.msra.mxu0 %v1963
    %2675 = vmatpush.msra.mxu0 %v1959
    %2676 = vmatpush.msra.mxu0 %v1955
    %2677 = vmatpush.msra.mxu0 %v1951
    %2678 = vmatpush.msra.mxu0 %v1947
    %2679 = vmatpush.msra.mxu0 %v1943
    %2680 = vmatpush.msra.mxu0 %v1939
    %2681 = vmatpush.msra.mxu0 %v1935
    %2682 = vmatpush.msra.mxu0 %v1931
    %2683 = vmatpush.msra.mxu0 %v1927
    %2684 = vmatpush.msra.mxu0 %v1923
    %2685 = vmatmul.f32.gmra.mxu0 %v2608
    %v2686 = vpop.f32.mrf.mxu0
    %v2687 = vadd.f32 0.0, %v2686
    %2688 = vdwg.mxu0
    %v2689 = vadd.f32 %v2604, %v2627
    %v2690 = vadd.f32 %v2605, %v2647
    %v2691 = vadd.f32 %v2606, %v2667
    %v2692 = vadd.f32 %v2607, %v2687
    %v2693 = vxor.u32 %v2689, 2147483648
    %v2694 = vmul.f32 %v2693, 1.442695
    %v2695 = vpow.pop %v2694
    %v2696 = vadd.f32 %v2695, 1.0
    %v2697 = vrcp.pop %v2696
    %v2698 = vmul.f32 %v2696, %v2697
    %v2699 = vsub.f32 1.0, %v2698
    %v2700 = vmul.f32 %v2697, %v2699
    %v2701 = vadd.f32 %v2697, %v2700
    %vm2702 = vweird.f32 %v2696
    %vm2703 = vweird.f32 %v2697
    %vm2704 = vmor %vm2702, %vm2703
    %v2705 = vsel %vm2704, %v2697, %v2701
    %v2706 = vand.u32 2147483647, %v2696
    %vm2707 = vcmp.eq.f32.partialorder %v2706, 8.507059e+37
    %v2708 = vand.u32 %v2696, 2147483648
    %v2709 = vor.u32 1.1754944e-38, %v2708
    %v2710 = vsel %vm2707, %v2709, %v2705
    %v2711 = vmul.f32 1.0, %v2710
    %v2712 = vxor.u32 %v2690, 2147483648
    %v2713 = vmul.f32 %v2712, 1.442695
    %v2714 = vpow.pop %v2713
    %v2715 = vadd.f32 %v2714, 1.0
    %v2716 = vrcp.pop %v2715
    %v2717 = vmul.f32 %v2715, %v2716
    %v2718 = vsub.f32 1.0, %v2717
    %v2719 = vmul.f32 %v2716, %v2718
    %v2720 = vadd.f32 %v2716, %v2719
    %vm2721 = vweird.f32 %v2715
    %vm2722 = vweird.f32 %v2716
    %vm2723 = vmor %vm2721, %vm2722
    %v2724 = vsel %vm2723, %v2716, %v2720
    %v2725 = vand.u32 2147483647, %v2715
    %vm2726 = vcmp.eq.f32.partialorder %v2725, 8.507059e+37
    %v2727 = vand.u32 %v2715, 2147483648
    %v2728 = vor.u32 1.1754944e-38, %v2727
    %v2729 = vsel %vm2726, %v2728, %v2724
    %v2730 = vmul.f32 1.0, %v2729
    %v2731 = vtanh.pop %v2691
    %v2732 = vxor.u32 %v2692, 2147483648
    %v2733 = vmul.f32 %v2732, 1.442695
    %v2734 = vpow.pop %v2733
    %v2735 = vadd.f32 %v2734, 1.0
    %v2736 = vrcp.pop %v2735
    %v2737 = vmul.f32 %v2735, %v2736
    %v2738 = vsub.f32 1.0, %v2737
    %v2739 = vmul.f32 %v2736, %v2738
    %v2740 = vadd.f32 %v2736, %v2739
    %vm2741 = vweird.f32 %v2735
    %vm2742 = vweird.f32 %v2736
    %vm2743 = vmor %vm2741, %vm2742
    %v2744 = vsel %vm2743, %v2736, %v2740
    %v2745 = vand.u32 2147483647, %v2735
    %vm2746 = vcmp.eq.f32.partialorder %v2745, 8.507059e+37
    %v2747 = vand.u32 %v2735, 2147483648
    %v2748 = vor.u32 1.1754944e-38, %v2747
    %v2749 = vsel %vm2746, %v2748, %v2744
    %v2750 = vmul.f32 1.0, %v2749
    %v2751 = vld [vmem:[#allocation6] sm:$0xff]
    %v2752 = vmul.f32 %v2730, %v2751
    %v2753 = vmul.f32 %v2711, %v2731
    %v2754 = vadd.f32 %v2752, %v2753
    %v2755 = vtanh.pop %v2754
    %v2756 = vmul.f32 %v2750, %v2755
    %2757 = vst [vmem:[#allocation6] sm:$0xff] %v2754
    %2758 = vst [vmem:[#allocation5] sm:$0xff] %v2756
    %v2759 = vld [vmem:[#allocation2 + $0xa0] sm:$0xff]
    %v2760 = vld [vmem:[#allocation2 + $0xa8] sm:$0xff]
    %v2761 = vld [vmem:[#allocation2 + $0xb0] sm:$0xff]
    %v2762 = vld [vmem:[#allocation2 + $0xb8] sm:$0xff]
    %v2763 = vld [vmem:[#allocation5] sm:$0xff]
    %2764 = vmatpush.msra.mxu0 %v1980
    %2765 = vmatpush.msra.mxu0 %v1976
    %2766 = vmatpush.msra.mxu0 %v1972
    %2767 = vmatpush.msra.mxu0 %v1968
    %2768 = vmatpush.msra.mxu0 %v1964
    %2769 = vmatpush.msra.mxu0 %v1960
    %2770 = vmatpush.msra.mxu0 %v1956
    %2771 = vmatpush.msra.mxu0 %v1952
    %2772 = vmatpush.msra.mxu0 %v1948
    %2773 = vmatpush.msra.mxu0 %v1944
    %2774 = vmatpush.msra.mxu0 %v1940
    %2775 = vmatpush.msra.mxu0 %v1936
    %2776 = vmatpush.msra.mxu0 %v1932
    %2777 = vmatpush.msra.mxu0 %v1928
    %2778 = vmatpush.msra.mxu0 %v1924
    %2779 = vmatpush.msra.mxu0 %v1920
    %2780 = vmatmul.f32.gmra.mxu0 %v2763
    %v2781 = vpop.f32.mrf.mxu0
    %v2782 = vadd.f32 0.0, %v2781
    %2783 = vdwg.mxu0
    %2784 = vmatpush.msra.mxu0 %v1981
    %2785 = vmatpush.msra.mxu0 %v1977
    %2786 = vmatpush.msra.mxu0 %v1973
    %2787 = vmatpush.msra.mxu0 %v1969
    %2788 = vmatpush.msra.mxu0 %v1965
    %2789 = vmatpush.msra.mxu0 %v1961
    %2790 = vmatpush.msra.mxu0 %v1957
    %2791 = vmatpush.msra.mxu0 %v1953
    %2792 = vmatpush.msra.mxu0 %v1949
    %2793 = vmatpush.msra.mxu0 %v1945
    %2794 = vmatpush.msra.mxu0 %v1941
    %2795 = vmatpush.msra.mxu0 %v1937
    %2796 = vmatpush.msra.mxu0 %v1933
    %2797 = vmatpush.msra.mxu0 %v1929
    %2798 = vmatpush.msra.mxu0 %v1925
    %2799 = vmatpush.msra.mxu0 %v1921
    %2800 = vmatmul.f32.gmra.mxu0 %v2763
    %v2801 = vpop.f32.mrf.mxu0
    %v2802 = vadd.f32 0.0, %v2801
    %2803 = vdwg.mxu0
    %2804 = vmatpush.msra.mxu0 %v1982
    %2805 = vmatpush.msra.mxu0 %v1978
    %2806 = vmatpush.msra.mxu0 %v1974
    %2807 = vmatpush.msra.mxu0 %v1970
    %2808 = vmatpush.msra.mxu0 %v1966
    %2809 = vmatpush.msra.mxu0 %v1962
    %2810 = vmatpush.msra.mxu0 %v1958
    %2811 = vmatpush.msra.mxu0 %v1954
    %2812 = vmatpush.msra.mxu0 %v1950
    %2813 = vmatpush.msra.mxu0 %v1946
    %2814 = vmatpush.msra.mxu0 %v1942
    %2815 = vmatpush.msra.mxu0 %v1938
    %2816 = vmatpush.msra.mxu0 %v1934
    %2817 = vmatpush.msra.mxu0 %v1930
    %2818 = vmatpush.msra.mxu0 %v1926
    %2819 = vmatpush.msra.mxu0 %v1922
    %2820 = vmatmul.f32.gmra.mxu0 %v2763
    %v2821 = vpop.f32.mrf.mxu0
    %v2822 = vadd.f32 0.0, %v2821
    %2823 = vdwg.mxu0
    %2824 = vmatpush.msra.mxu0 %v1983
    %2825 = vmatpush.msra.mxu0 %v1979
    %2826 = vmatpush.msra.mxu0 %v1975
    %2827 = vmatpush.msra.mxu0 %v1971
    %2828 = vmatpush.msra.mxu0 %v1967
    %2829 = vmatpush.msra.mxu0 %v1963
    %2830 = vmatpush.msra.mxu0 %v1959
    %2831 = vmatpush.msra.mxu0 %v1955
    %2832 = vmatpush.msra.mxu0 %v1951
    %2833 = vmatpush.msra.mxu0 %v1947
    %2834 = vmatpush.msra.mxu0 %v1943
    %2835 = vmatpush.msra.mxu0 %v1939
    %2836 = vmatpush.msra.mxu0 %v1935
    %2837 = vmatpush.msra.mxu0 %v1931
    %2838 = vmatpush.msra.mxu0 %v1927
    %2839 = vmatpush.msra.mxu0 %v1923
    %2840 = vmatmul.f32.gmra.mxu0 %v2763
    %v2841 = vpop.f32.mrf.mxu0
    %v2842 = vadd.f32 0.0, %v2841
    %2843 = vdwg.mxu0
    %v2844 = vadd.f32 %v2759, %v2782
    %v2845 = vadd.f32 %v2760, %v2802
    %v2846 = vadd.f32 %v2761, %v2822
    %v2847 = vadd.f32 %v2762, %v2842
    %v2848 = vxor.u32 %v2844, 2147483648
    %v2849 = vmul.f32 %v2848, 1.442695
    %v2850 = vpow.pop %v2849
    %v2851 = vadd.f32 %v2850, 1.0
    %v2852 = vrcp.pop %v2851
    %v2853 = vmul.f32 %v2851, %v2852
    %v2854 = vsub.f32 1.0, %v2853
    %v2855 = vmul.f32 %v2852, %v2854
    %v2856 = vadd.f32 %v2852, %v2855
    %vm2857 = vweird.f32 %v2851
    %vm2858 = vweird.f32 %v2852
    %vm2859 = vmor %vm2857, %vm2858
    %v2860 = vsel %vm2859, %v2852, %v2856
    %v2861 = vand.u32 2147483647, %v2851
    %vm2862 = vcmp.eq.f32.partialorder %v2861, 8.507059e+37
    %v2863 = vand.u32 %v2851, 2147483648
    %v2864 = vor.u32 1.1754944e-38, %v2863
    %v2865 = vsel %vm2862, %v2864, %v2860
    %v2866 = vmul.f32 1.0, %v2865
    %v2867 = vxor.u32 %v2845, 2147483648
    %v2868 = vmul.f32 %v2867, 1.442695
    %v2869 = vpow.pop %v2868
    %v2870 = vadd.f32 %v2869, 1.0
    %v2871 = vrcp.pop %v2870
    %v2872 = vmul.f32 %v2870, %v2871
    %v2873 = vsub.f32 1.0, %v2872
    %v2874 = vmul.f32 %v2871, %v2873
    %v2875 = vadd.f32 %v2871, %v2874
    %vm2876 = vweird.f32 %v2870
    %vm2877 = vweird.f32 %v2871
    %vm2878 = vmor %vm2876, %vm2877
    %v2879 = vsel %vm2878, %v2871, %v2875
    %v2880 = vand.u32 2147483647, %v2870
    %vm2881 = vcmp.eq.f32.partialorder %v2880, 8.507059e+37
    %v2882 = vand.u32 %v2870, 2147483648
    %v2883 = vor.u32 1.1754944e-38, %v2882
    %v2884 = vsel %vm2881, %v2883, %v2879
    %v2885 = vmul.f32 1.0, %v2884
    %v2886 = vtanh.pop %v2846
    %v2887 = vxor.u32 %v2847, 2147483648
    %v2888 = vmul.f32 %v2887, 1.442695
    %v2889 = vpow.pop %v2888
    %v2890 = vadd.f32 %v2889, 1.0
    %v2891 = vrcp.pop %v2890
    %v2892 = vmul.f32 %v2890, %v2891
    %v2893 = vsub.f32 1.0, %v2892
    %v2894 = vmul.f32 %v2891, %v2893
    %v2895 = vadd.f32 %v2891, %v2894
    %vm2896 = vweird.f32 %v2890
    %vm2897 = vweird.f32 %v2891
    %vm2898 = vmor %vm2896, %vm2897
    %v2899 = vsel %vm2898, %v2891, %v2895
    %v2900 = vand.u32 2147483647, %v2890
    %vm2901 = vcmp.eq.f32.partialorder %v2900, 8.507059e+37
    %v2902 = vand.u32 %v2890, 2147483648
    %v2903 = vor.u32 1.1754944e-38, %v2902
    %v2904 = vsel %vm2901, %v2903, %v2899
    %v2905 = vmul.f32 1.0, %v2904
    %v2906 = vld [vmem:[#allocation6] sm:$0xff]
    %v2907 = vmul.f32 %v2885, %v2906
    %v2908 = vmul.f32 %v2866, %v2886
    %v2909 = vadd.f32 %v2907, %v2908
    %v2910 = vtanh.pop %v2909
    %v2911 = vmul.f32 %v2905, %v2910
    %2912 = vst [vmem:[#allocation6] sm:$0xff] %v2909
    %2913 = vst [vmem:[#allocation5] sm:$0xff] %v2911
    %v2914 = vld [vmem:[#allocation2 + $0xc0] sm:$0xff]
    %v2915 = vld [vmem:[#allocation2 + $0xc8] sm:$0xff]
    %v2916 = vld [vmem:[#allocation2 + $0xd0] sm:$0xff]
    %v2917 = vld [vmem:[#allocation2 + $0xd8] sm:$0xff]
    %v2918 = vld [vmem:[#allocation5] sm:$0xff]
    %2919 = vmatpush.msra.mxu0 %v1980
    %2920 = vmatpush.msra.mxu0 %v1976
    %2921 = vmatpush.msra.mxu0 %v1972
    %2922 = vmatpush.msra.mxu0 %v1968
    %2923 = vmatpush.msra.mxu0 %v1964
    %2924 = vmatpush.msra.mxu0 %v1960
    %2925 = vmatpush.msra.mxu0 %v1956
    %2926 = vmatpush.msra.mxu0 %v1952
    %2927 = vmatpush.msra.mxu0 %v1948
    %2928 = vmatpush.msra.mxu0 %v1944
    %2929 = vmatpush.msra.mxu0 %v1940
    %2930 = vmatpush.msra.mxu0 %v1936
    %2931 = vmatpush.msra.mxu0 %v1932
    %2932 = vmatpush.msra.mxu0 %v1928
    %2933 = vmatpush.msra.mxu0 %v1924
    %2934 = vmatpush.msra.mxu0 %v1920
    %2935 = vmatmul.f32.gmra.mxu0 %v2918
    %v2936 = vpop.f32.mrf.mxu0
    %v2937 = vadd.f32 0.0, %v2936
    %2938 = vdwg.mxu0
    %2939 = vmatpush.msra.mxu0 %v1981
    %2940 = vmatpush.msra.mxu0 %v1977
    %2941 = vmatpush.msra.mxu0 %v1973
    %2942 = vmatpush.msra.mxu0 %v1969
    %2943 = vmatpush.msra.mxu0 %v1965
    %2944 = vmatpush.msra.mxu0 %v1961
    %2945 = vmatpush.msra.mxu0 %v1957
    %2946 = vmatpush.msra.mxu0 %v1953
    %2947 = vmatpush.msra.mxu0 %v1949
    %2948 = vmatpush.msra.mxu0 %v1945
    %2949 = vmatpush.msra.mxu0 %v1941
    %2950 = vmatpush.msra.mxu0 %v1937
    %2951 = vmatpush.msra.mxu0 %v1933
    %2952 = vmatpush.msra.mxu0 %v1929
    %2953 = vmatpush.msra.mxu0 %v1925
    %2954 = vmatpush.msra.mxu0 %v1921
    %2955 = vmatmul.f32.gmra.mxu0 %v2918
    %v2956 = vpop.f32.mrf.mxu0
    %v2957 = vadd.f32 0.0, %v2956
    %2958 = vdwg.mxu0
    %2959 = vmatpush.msra.mxu0 %v1982
    %2960 = vmatpush.msra.mxu0 %v1978
    %2961 = vmatpush.msra.mxu0 %v1974
    %2962 = vmatpush.msra.mxu0 %v1970
    %2963 = vmatpush.msra.mxu0 %v1966
    %2964 = vmatpush.msra.mxu0 %v1962
    %2965 = vmatpush.msra.mxu0 %v1958
    %2966 = vmatpush.msra.mxu0 %v1954
    %2967 = vmatpush.msra.mxu0 %v1950
    %2968 = vmatpush.msra.mxu0 %v1946
    %2969 = vmatpush.msra.mxu0 %v1942
    %2970 = vmatpush.msra.mxu0 %v1938
    %2971 = vmatpush.msra.mxu0 %v1934
    %2972 = vmatpush.msra.mxu0 %v1930
    %2973 = vmatpush.msra.mxu0 %v1926
    %2974 = vmatpush.msra.mxu0 %v1922
    %2975 = vmatmul.f32.gmra.mxu0 %v2918
    %v2976 = vpop.f32.mrf.mxu0
    %v2977 = vadd.f32 0.0, %v2976
    %2978 = vdwg.mxu0
    %2979 = vmatpush.msra.mxu0 %v1983
    %2980 = vmatpush.msra.mxu0 %v1979
    %2981 = vmatpush.msra.mxu0 %v1975
    %2982 = vmatpush.msra.mxu0 %v1971
    %2983 = vmatpush.msra.mxu0 %v1967
    %2984 = vmatpush.msra.mxu0 %v1963
    %2985 = vmatpush.msra.mxu0 %v1959
    %2986 = vmatpush.msra.mxu0 %v1955
    %2987 = vmatpush.msra.mxu0 %v1951
    %2988 = vmatpush.msra.mxu0 %v1947
    %2989 = vmatpush.msra.mxu0 %v1943
    %2990 = vmatpush.msra.mxu0 %v1939
    %2991 = vmatpush.msra.mxu0 %v1935
    %2992 = vmatpush.msra.mxu0 %v1931
    %2993 = vmatpush.msra.mxu0 %v1927
    %2994 = vmatpush.msra.mxu0 %v1923
    %2995 = vmatmul.f32.gmra.mxu0 %v2918
    %v2996 = vpop.f32.mrf.mxu0
    %v2997 = vadd.f32 0.0, %v2996
    %2998 = vdwg.mxu0
    %v2999 = vadd.f32 %v2914, %v2937
    %v3000 = vadd.f32 %v2915, %v2957
    %v3001 = vadd.f32 %v2916, %v2977
    %v3002 = vadd.f32 %v2917, %v2997
    %v3003 = vxor.u32 %v2999, 2147483648
    %v3004 = vmul.f32 %v3003, 1.442695
    %v3005 = vpow.pop %v3004
    %v3006 = vadd.f32 %v3005, 1.0
    %v3007 = vrcp.pop %v3006
    %v3008 = vmul.f32 %v3006, %v3007
    %v3009 = vsub.f32 1.0, %v3008
    %v3010 = vmul.f32 %v3007, %v3009
    %v3011 = vadd.f32 %v3007, %v3010
    %vm3012 = vweird.f32 %v3006
    %vm3013 = vweird.f32 %v3007
    %vm3014 = vmor %vm3012, %vm3013
    %v3015 = vsel %vm3014, %v3007, %v3011
    %v3016 = vand.u32 2147483647, %v3006
    %vm3017 = vcmp.eq.f32.partialorder %v3016, 8.507059e+37
    %v3018 = vand.u32 %v3006, 2147483648
    %v3019 = vor.u32 1.1754944e-38, %v3018
    %v3020 = vsel %vm3017, %v3019, %v3015
    %v3021 = vmul.f32 1.0, %v3020
    %v3022 = vxor.u32 %v3000, 2147483648
    %v3023 = vmul.f32 %v3022, 1.442695
    %v3024 = vpow.pop %v3023
    %v3025 = vadd.f32 %v3024, 1.0
    %v3026 = vrcp.pop %v3025
    %v3027 = vmul.f32 %v3025, %v3026
    %v3028 = vsub.f32 1.0, %v3027
    %v3029 = vmul.f32 %v3026, %v3028
    %v3030 = vadd.f32 %v3026, %v3029
    %vm3031 = vweird.f32 %v3025
    %vm3032 = vweird.f32 %v3026
    %vm3033 = vmor %vm3031, %vm3032
    %v3034 = vsel %vm3033, %v3026, %v3030
    %v3035 = vand.u32 2147483647, %v3025
    %vm3036 = vcmp.eq.f32.partialorder %v3035, 8.507059e+37
    %v3037 = vand.u32 %v3025, 2147483648
    %v3038 = vor.u32 1.1754944e-38, %v3037
    %v3039 = vsel %vm3036, %v3038, %v3034
    %v3040 = vmul.f32 1.0, %v3039
    %v3041 = vtanh.pop %v3001
    %v3042 = vxor.u32 %v3002, 2147483648
    %v3043 = vmul.f32 %v3042, 1.442695
    %v3044 = vpow.pop %v3043
    %v3045 = vadd.f32 %v3044, 1.0
    %v3046 = vrcp.pop %v3045
    %v3047 = vmul.f32 %v3045, %v3046
    %v3048 = vsub.f32 1.0, %v3047
    %v3049 = vmul.f32 %v3046, %v3048
    %v3050 = vadd.f32 %v3046, %v3049
    %vm3051 = vweird.f32 %v3045
    %vm3052 = vweird.f32 %v3046
    %vm3053 = vmor %vm3051, %vm3052
    %v3054 = vsel %vm3053, %v3046, %v3050
    %v3055 = vand.u32 2147483647, %v3045
    %vm3056 = vcmp.eq.f32.partialorder %v3055, 8.507059e+37
    %v3057 = vand.u32 %v3045, 2147483648
    %v3058 = vor.u32 1.1754944e-38, %v3057
    %v3059 = vsel %vm3056, %v3058, %v3054
    %v3060 = vmul.f32 1.0, %v3059
    %v3061 = vld [vmem:[#allocation6] sm:$0xff]
    %v3062 = vmul.f32 %v3040, %v3061
    %v3063 = vmul.f32 %v3021, %v3041
    %v3064 = vadd.f32 %v3062, %v3063
    %v3065 = vtanh.pop %v3064
    %v3066 = vmul.f32 %v3060, %v3065
    %3067 = vst [vmem:[#allocation6] sm:$0xff] %v3064
    %3068 = vst [vmem:[#allocation5] sm:$0xff] %v3066
    %v3069 = vld [vmem:[#allocation2 + $0xe0] sm:$0xff]
    %v3070 = vld [vmem:[#allocation2 + $0xe8] sm:$0xff]
    %v3071 = vld [vmem:[#allocation2 + $0xf0] sm:$0xff]
    %v3072 = vld [vmem:[#allocation2 + $0xf8] sm:$0xff]
    %v3073 = vld [vmem:[#allocation5] sm:$0xff]
    %3074 = vmatpush.msra.mxu0 %v1980
    %3075 = vmatpush.msra.mxu0 %v1976
    %3076 = vmatpush.msra.mxu0 %v1972
    %3077 = vmatpush.msra.mxu0 %v1968
    %3078 = vmatpush.msra.mxu0 %v1964
    %3079 = vmatpush.msra.mxu0 %v1960
    %3080 = vmatpush.msra.mxu0 %v1956
    %3081 = vmatpush.msra.mxu0 %v1952
    %3082 = vmatpush.msra.mxu0 %v1948
    %3083 = vmatpush.msra.mxu0 %v1944
    %3084 = vmatpush.msra.mxu0 %v1940
    %3085 = vmatpush.msra.mxu0 %v1936
    %3086 = vmatpush.msra.mxu0 %v1932
    %3087 = vmatpush.msra.mxu0 %v1928
    %3088 = vmatpush.msra.mxu0 %v1924
    %3089 = vmatpush.msra.mxu0 %v1920
    %3090 = vmatmul.f32.gmra.mxu0 %v3073
    %v3091 = vpop.f32.mrf.mxu0
    %v3092 = vadd.f32 0.0, %v3091
    %3093 = vdwg.mxu0
    %3094 = vmatpush.msra.mxu0 %v1981
    %3095 = vmatpush.msra.mxu0 %v1977
    %3096 = vmatpush.msra.mxu0 %v1973
    %3097 = vmatpush.msra.mxu0 %v1969
    %3098 = vmatpush.msra.mxu0 %v1965
    %3099 = vmatpush.msra.mxu0 %v1961
    %3100 = vmatpush.msra.mxu0 %v1957
    %3101 = vmatpush.msra.mxu0 %v1953
    %3102 = vmatpush.msra.mxu0 %v1949
    %3103 = vmatpush.msra.mxu0 %v1945
    %3104 = vmatpush.msra.mxu0 %v1941
    %3105 = vmatpush.msra.mxu0 %v1937
    %3106 = vmatpush.msra.mxu0 %v1933
    %3107 = vmatpush.msra.mxu0 %v1929
    %3108 = vmatpush.msra.mxu0 %v1925
    %3109 = vmatpush.msra.mxu0 %v1921
    %3110 = vmatmul.f32.gmra.mxu0 %v3073
    %v3111 = vpop.f32.mrf.mxu0
    %v3112 = vadd.f32 0.0, %v3111
    %3113 = vdwg.mxu0
    %3114 = vmatpush.msra.mxu0 %v1982
    %3115 = vmatpush.msra.mxu0 %v1978
    %3116 = vmatpush.msra.mxu0 %v1974
    %3117 = vmatpush.msra.mxu0 %v1970
    %3118 = vmatpush.msra.mxu0 %v1966
    %3119 = vmatpush.msra.mxu0 %v1962
    %3120 = vmatpush.msra.mxu0 %v1958
    %3121 = vmatpush.msra.mxu0 %v1954
    %3122 = vmatpush.msra.mxu0 %v1950
    %3123 = vmatpush.msra.mxu0 %v1946
    %3124 = vmatpush.msra.mxu0 %v1942
    %3125 = vmatpush.msra.mxu0 %v1938
    %3126 = vmatpush.msra.mxu0 %v1934
    %3127 = vmatpush.msra.mxu0 %v1930
    %3128 = vmatpush.msra.mxu0 %v1926
    %3129 = vmatpush.msra.mxu0 %v1922
    %3130 = vmatmul.f32.gmra.mxu0 %v3073
    %v3131 = vpop.f32.mrf.mxu0
    %v3132 = vadd.f32 0.0, %v3131
    %3133 = vdwg.mxu0
    %3134 = vmatpush.msra.mxu0 %v1983
    %3135 = vmatpush.msra.mxu0 %v1979
    %3136 = vmatpush.msra.mxu0 %v1975
    %3137 = vmatpush.msra.mxu0 %v1971
    %3138 = vmatpush.msra.mxu0 %v1967
    %3139 = vmatpush.msra.mxu0 %v1963
    %3140 = vmatpush.msra.mxu0 %v1959
    %3141 = vmatpush.msra.mxu0 %v1955
    %3142 = vmatpush.msra.mxu0 %v1951
    %3143 = vmatpush.msra.mxu0 %v1947
    %3144 = vmatpush.msra.mxu0 %v1943
    %3145 = vmatpush.msra.mxu0 %v1939
    %3146 = vmatpush.msra.mxu0 %v1935
    %3147 = vmatpush.msra.mxu0 %v1931
    %3148 = vmatpush.msra.mxu0 %v1927
    %3149 = vmatpush.msra.mxu0 %v1923
    %3150 = vmatmul.f32.gmra.mxu0 %v3073
    %v3151 = vpop.f32.mrf.mxu0
    %v3152 = vadd.f32 0.0, %v3151
    %3153 = vdwg.mxu0
    %v3154 = vadd.f32 %v3069, %v3092
    %v3155 = vadd.f32 %v3070, %v3112
    %v3156 = vadd.f32 %v3071, %v3132
    %v3157 = vadd.f32 %v3072, %v3152
    %v3158 = vxor.u32 %v3154, 2147483648
    %v3159 = vmul.f32 %v3158, 1.442695
    %v3160 = vpow.pop %v3159
    %v3161 = vadd.f32 %v3160, 1.0
    %v3162 = vrcp.pop %v3161
    %v3163 = vmul.f32 %v3161, %v3162
    %v3164 = vsub.f32 1.0, %v3163
    %v3165 = vmul.f32 %v3162, %v3164
    %v3166 = vadd.f32 %v3162, %v3165
    %vm3167 = vweird.f32 %v3161
    %vm3168 = vweird.f32 %v3162
    %vm3169 = vmor %vm3167, %vm3168
    %v3170 = vsel %vm3169, %v3162, %v3166
    %v3171 = vand.u32 2147483647, %v3161
    %vm3172 = vcmp.eq.f32.partialorder %v3171, 8.507059e+37
    %v3173 = vand.u32 %v3161, 2147483648
    %v3174 = vor.u32 1.1754944e-38, %v3173
    %v3175 = vsel %vm3172, %v3174, %v3170
    %v3176 = vmul.f32 1.0, %v3175
    %v3177 = vxor.u32 %v3155, 2147483648
    %v3178 = vmul.f32 %v3177, 1.442695
    %v3179 = vpow.pop %v3178
    %v3180 = vadd.f32 %v3179, 1.0
    %v3181 = vrcp.pop %v3180
    %v3182 = vmul.f32 %v3180, %v3181
    %v3183 = vsub.f32 1.0, %v3182
    %v3184 = vmul.f32 %v3181, %v3183
    %v3185 = vadd.f32 %v3181, %v3184
    %vm3186 = vweird.f32 %v3180
    %vm3187 = vweird.f32 %v3181
    %vm3188 = vmor %vm3186, %vm3187
    %v3189 = vsel %vm3188, %v3181, %v3185
    %v3190 = vand.u32 2147483647, %v3180
    %vm3191 = vcmp.eq.f32.partialorder %v3190, 8.507059e+37
    %v3192 = vand.u32 %v3180, 2147483648
    %v3193 = vor.u32 1.1754944e-38, %v3192
    %v3194 = vsel %vm3191, %v3193, %v3189
    %v3195 = vmul.f32 1.0, %v3194
    %v3196 = vtanh.pop %v3156
    %v3197 = vxor.u32 %v3157, 2147483648
    %v3198 = vmul.f32 %v3197, 1.442695
    %v3199 = vpow.pop %v3198
    %v3200 = vadd.f32 %v3199, 1.0
    %v3201 = vrcp.pop %v3200
    %v3202 = vmul.f32 %v3200, %v3201
    %v3203 = vsub.f32 1.0, %v3202
    %v3204 = vmul.f32 %v3201, %v3203
    %v3205 = vadd.f32 %v3201, %v3204
    %vm3206 = vweird.f32 %v3200
    %vm3207 = vweird.f32 %v3201
    %vm3208 = vmor %vm3206, %vm3207
    %v3209 = vsel %vm3208, %v3201, %v3205
    %v3210 = vand.u32 2147483647, %v3200
    %vm3211 = vcmp.eq.f32.partialorder %v3210, 8.507059e+37
    %v3212 = vand.u32 %v3200, 2147483648
    %v3213 = vor.u32 1.1754944e-38, %v3212
    %v3214 = vsel %vm3211, %v3213, %v3209
    %v3215 = vmul.f32 1.0, %v3214
    %v3216 = vld [vmem:[#allocation6] sm:$0xff]
    %v3217 = vmul.f32 %v3195, %v3216
    %v3218 = vmul.f32 %v3176, %v3196
    %v3219 = vadd.f32 %v3217, %v3218
    %v3220 = vtanh.pop %v3219
    %v3221 = vmul.f32 %v3215, %v3220
    %3222 = vst [vmem:[#allocation6] sm:$0xff] %v3219
    %3223 = vst [vmem:[#allocation5] sm:$0xff] %v3221
    %v3224 = vld [vmem:[#allocation5] sm:$0xff]
    %v3225 = vld [vmem:[%s7] sm:$0xff]
    %v3226 = vld [vmem:[%s7 + $0x8] sm:$0xff]
    %v3227 = vld [vmem:[%s7 + $0x10] sm:$0xff]
    %v3228 = vld [vmem:[%s7 + $0x18] sm:$0xff]
    %v3229 = vld [vmem:[%s7 + $0x20] sm:$0xff]
    %v3230 = vld [vmem:[%s7 + $0x28] sm:$0xff]
    %v3231 = vld [vmem:[%s7 + $0x30] sm:$0xff]
    %v3232 = vld [vmem:[%s7 + $0x38] sm:$0xff]
    %v3233 = vld [vmem:[%s7 + $0x40] sm:$0xff]
    %v3234 = vld [vmem:[%s7 + $0x48] sm:$0xff]
    %v3235 = vld [vmem:[%s7 + $0x50] sm:$0xff]
    %v3236 = vld [vmem:[%s7 + $0x58] sm:$0xff]
    %v3237 = vld [vmem:[%s7 + $0x60] sm:$0xff]
    %v3238 = vld [vmem:[%s7 + $0x68] sm:$0xff]
    %v3239 = vld [vmem:[%s7 + $0x70] sm:$0xff]
    %v3240 = vld [vmem:[%s7 + $0x78] sm:$0xff]
    %v3241 = vld [vmem:[%s8] sm:$0x1]
    %v3243 = vperm.slane %v3241, 0
    %3245 = vmatpush.msra.mxu0 %v3240
    %3246 = vmatpush.msra.mxu0 %v3239
    %3247 = vmatpush.msra.mxu0 %v3238
    %3248 = vmatpush.msra.mxu0 %v3237
    %3249 = vmatpush.msra.mxu0 %v3236
    %3250 = vmatpush.msra.mxu0 %v3235
    %3251 = vmatpush.msra.mxu0 %v3234
    %3252 = vmatpush.msra.mxu0 %v3233
    %3253 = vmatpush.msra.mxu0 %v3232
    %3254 = vmatpush.msra.mxu0 %v3231
    %3255 = vmatpush.msra.mxu0 %v3230
    %3256 = vmatpush.msra.mxu0 %v3229
    %3257 = vmatpush.msra.mxu0 %v3228
    %3258 = vmatpush.msra.mxu0 %v3227
    %3259 = vmatpush.msra.mxu0 %v3226
    %3260 = vmatpush.msra.mxu0 %v3225
    %3261 = vmatmul.f32.gmra.mxu0 %v3224
    %v3262 = vpop.f32.mrf.mxu0
    %v3263 = vadd.f32 %v3243, %v3262
    %3264 = vdwg.mxu0
    %3265 = vst [vmem:[%s9] sm:$0xff] %v3263
    // Predicated region
    $region50: #{lstm_model_forward.1} parent=1 // pred_check
      _
    $region51: #{lstm_model_forward.1} parent=1 // pred_check_branch
      %3267 = sbr.rel (0) target = $region53
    $region52: #{lstm_model_forward.1} parent=1 // pred_region
      _
    $region53: #{lstm_model_forward.1} parent=1 // pred_fallthru
      _
    // Predicated region
    $region54: #{lstm_model_forward.1} parent=1 // pred_check
      _
    $region55: #{lstm_model_forward.1} parent=1 // pred_check_branch
      %3269 = sbr.rel (0) target = $region57
    $region56: #{lstm_model_forward.1} parent=1 // pred_region
      _
    $region57: #{lstm_model_forward.1} parent=1 // pred_fallthru
      _
    %3270 = vsyncpa [#allocation8], 1
    %3271 = vsyncpa [#allocation10], 1

</llo_original>
